<compile_context>
chip_gen: v7x
topology: tpu7x:2x2x1
jax: 0.10.0
libtpu: 0.0.40
codegen_flags: <defaults>
</compile_context>

<pallas_src>
import math
import functools

import jax
import jax.numpy as jnp
from jax.experimental import pallas as pl
from jax.experimental.pallas import tpu as pltpu

LN_EPS = 1e-5            # PyTorch nn.LayerNorm default
NEG_INF = -1e9           # additive mask value (finite so mask math stays f32)
_ROW_TILE_CAP = 512      # max rows per tile for row-parallel kernels
_KV_TILE_CAP = 512       # max KV tile for flash self-attention
_DFF_TILE_CAP = 1024     # max dff tile for the FFN contraction axis
_VMEM_FLOOR = 32 * 1024 * 1024
_VMEM_CAP = 64 * 1024 * 1024   # stay under v7x physical VMEM


# ---------------------------------------------------------------------------
# Small helpers
# ---------------------------------------------------------------------------
def _nbytes(shape, dtype):
    n = 1
    for s in shape:
        n *= int(s)
    return n * jnp.dtype(dtype).itemsize


def _vmem_params(semantics, block_bytes, scratch_bytes=0):
    """CompilerParams with an explicit VMEM budget sized from the footprint."""
    need = 2 * block_bytes + scratch_bytes + (8 << 20)   # x2: double-buffered blocks
    return pltpu.CompilerParams(
        dimension_semantics=semantics,
        vmem_limit_bytes=int(min(_VMEM_CAP, max(_VMEM_FLOOR, need))))


def _row_tile(n):
    """8-aligned row tile; >=2 grid steps when possible (v7x megacore), capped."""
    if n <= 8:
        return n
    t = (((n + 1) // 2) + 7) // 8 * 8
    return min(t, _ROW_TILE_CAP)


def _chunk_tile(n, cap):
    """Tile along a contraction/KV axis: full if small, else the largest
    128-multiple divisor <= cap (avoids ragged tails polluting accumulators)."""
    if n <= cap:
        return n
    t = cap
    while t >= 128:
        if n % t == 0:
            return t
        t -= 128
    return n


# ---------------------------------------------------------------------------
# Pallas kernels
# ---------------------------------------------------------------------------
def _proj_kernel(x_ref, w_ref, b_ref, *o_refs):
    # y = x @ W^T + b (torch-layout W consumed directly); split into len(o_refs) outputs.
    y = jax.lax.dot_general(x_ref[...], w_ref[...], (((1,), (1,)), ((), ())),
                            preferred_element_type=jnp.float32) + b_ref[...]
    nout = len(o_refs)
    d_each = y.shape[1] // nout
    for p in range(nout):
        o_refs[p][...] = y[:, p * d_each:(p + 1) * d_each].astype(o_refs[p].dtype)


def _linear_add_ln_kernel(x_ref, r_ref, w_ref, b_ref, g_ref, bt_ref, *o_refs):
    # LayerNorm((x @ W^T + b) + residual); LN math in f32.
    y = jax.lax.dot_general(x_ref[...], w_ref[...], (((1,), (1,)), ((), ())),
                            preferred_element_type=jnp.float32)
    z = y + b_ref[...] + r_ref[...]
    mu = jnp.mean(z, axis=-1, keepdims=True)
    var = jnp.mean((z - mu) ** 2, axis=-1, keepdims=True)
    out = (z - mu) * jax.lax.rsqrt(var + LN_EPS) * g_ref[...] + bt_ref[...]
    o_refs[0][...] = out                                  # f32 (residual path)
    if len(o_refs) > 1:
        o_refs[1][...] = out.astype(jnp.bfloat16)         # bf16 (next MXU operand)


def _ffn_add_ln_kernel(x_ref, w1_ref, b1_ref, w2_ref, b2_ref, g_ref, bt_ref,
                       o_ref, acc_ref):
    # LayerNorm(x + W2 @ relu(W1 @ x + b1) + b2), dff tiled on grid axis 1.
    j = pl.program_id(1)

    @pl.when(j == 0)
    def _():
        acc_ref[...] = jnp.zeros_like(acc_ref)

    xb = x_ref[...].astype(jnp.bfloat16)                  # cast feeds the MXU
    h = jax.lax.dot_general(xb, w1_ref[...], (((1,), (1,)), ((), ())),
                            preferred_element_type=jnp.float32) + b1_ref[...]
    h = jnp.maximum(h, 0.0).astype(jnp.bfloat16)          # cast feeds the MXU
    acc_ref[...] += jax.lax.dot_general(h, w2_ref[...], (((1,), (1,)), ((), ())),
                                        preferred_element_type=jnp.float32)

    @pl.when(j == pl.num_programs(1) - 1)
    def _():
        z = x_ref[...] + acc_ref[...] + b2_ref[...]
        mu = jnp.mean(z, axis=-1, keepdims=True)
        var = jnp.mean((z - mu) ** 2, axis=-1, keepdims=True)
        o_ref[...] = ((z - mu) * jax.lax.rsqrt(var + LN_EPS)
                      * g_ref[...] + bt_ref[...]).astype(o_ref.dtype)


def _self_attn_kernel(q_ref, k_ref, v_ref, mask_ref, pad_ref, o_ref,
                      m_sc, l_sc, acc_sc):
    # Flash-style online softmax; grid = (batch, kv_tiles); heads batched.
    kv = pl.program_id(1)

    @pl.when(kv == 0)
    def _():
        m_sc[...] = jnp.full_like(m_sc, -jnp.inf)
        l_sc[...] = jnp.zeros_like(l_sc)
        acc_sc[...] = jnp.zeros_like(acc_sc)

    q = q_ref[0]                                   # (H, T, Dh) bf16 (scale pre-folded)
    k = k_ref[0]                                   # (H, tk, Dh) bf16
    v = v_ref[0]                                   # (H, tk, Dh) bf16

    s = jax.lax.dot_general(q, k, (((2,), (2,)), ((0,), (0,))),
                            preferred_element_type=jnp.float32)       # (H, T, tk)
    mask = mask_ref[...] + pad_ref[0]              # (T, tk) + (1, tk) -> (T, tk)
    s = s + mask[None, :, :]

    m_prev = m_sc[...]                             # (H, T, 1)
    m_new = jnp.maximum(m_prev, s.max(axis=-1, keepdims=True))
    alpha = jnp.exp(m_prev - m_new)
    p = jnp.exp(s - m_new)                         # (H, T, tk)
    l_sc[...] = alpha * l_sc[...] + p.sum(axis=-1, keepdims=True)
    acc_sc[...] = alpha * acc_sc[...] + jax.lax.dot_general(
        p.astype(jnp.bfloat16), v, (((2,), (1,)), ((0,), (0,))),
        preferred_element_type=jnp.float32)
    m_sc[...] = m_new

    @pl.when(kv == pl.num_programs(1) - 1)
    def _():
        # one dense (H, T, Dh) store (no per-head masked partial stores)
        o_ref[0] = (acc_sc[...] *
                    pl.reciprocal(l_sc[...], approx=True)).astype(o_ref.dtype)


def _cross_attn_kernel(q_ref, k_ref, v_ref, o_ref, attn_ref):
    # Full-S attention (weights are an output); batched over heads.
    q = q_ref[0]                                   # (H, T, Dh) bf16 (scale pre-folded)
    k = k_ref[0]                                   # (H, S, Dh) bf16
    v = v_ref[0]
    s = jax.lax.dot_general(q, k, (((2,), (2,)), ((0,), (0,))),
                            preferred_element_type=jnp.float32)       # (H, T, S)
    s = s - s.max(axis=-1, keepdims=True)
    e = jnp.exp(s)
    p = e * (1.0 / e.sum(axis=-1, keepdims=True))  # exact division: weights are emitted
    o_ref[0] = jax.lax.dot_general(
        p.astype(jnp.bfloat16), v, (((2,), (1,)), ((0,), (0,))),
        preferred_element_type=jnp.float32).astype(o_ref.dtype)
    attn_ref[0] = jnp.mean(p, axis=0)              # head-averaged, matches torch default


# ---------------------------------------------------------------------------
# Wrappers (pallas_calls; weights resident via constant index maps)
# ---------------------------------------------------------------------------
# TODO(synk): mark the constant-index weight/bias blocks with
# pipeline_mode=pl.Buffered(1) once single-buffering of resident blocks is
# plumbed through the top-level pallas_call pipeline.
def project(x, w, b, nout):
    """x: (N, Din) bf16; w: (nout*Dout, Din) bf16 (torch layout); b: (nout*Dout,) f32.
    Returns a tuple of `nout` arrays of shape (N, Dout) in bf16."""
    n, din = x.shape
    d_tot = w.shape[0]
    d_each = d_tot // nout
    tm = _row_tile(n)

    out_shapes = tuple(jax.ShapeDtypeStruct((n, d_each), jnp.bfloat16)
                       for _ in range(nout))
    out_specs = tuple(pl.BlockSpec((tm, d_each), lambda i: (i, 0))
                      for _ in range(nout))
    out_shape_arg = out_shapes[0] if nout == 1 else out_shapes
    out_spec_arg = out_specs[0] if nout == 1 else out_specs

    blk = (_nbytes((tm, din), jnp.bfloat16) + _nbytes((d_tot, din), jnp.bfloat16)
           + _nbytes((1, d_tot), jnp.float32)
           + nout * _nbytes((tm, d_each), jnp.bfloat16))
    scratch = 2 * _nbytes((tm, d_tot), jnp.float32)

    outs = pl.pallas_call(
        _proj_kernel,
        out_shape=out_shape_arg,
        grid=(pl.cdiv(n, tm),),
        in_specs=[
            pl.BlockSpec((tm, din), lambda i: (i, 0)),       # x: row-tiled
            pl.BlockSpec((d_tot, din), lambda i: (0, 0)),    # W: resident
            pl.BlockSpec((1, d_tot), lambda i: (0, 0)),      # b: resident
        ],
        out_specs=out_spec_arg,
        compiler_params=_vmem_params(("parallel",), blk, scratch),
    )(x, w, b.reshape(1, d_tot))
    return (outs,) if nout == 1 else outs


def linear_add_ln(x, res, w, b, gamma, beta, emit_bf16=False):
    """LayerNorm((x @ W^T + b) + res); x: (N, D) bf16, res: (N, D) f32.
    Returns (f32 output, bf16 copy or None)."""
    n, d = x.shape
    tm = _row_tile(n)

    out_shape = [jax.ShapeDtypeStruct((n, d), jnp.float32)]
    out_specs = [pl.BlockSpec((tm, d), lambda i: (i, 0))]
    if emit_bf16:
        out_shape.append(jax.ShapeDtypeStruct((n, d), jnp.bfloat16))
        out_specs.append(pl.BlockSpec((tm, d), lambda i: (i, 0)))

    blk = (_nbytes((tm, d), jnp.bfloat16) + _nbytes((tm, d), jnp.float32)
           + _nbytes((d, d), jnp.bfloat16) + 3 * _nbytes((1, d), jnp.float32)
           + _nbytes((tm, d), jnp.float32))
    if emit_bf16:
        blk += _nbytes((tm, d), jnp.bfloat16)
    scratch = 2 * _nbytes((tm, d), jnp.float32)

    outs = pl.pallas_call(
        _linear_add_ln_kernel,
        out_shape=tuple(out_shape) if emit_bf16 else out_shape[0],
        grid=(pl.cdiv(n, tm),),
        in_specs=[
            pl.BlockSpec((tm, d), lambda i: (i, 0)),
            pl.BlockSpec((tm, d), lambda i: (i, 0)),
            pl.BlockSpec((d, d), lambda i: (0, 0)),
            pl.BlockSpec((1, d), lambda i: (0, 0)),
            pl.BlockSpec((1, d), lambda i: (0, 0)),
            pl.BlockSpec((1, d), lambda i: (0, 0)),
        ],
        out_specs=tuple(out_specs) if emit_bf16 else out_specs[0],
        compiler_params=_vmem_params(("parallel",), blk, scratch),
    )(x, res, w, b.reshape(1, d), gamma.reshape(1, d), beta.reshape(1, d))
    if emit_bf16:
        return outs[0], outs[1]
    return outs, None


def ffn_add_ln(x, w1, b1, w2, b2, gamma, beta):
    """LayerNorm(x + Linear2(ReLU(Linear1(x)))); x: (N, D) f32 -> f32.
    dff is tiled on a second ("arbitrary") grid axis with a VMEM accumulator."""
    n, d = x.shape
    dff = w1.shape[0]
    tm = _row_tile(n)
    tf = _chunk_tile(dff, _DFF_TILE_CAP)

    blk = (_nbytes((tm, d), jnp.float32) + _nbytes((tf, d), jnp.bfloat16)
           + _nbytes((1, tf), jnp.float32) + _nbytes((d, tf), jnp.bfloat16)
           + 3 * _nbytes((1, d), jnp.float32) + _nbytes((tm, d), jnp.float32))
    scratch = _nbytes((tm, d), jnp.float32) + 2 * _nbytes((tm, tf), jnp.float32)

    return pl.pallas_call(
        _ffn_add_ln_kernel,
        out_shape=jax.ShapeDtypeStruct((n, d), jnp.float32),
        grid=(pl.cdiv(n, tm), dff // tf),
        in_specs=[
            pl.BlockSpec((tm, d), lambda i, j: (i, 0)),
            pl.BlockSpec((tf, d), lambda i, j: (j, 0)),     # w1 tile over dff
            pl.BlockSpec((1, tf), lambda i, j: (0, j)),     # b1 tile
            pl.BlockSpec((d, tf), lambda i, j: (0, j)),     # w2 tile over dff
            pl.BlockSpec((1, d), lambda i, j: (0, 0)),
            pl.BlockSpec((1, d), lambda i, j: (0, 0)),
            pl.BlockSpec((1, d), lambda i, j: (0, 0)),
        ],
        out_specs=pl.BlockSpec((tm, d), lambda i, j: (i, 0)),
        scratch_shapes=[pltpu.VMEM((tm, d), jnp.float32)],
        compiler_params=_vmem_params(("parallel", "arbitrary"), blk, scratch),
    )(x, w1, b1.reshape(1, dff), w2, b2.reshape(1, d),
      gamma.reshape(1, d), beta.reshape(1, d))


def self_attention(q, k, v, attn_mask, pad_add):
    """Flash-style masked self-attention.
    q, k, v: (B, H, T, Dh) bf16 head-major; attn_mask: (T, T) additive f32;
    pad_add: (B, 1, T) additive f32. Returns (B, H, T, Dh) bf16."""
    B, H, T, Dh = q.shape
    S = k.shape[2]
    tk = _chunk_tile(S, _KV_TILE_CAP)
    # TODO(synk): add a query-tile parallel axis when B == 1 so v7x's second
    # TensorCore is not idle.
    grid = (B, S // tk)

    blk = (2 * _nbytes((1, H, T, Dh), jnp.bfloat16)       # q + out
           + 2 * _nbytes((1, H, tk, Dh), jnp.bfloat16)    # k, v tiles
           + _nbytes((T, tk), jnp.float32)                # mask tile
           + _nbytes((1, 1, tk), jnp.float32))            # pad row tile
    scratch = (2 * _nbytes((H, T, 1), jnp.float32)
               + _nbytes((H, T, Dh), jnp.float32)
               + 2 * _nbytes((H, T, tk), jnp.float32))    # live score block

    return pl.pallas_call(
        _self_attn_kernel,
        out_shape=jax.ShapeDtypeStruct((B, H, T, Dh), jnp.bfloat16),
        grid=grid,
        in_specs=[
            pl.BlockSpec((1, H, T, Dh), lambda b, j: (b, 0, 0, 0)),
            pl.BlockSpec((1, H, tk, Dh), lambda b, j: (b, 0, j, 0)),
            pl.BlockSpec((1, H, tk, Dh), lambda b, j: (b, 0, j, 0)),
            pl.BlockSpec((T, tk), lambda b, j: (0, j)),          # mask tile per KV step
            pl.BlockSpec((1, 1, tk), lambda b, j: (b, 0, j)),    # one pad row per step
        ],
        out_specs=pl.BlockSpec((1, H, T, Dh), lambda b, j: (b, 0, 0, 0)),
        scratch_shapes=[pltpu.VMEM((H, T, 1), jnp.float32),      # m
                        pltpu.VMEM((H, T, 1), jnp.float32),      # l
                        pltpu.VMEM((H, T, Dh), jnp.float32)],    # acc
        compiler_params=_vmem_params(("parallel", "arbitrary"), blk, scratch),
    )(q, k, v, attn_mask, pad_add)


def cross_attention(q, k, v):
    """Unmasked attention that also emits head-averaged weights.
    q: (B, H, T, Dh) bf16; k, v: (B, H, S, Dh) bf16.
    Returns (out (B, H, T, Dh) bf16, attn (B, T, S) f32)."""
    B, H, T, Dh = q.shape
    S = k.shape[2]
    # TODO(synk): flash-tile the encoder length (two-pass for the averaged
    # weights) once S grows beyond a few thousand; here (H, T, S) fits VMEM.
    blk = (2 * _nbytes((1, H, T, Dh), jnp.bfloat16)
           + 2 * _nbytes((1, H, S, Dh), jnp.bfloat16)
           + _nbytes((1, T, S), jnp.float32))
    scratch = 3 * _nbytes((H, T, S), jnp.float32)

    return pl.pallas_call(
        _cross_attn_kernel,
        out_shape=(jax.ShapeDtypeStruct((B, H, T, Dh), jnp.bfloat16),
                   jax.ShapeDtypeStruct((B, T, S), jnp.float32)),
        grid=(B,),
        in_specs=[pl.BlockSpec((1, H, T, Dh), lambda b: (b, 0, 0, 0)),
                  pl.BlockSpec((1, H, S, Dh), lambda b: (b, 0, 0, 0)),
                  pl.BlockSpec((1, H, S, Dh), lambda b: (b, 0, 0, 0))],
        out_specs=(pl.BlockSpec((1, H, T, Dh), lambda b: (b, 0, 0, 0)),
                   pl.BlockSpec((1, T, S), lambda b: (b, 0, 0))),
        compiler_params=_vmem_params(("parallel",), blk, scratch),
    )(q, k, v)


# ---------------------------------------------------------------------------
# Decoder layer forward
# ---------------------------------------------------------------------------
def decoder_layer(params, dec_inputs, enc_outputs, tgt_mask, tgt_pad_mask):
    T, B, D = dec_inputs.shape
    S = enc_outputs.shape[0]
    H = params["num_heads"]
    Dh = D // H

    # one layout change to batch-major; everything downstream is (rows, D)
    x_flat = dec_inputs.transpose(1, 0, 2).reshape(B * T, D)           # f32 residual
    x_bf = x_flat.astype(jnp.bfloat16)                                 # bf16 MXU operand
    enc_bf = enc_outputs.transpose(1, 0, 2).reshape(B * S, D).astype(jnp.bfloat16)

    # additive masks (accept boolean or pre-made additive float masks)
    if jnp.issubdtype(tgt_mask.dtype, jnp.bool_):
        attn_mask = jnp.where(tgt_mask, NEG_INF, 0.0).astype(jnp.float32)
    else:
        attn_mask = tgt_mask.astype(jnp.float32)
    pad_add = jnp.where(tgt_pad_mask, NEG_INF, 0.0).astype(jnp.float32)[:, None, :]

    def to_heads(t, seq):            # (B*seq, D) -> (B, H, seq, Dh)  (XLA layout plumbing)
        return t.reshape(B, seq, H, Dh).transpose(0, 2, 1, 3)

    def from_heads(t):               # (B, H, T, Dh) -> (B*T, D)
        return t.transpose(0, 2, 1, 3).reshape(B * T, D)

    # ---- masked self-attention + add & norm --------------------------------
    sa = params["self_attn"]
    q, k, v = project(x_bf, sa["w_in"], sa["b_in"], nout=3)
    sa_out = self_attention(to_heads(q, T), to_heads(k, T), to_heads(v, T),
                            attn_mask, pad_add)
    x1, x1_bf = linear_add_ln(from_heads(sa_out), x_flat, sa["w_out"], sa["b_out"],
                              *params["self_attn_norm"], emit_bf16=True)

    # ---- cross-attention over encoder memory + add & norm ------------------
    ca = params["cross_attn"]
    (q2,) = project(x1_bf, ca["w_q"], ca["b_q"], nout=1)
    k2, v2 = project(enc_bf, ca["w_kv"], ca["b_kv"], nout=2)
    ca_out, attns = cross_attention(to_heads(q2, T), to_heads(k2, S), to_heads(v2, S))
    x2, _ = linear_add_ln(from_heads(ca_out), x1, ca["w_out"], ca["b_out"],
                          *params["multihead_norm"], emit_bf16=False)

    # ---- feed-forward + add & norm -----------------------------------------
    ff = params["ff"]
    out_flat = ffn_add_ln(x2, ff["w1"], ff["b1"], ff["w2"], ff["b2"],
                          *params["ff_norm"])

    out = out_flat.reshape(B, T, D).transpose(1, 0, 2)   # back to (T, B, D)
    return out, attns


# ---------------------------------------------------------------------------
# Deterministic parameter init + demo
# ---------------------------------------------------------------------------
def init_params(key, d_model, num_heads, dff):
    ks = jax.random.split(key, 12)
    wf = lambda k, s: 0.02 * jax.random.normal(k, s, jnp.float32)
    ones = jnp.ones((d_model,), jnp.float32)
    zeros = jnp.zeros((d_model,), jnp.float32)
    scale = 1.0 / math.sqrt(d_model // num_heads)

    # self-attn in-proj; fold 1/sqrt(Dh) into the q third in f32 (pre-bf16 cast)
    sa_w_in = wf(ks[0], (3 * d_model, d_model)).at[:d_model].multiply(scale)
    sa_b_in = wf(ks[1], (3 * d_model,)).at[:d_model].multiply(scale)

    # cross-attn in-proj stored pre-split (q vs. kv), q part pre-scaled too
    ca_in_w = wf(ks[4], (3 * d_model, d_model))
    ca_in_b = wf(ks[5], (3 * d_model,))
    return {
        "num_heads": num_heads,
        "self_attn": {
            "w_in": sa_w_in.astype(jnp.bfloat16),
            "b_in": sa_b_in,
            "w_out": wf(ks[2], (d_model, d_model)).astype(jnp.bfloat16),
            "b_out": wf(ks[3], (d_model,)),
        },
        "cross_attn": {
            "w_q": (ca_in_w[:d_model] * scale).astype(jnp.bfloat16),
            "b_q": ca_in_b[:d_model] * scale,
            "w_kv": ca_in_w[d_model:].astype(jnp.bfloat16),
            "b_kv": ca_in_b[d_model:],
            "w_out": wf(ks[6], (d_model, d_model)).astype(jnp.bfloat16),
            "b_out": wf(ks[7], (d_model,)),
        },
        "self_attn_norm": (ones, zeros),
        "multihead_norm": (ones, zeros),
        "ff": {
            "w1": wf(ks[8], (dff, d_model)).astype(jnp.bfloat16),
            "b1": wf(ks[9], (dff,)),
            "w2": wf(ks[10], (d_model, dff)).astype(jnp.bfloat16),
            "b2": wf(ks[11], (d_model,)),
        },
        "ff_norm": (ones, zeros),
    }


if __name__ == "__main__":
    d_model, num_heads, dff = 32, 4, 64
    T, S, B = 8, 10, 2   # tgt len, src (encoder) len, batch

    root = jax.random.PRNGKey(0)
    k_params, k_dec, k_enc = jax.random.split(root, 3)
    params = init_params(k_params, d_model, num_heads, dff)

    dec_inputs = jax.random.normal(k_dec, (T, B, d_model), jnp.float32)
    enc_outputs = jax.random.normal(k_enc, (S, B, d_model), jnp.float32)

    # causal additive mask (T, T) and boolean key-padding mask (B, T)
    tgt_mask = jnp.where(jnp.triu(jnp.ones((T, T), jnp.float32), k=1) > 0,
                         NEG_INF, 0.0)
    tgt_pad_mask = jnp.zeros((B, T), jnp.bool_).at[1, -2:].set(True)

    out, attns = jax.jit(functools.partial(decoder_layer, params))(
        dec_inputs, enc_outputs, tgt_mask, tgt_pad_mask)
    jax.block_until_ready((out, attns))

    assert out.shape == (T, B, d_model)
    assert attns.shape == (B, T, S)
    assert bool(jnp.all(jnp.isfinite(out))) and bool(jnp.all(jnp.isfinite(attns)))
    print("KERNEL_OK")
</pallas_src>

<mosaic_0001>
module attributes {stable_mosaic.version = 11 : i64} {
  func.func @_proj_kernel(%arg0: i32, %arg1: memref<16x32xbf16, #tpu.memory_space<vmem>>, %arg2: memref<64x32xbf16, #tpu.memory_space<vmem>>, %arg3: memref<1x64xf32, #tpu.memory_space<vmem>>, %arg4: memref<16x32xbf16, #tpu.memory_space<vmem>>, %arg5: memref<16x32xbf16, #tpu.memory_space<vmem>>) attributes {dimension_semantics = [#tpu.dimension_semantics<parallel>], iteration_bounds = array<i64: 2>, scalar_prefetch = 0 : i64, scratch_operands = 0 : i64, tpu.core_type = #tpu.core_type<tc>, window_params = [{transform_indices = @transform_0, window_bounds = array<i64: 16, 32>}, {pipeline_mode = #tpu.pipeline_mode<synchronous>, transform_indices = @transform_1, window_bounds = array<i64: 64, 32>}, {pipeline_mode = #tpu.pipeline_mode<synchronous>, transform_indices = @transform_2, window_bounds = array<i64: 1, 64>}, {transform_indices = @transform_3, window_bounds = array<i64: 16, 32>}, {transform_indices = @transform_4, window_bounds = array<i64: 16, 32>}]} {
    %c0 = arith.constant 0 : index
    %c0_0 = arith.constant 0 : index
    %0 = vector.load %arg1[%c0, %c0_0] : memref<16x32xbf16, #tpu.memory_space<vmem>>, vector<16x32xbf16>
    %c0_1 = arith.constant 0 : index
    %c0_2 = arith.constant 0 : index
    %1 = vector.load %arg2[%c0_1, %c0_2] : memref<64x32xbf16, #tpu.memory_space<vmem>>, vector<64x32xbf16>
    %cst = arith.constant dense<0.000000e+00> : vector<16x64xf32>
    %2 = tpu.matmul %0, %1, %cst {dimension_numbers = #tpu.dot_dimension_numbers<[1], [1], [0], [0], [0, 0, 1, 0], [], []>} : vector<16x32xbf16>, vector<64x32xbf16>, vector<16x64xf32> -> vector<16x64xf32>
    %c0_3 = arith.constant 0 : index
    %c0_4 = arith.constant 0 : index
    %3 = vector.load %arg3[%c0_3, %c0_4] : memref<1x64xf32, #tpu.memory_space<vmem>>, vector<1x64xf32>
    %4 = vector.broadcast %3 : vector<1x64xf32> to vector<16x64xf32>
    %5 = arith.addf %2, %4 : vector<16x64xf32>
    %6 = vector.extract_strided_slice %5 {offsets = [0, 0], sizes = [16, 32], strides = [1, 1]} : vector<16x64xf32> to vector<16x32xf32>
    %7 = arith.truncf %6 : vector<16x32xf32> to vector<16x32xbf16>
    %c0_5 = arith.constant 0 : index
    %c0_6 = arith.constant 0 : index
    %8 = vector.load %arg4[%c0_5, %c0_6] : memref<16x32xbf16, #tpu.memory_space<vmem>>, vector<16x32xbf16>
    tpu.vector_store %arg4[%c0_5, %c0_6], %7 {strides = array<i32>} : memref<16x32xbf16, #tpu.memory_space<vmem>>, vector<16x32xbf16>,
    %9 = vector.extract_strided_slice %5 {offsets = [0, 32], sizes = [16, 32], strides = [1, 1]} : vector<16x64xf32> to vector<16x32xf32>
    %10 = arith.truncf %9 : vector<16x32xf32> to vector<16x32xbf16>
    %c0_7 = arith.constant 0 : index
    %c0_8 = arith.constant 0 : index
    %11 = vector.load %arg5[%c0_7, %c0_8] : memref<16x32xbf16, #tpu.memory_space<vmem>>, vector<16x32xbf16>
    tpu.vector_store %arg5[%c0_7, %c0_8], %10 {strides = array<i32>} : memref<16x32xbf16, #tpu.memory_space<vmem>>, vector<16x32xbf16>,
    return
  }
  func.func @transform_0(%arg0: i32) -> (i32, i32) {
    %c0_i32 = arith.constant 0 : i32
    %c0_i32_0 = arith.constant 0 : i32
    return %arg0, %c0_i32 : i32, i32
  }
  func.func @transform_1(%arg0: i32) -> (i32, i32) {
    %c0_i32 = arith.constant 0 : i32
    %c0_i32_0 = arith.constant 0 : i32
    %c0_i32_1 = arith.constant 0 : i32
    return %c0_i32, %c0_i32_0 : i32, i32
  }
  func.func @transform_2(%arg0: i32) -> (i32, i32) {
    %c0_i32 = arith.constant 0 : i32
    %c0_i32_0 = arith.constant 0 : i32
    %c0_i32_1 = arith.constant 0 : i32
    return %c0_i32, %c0_i32_0 : i32, i32
  }
  func.func @transform_3(%arg0: i32) -> (i32, i32) {
    %c0_i32 = arith.constant 0 : i32
    %c0_i32_0 = arith.constant 0 : i32
    return %arg0, %c0_i32 : i32, i32
  }
  func.func @transform_4(%arg0: i32) -> (i32, i32) {
    %c0_i32 = arith.constant 0 : i32
    %c0_i32_0 = arith.constant 0 : i32
    return %arg0, %c0_i32 : i32, i32
  }
}

module attributes {stable_mosaic.version = 11 : i64} {
  func.func @_proj_kernel(%arg0: i32, %arg1: memref<8x32xbf16, #tpu.memory_space<vmem>>, %arg2: memref<96x32xbf16, #tpu.memory_space<vmem>>, %arg3: memref<1x96xf32, #tpu.memory_space<vmem>>, %arg4: memref<8x32xbf16, #tpu.memory_space<vmem>>, %arg5: memref<8x32xbf16, #tpu.memory_space<vmem>>, %arg6: memref<8x32xbf16, #tpu.memory_space<vmem>>) attributes {dimension_semantics = [#tpu.dimension_semantics<parallel>], iteration_bounds = array<i64: 2>, scalar_prefetch = 0 : i64, scratch_operands = 0 : i64, tpu.core_type = #tpu.core_type<tc>, window_params = [{transform_indices = @transform_0, window_bounds = array<i64: 8, 32>}, {pipeline_mode = #tpu.pipeline_mode<synchronous>, transform_indices = @transform_1, window_bounds = array<i64: 96, 32>}, {pipeline_mode = #tpu.pipeline_mode<synchronous>, transform_indices = @transform_2, window_bounds = array<i64: 1, 96>}, {transform_indices = @transform_3, window_bounds = array<i64: 8, 32>}, {transform_indices = @transform_4, window_bounds = array<i64: 8, 32>}, {transform_indices = @transform_5, window_bounds = array<i64: 8, 32>}]} {
    %c0 = arith.constant 0 : index
    %c0_0 = arith.constant 0 : index
    %0 = vector.load %arg1[%c0, %c0_0] : memref<8x32xbf16, #tpu.memory_space<vmem>>, vector<8x32xbf16>
    %c0_1 = arith.constant 0 : index
    %c0_2 = arith.constant 0 : index
    %1 = vector.load %arg2[%c0_1, %c0_2] : memref<96x32xbf16, #tpu.memory_space<vmem>>, vector<96x32xbf16>
    %cst = arith.constant dense<0.000000e+00> : vector<8x96xf32>
    %2 = tpu.matmul %0, %1, %cst {dimension_numbers = #tpu.dot_dimension_numbers<[1], [1], [0], [0], [0, 0, 1, 0], [], []>} : vector<8x32xbf16>, vector<96x32xbf16>, vector<8x96xf32> -> vector<8x96xf32>
    %c0_3 = arith.constant 0 : index
    %c0_4 = arith.constant 0 : index
    %3 = vector.load %arg3[%c0_3, %c0_4] : memref<1x96xf32, #tpu.memory_space<vmem>>, vector<1x96xf32>
    %4 = vector.broadcast %3 : vector<1x96xf32> to vector<8x96xf32>
    %5 = arith.addf %2, %4 : vector<8x96xf32>
    %6 = vector.extract_strided_slice %5 {offsets = [0, 0], sizes = [8, 32], strides = [1, 1]} : vector<8x96xf32> to vector<8x32xf32>
    %7 = arith.truncf %6 : vector<8x32xf32> to vector<8x32xbf16>
    %c0_5 = arith.constant 0 : index
    %c0_6 = arith.constant 0 : index
    %8 = vector.load %arg4[%c0_5, %c0_6] : memref<8x32xbf16, #tpu.memory_space<vmem>>, vector<8x32xbf16>
    tpu.vector_store %arg4[%c0_5, %c0_6], %7 {strides = array<i32>} : memref<8x32xbf16, #tpu.memory_space<vmem>>, vector<8x32xbf16>,
    %9 = vector.extract_strided_slice %5 {offsets = [0, 32], sizes = [8, 32], strides = [1, 1]} : vector<8x96xf32> to vector<8x32xf32>
    %10 = arith.truncf %9 : vector<8x32xf32> to vector<8x32xbf16>
    %c0_7 = arith.constant 0 : index
    %c0_8 = arith.constant 0 : index
    %11 = vector.load %arg5[%c0_7, %c0_8] : memref<8x32xbf16, #tpu.memory_space<vmem>>, vector<8x32xbf16>
    tpu.vector_store %arg5[%c0_7, %c0_8], %10 {strides = array<i32>} : memref<8x32xbf16, #tpu.memory_space<vmem>>, vector<8x32xbf16>,
    %12 = vector.extract_strided_slice %5 {offsets = [0, 64], sizes = [8, 32], strides = [1, 1]} : vector<8x96xf32> to vector<8x32xf32>
    %13 = arith.truncf %12 : vector<8x32xf32> to vector<8x32xbf16>
    %c0_9 = arith.constant 0 : index
    %c0_10 = arith.constant 0 : index
    %14 = vector.load %arg6[%c0_9, %c0_10] : memref<8x32xbf16, #tpu.memory_space<vmem>>, vector<8x32xbf16>
    tpu.vector_store %arg6[%c0_9, %c0_10], %13 {strides = array<i32>} : memref<8x32xbf16, #tpu.memory_space<vmem>>, vector<8x32xbf16>,
    return
  }
  func.func @transform_0(%arg0: i32) -> (i32, i32) {
    %c0_i32 = arith.constant 0 : i32
    %c0_i32_0 = arith.constant 0 : i32
    return %arg0, %c0_i32 : i32, i32
  }
  func.func @transform_1(%arg0: i32) -> (i32, i32) {
    %c0_i32 = arith.constant 0 : i32
    %c0_i32_0 = arith.constant 0 : i32
    %c0_i32_1 = arith.constant 0 : i32
    return %c0_i32, %c0_i32_0 : i32, i32
  }
  func.func @transform_2(%arg0: i32) -> (i32, i32) {
    %c0_i32 = arith.constant 0 : i32
    %c0_i32_0 = arith.constant 0 : i32
    %c0_i32_1 = arith.constant 0 : i32
    return %c0_i32, %c0_i32_0 : i32, i32
  }
  func.func @transform_3(%arg0: i32) -> (i32, i32) {
    %c0_i32 = arith.constant 0 : i32
    %c0_i32_0 = arith.constant 0 : i32
    return %arg0, %c0_i32 : i32, i32
  }
  func.func @transform_4(%arg0: i32) -> (i32, i32) {
    %c0_i32 = arith.constant 0 : i32
    %c0_i32_0 = arith.constant 0 : i32
    return %arg0, %c0_i32 : i32, i32
  }
  func.func @transform_5(%arg0: i32) -> (i32, i32) {
    %c0_i32 = arith.constant 0 : i32
    %c0_i32_0 = arith.constant 0 : i32
    return %arg0, %c0_i32 : i32, i32
  }
}

module attributes {stable_mosaic.version = 11 : i64} {
  func.func @_self_attn_kernel(%arg0: i32, %arg1: i32, %arg2: memref<1x4x8x8xbf16, #tpu.memory_space<vmem>>, %arg3: memref<1x4x8x8xbf16, #tpu.memory_space<vmem>>, %arg4: memref<1x4x8x8xbf16, #tpu.memory_space<vmem>>, %arg5: memref<8x8xf32, #tpu.memory_space<vmem>>, %arg6: memref<1x1x8xf32, #tpu.memory_space<vmem>>, %arg7: memref<1x4x8x8xbf16, #tpu.memory_space<vmem>>, %arg8: memref<4x8x1xf32, #tpu.memory_space<vmem>>, %arg9: memref<4x8x1xf32, #tpu.memory_space<vmem>>, %arg10: memref<4x8x8xf32, #tpu.memory_space<vmem>>) attributes {dimension_semantics = [#tpu.dimension_semantics<parallel>, #tpu.dimension_semantics<arbitrary>], iteration_bounds = array<i64: 2, 1>, scalar_prefetch = 0 : i64, scratch_operands = 3 : i64, tpu.core_type = #tpu.core_type<tc>, window_params = [{transform_indices = @transform_0, window_bounds = array<i64: 1, 4, 8, 8>}, {transform_indices = @transform_1, window_bounds = array<i64: 1, 4, 8, 8>}, {transform_indices = @transform_2, window_bounds = array<i64: 1, 4, 8, 8>}, {transform_indices = @transform_3, window_bounds = array<i64: 8, 8>}, {transform_indices = @transform_4, window_bounds = array<i64: 1, 1, 8>}, {transform_indices = @transform_5, window_bounds = array<i64: 1, 4, 8, 8>}]} {
    %c0_i32 = arith.constant 0 : i32
    %0 = arith.cmpi eq, %arg1, %c0_i32 : i32
    %1 = arith.extui %0 : i1 to i32
    %c0_i32_0 = arith.constant 0 : i32
    %2 = arith.cmpi ne, %1, %c0_i32_0 : i32
    scf.if %2 {
      %cst_40 = arith.constant 0xFF800000 : f32
      %44 = vector.broadcast %cst_40 : f32 to vector<4x8x1xf32>
      %c0_41 = arith.constant 0 : index
      %c0_42 = arith.constant 0 : index
      %c0_43 = arith.constant 0 : index
      %45 = vector.load %arg8[%c0_41, %c0_42, %c0_43] : memref<4x8x1xf32, #tpu.memory_space<vmem>>, vector<4x8x1xf32>
      tpu.vector_store %arg8[%c0_41, %c0_42, %c0_43], %44 {strides = array<i32>} : memref<4x8x1xf32, #tpu.memory_space<vmem>>, vector<4x8x1xf32>,
      %cst_44 = arith.constant 0.000000e+00 : f32
      %46 = vector.broadcast %cst_44 : f32 to vector<4x8x1xf32>
      %c0_45 = arith.constant 0 : index
      %c0_46 = arith.constant 0 : index
      %c0_47 = arith.constant 0 : index
      %47 = vector.load %arg9[%c0_45, %c0_46, %c0_47] : memref<4x8x1xf32, #tpu.memory_space<vmem>>, vector<4x8x1xf32>
      tpu.vector_store %arg9[%c0_45, %c0_46, %c0_47], %46 {strides = array<i32>} : memref<4x8x1xf32, #tpu.memory_space<vmem>>, vector<4x8x1xf32>,
      %cst_48 = arith.constant 0.000000e+00 : f32
      %48 = vector.broadcast %cst_48 : f32 to vector<4x8x8xf32>
      %c0_49 = arith.constant 0 : index
      %c0_50 = arith.constant 0 : index
      %c0_51 = arith.constant 0 : index
      %49 = vector.load %arg10[%c0_49, %c0_50, %c0_51] : memref<4x8x8xf32, #tpu.memory_space<vmem>>, vector<4x8x8xf32>
      tpu.vector_store %arg10[%c0_49, %c0_50, %c0_51], %48 {strides = array<i32>} : memref<4x8x8xf32, #tpu.memory_space<vmem>>, vector<4x8x8xf32>,
    } else {
    }
    %c0 = arith.constant 0 : index
    %c0_1 = arith.constant 0 : index
    %c0_2 = arith.constant 0 : index
    %c0_3 = arith.constant 0 : index
    %3 = vector.load %arg2[%c0, %c0_1, %c0_2, %c0_3] : memref<1x4x8x8xbf16, #tpu.memory_space<vmem>>, vector<1x4x8x8xbf16>
    %4 = vector.shape_cast %3 : vector<1x4x8x8xbf16> to vector<4x8x8xbf16>
    %c0_4 = arith.constant 0 : index
    %c0_5 = arith.constant 0 : index
    %c0_6 = arith.constant 0 : index
    %c0_7 = arith.constant 0 : index
    %5 = vector.load %arg3[%c0_4, %c0_5, %c0_6, %c0_7] : memref<1x4x8x8xbf16, #tpu.memory_space<vmem>>, vector<1x4x8x8xbf16>
    %6 = vector.shape_cast %5 : vector<1x4x8x8xbf16> to vector<4x8x8xbf16>
    %c0_8 = arith.constant 0 : index
    %c0_9 = arith.constant 0 : index
    %c0_10 = arith.constant 0 : index
    %c0_11 = arith.constant 0 : index
    %7 = vector.load %arg4[%c0_8, %c0_9, %c0_10, %c0_11] : memref<1x4x8x8xbf16, #tpu.memory_space<vmem>>, vector<1x4x8x8xbf16>
    %8 = vector.shape_cast %7 : vector<1x4x8x8xbf16> to vector<4x8x8xbf16>
    %cst = arith.constant dense<0.000000e+00> : vector<4x8x8xf32>
    %9 = tpu.matmul %4, %6, %cst {dimension_numbers = #tpu.dot_dimension_numbers<[2], [2], [1], [1], [0, 0, 0, 1, 1, 1], [0], [0]>} : vector<4x8x8xbf16>, vector<4x8x8xbf16>, vector<4x8x8xf32> -> vector<4x8x8xf32>
    %c0_12 = arith.constant 0 : index
    %c0_13 = arith.constant 0 : index
    %10 = vector.load %arg5[%c0_12, %c0_13] : memref<8x8xf32, #tpu.memory_space<vmem>>, vector<8x8xf32>
    %c0_14 = arith.constant 0 : index
    %c0_15 = arith.constant 0 : index
    %c0_16 = arith.constant 0 : index
    %11 = vector.load %arg6[%c0_14, %c0_15, %c0_16] : memref<1x1x8xf32, #tpu.memory_space<vmem>>, vector<1x1x8xf32>
    %12 = vector.shape_cast %11 : vector<1x1x8xf32> to vector<1x8xf32>
    %13 = vector.broadcast %12 : vector<1x8xf32> to vector<8x8xf32>
    %14 = arith.addf %10, %13 : vector<8x8xf32>
    %15 = vector.shape_cast %14 : vector<8x8xf32> to vector<1x8x8xf32>
    %16 = vector.broadcast %15 : vector<1x8x8xf32> to vector<4x8x8xf32>
    %17 = arith.addf %9, %16 : vector<4x8x8xf32>
    %c0_17 = arith.constant 0 : index
    %c0_18 = arith.constant 0 : index
    %c0_19 = arith.constant 0 : index
    %18 = vector.load %arg8[%c0_17, %c0_18, %c0_19] : memref<4x8x1xf32, #tpu.memory_space<vmem>>, vector<4x8x1xf32>
    %cst_20 = arith.constant dense<0xFF800000> : vector<4x8xf32>
    %19 = vector.multi_reduction <maximumf>, %17, %cst_20 [2] : vector<4x8x8xf32> to vector<4x8xf32>
    %20 = vector.shape_cast %19 : vector<4x8xf32> to vector<4x8x1xf32>
    %21 = arith.maximumf %18, %20 : vector<4x8x1xf32>
    %22 = arith.subf %18, %21 : vector<4x8x1xf32>
    %23 = math.exp %22 : vector<4x8x1xf32>
    %24 = vector.broadcast %21 : vector<4x8x1xf32> to vector<4x8x8xf32>
    %25 = arith.subf %17, %24 : vector<4x8x8xf32>
    %26 = math.exp %25 : vector<4x8x8xf32>
    %c0_21 = arith.constant 0 : index
    %c0_22 = arith.constant 0 : index
    %c0_23 = arith.constant 0 : index
    %27 = vector.load %arg9[%c0_21, %c0_22, %c0_23] : memref<4x8x1xf32, #tpu.memory_space<vmem>>, vector<4x8x1xf32>
    %28 = arith.mulf %23, %27 : vector<4x8x1xf32>
    %cst_24 = arith.constant dense<0.000000e+00> : vector<4x8xf32>
    %29 = vector.multi_reduction <add>, %26, %cst_24 [2] : vector<4x8x8xf32> to vector<4x8xf32>
    %30 = vector.shape_cast %29 : vector<4x8xf32> to vector<4x8x1xf32>
    %31 = arith.addf %28, %30 : vector<4x8x1xf32>
    %c0_25 = arith.constant 0 : index
    %c0_26 = arith.constant 0 : index
    %c0_27 = arith.constant 0 : index
    %32 = vector.load %arg9[%c0_25, %c0_26, %c0_27] : memref<4x8x1xf32, #tpu.memory_space<vmem>>, vector<4x8x1xf32>
    tpu.vector_store %arg9[%c0_25, %c0_26, %c0_27], %31 {strides = array<i32>} : memref<4x8x1xf32, #tpu.memory_space<vmem>>, vector<4x8x1xf32>,
    %c0_28 = arith.constant 0 : index
    %c0_29 = arith.constant 0 : index
    %c0_30 = arith.constant 0 : index
    %33 = vector.load %arg10[%c0_28, %c0_29, %c0_30] : memref<4x8x8xf32, #tpu.memory_space<vmem>>, vector<4x8x8xf32>
    %34 = vector.broadcast %23 : vector<4x8x1xf32> to vector<4x8x8xf32>
    %35 = arith.mulf %34, %33 : vector<4x8x8xf32>
    %36 = arith.truncf %26 : vector<4x8x8xf32> to vector<4x8x8xbf16>
    %cst_31 = arith.constant dense<0.000000e+00> : vector<4x8x8xf32>
    %37 = tpu.matmul %36, %8, %cst_31 {dimension_numbers = #tpu.dot_dimension_numbers<[2], [1], [1], [2], [0, 0, 0, 1, 1, 2], [0], [0]>} : vector<4x8x8xbf16>, vector<4x8x8xbf16>, vector<4x8x8xf32> -> vector<4x8x8xf32>
    %38 = arith.addf %35, %37 : vector<4x8x8xf32>
    %c0_32 = arith.constant 0 : index
    %c0_33 = arith.constant 0 : index
    %c0_34 = arith.constant 0 : index
    %39 = vector.load %arg10[%c0_32, %c0_33, %c0_34] : memref<4x8x8xf32, #tpu.memory_space<vmem>>, vector<4x8x8xf32>
    tpu.vector_store %arg10[%c0_32, %c0_33, %c0_34], %38 {strides = array<i32>} : memref<4x8x8xf32, #tpu.memory_space<vmem>>, vector<4x8x8xf32>,
    %c0_35 = arith.constant 0 : index
    %c0_36 = arith.constant 0 : index
    %c0_37 = arith.constant 0 : index
    %40 = vector.load %arg8[%c0_35, %c0_36, %c0_37] : memref<4x8x1xf32, #tpu.memory_space<vmem>>, vector<4x8x1xf32>
    tpu.vector_store %arg8[%c0_35, %c0_36, %c0_37], %21 {strides = array<i32>} : memref<4x8x1xf32, #tpu.memory_space<vmem>>, vector<4x8x1xf32>,
    %c0_i32_38 = arith.constant 0 : i32
    %41 = arith.cmpi eq, %arg1, %c0_i32_38 : i32
    %42 = arith.extui %41 : i1 to i32
    %c0_i32_39 = arith.constant 0 : i32
    %43 = arith.cmpi ne, %42, %c0_i32_39 : i32
    scf.if %43 {
      %c0_40 = arith.constant 0 : index
      %c0_41 = arith.constant 0 : index
      %c0_42 = arith.constant 0 : index
      %44 = vector.load %arg10[%c0_40, %c0_41, %c0_42] : memref<4x8x8xf32, #tpu.memory_space<vmem>>, vector<4x8x8xf32>
      %c0_43 = arith.constant 0 : index
      %c0_44 = arith.constant 0 : index
      %c0_45 = arith.constant 0 : index
      %45 = vector.load %arg9[%c0_43, %c0_44, %c0_45] : memref<4x8x1xf32, #tpu.memory_space<vmem>>, vector<4x8x1xf32>
      %46 = tpu.reciprocal %45 {approx = true} : vector<4x8x1xf32> -> vector<4x8x1xf32>
      %47 = vector.broadcast %46 : vector<4x8x1xf32> to vector<4x8x8xf32>
      %48 = arith.mulf %44, %47 : vector<4x8x8xf32>
      %49 = arith.truncf %48 : vector<4x8x8xf32> to vector<4x8x8xbf16>
      %c0_46 = arith.constant 0 : index
      %c0_47 = arith.constant 0 : index
      %c0_48 = arith.constant 0 : index
      %c0_49 = arith.constant 0 : index
      %50 = vector.load %arg7[%c0_46, %c0_47, %c0_48, %c0_49] : memref<1x4x8x8xbf16, #tpu.memory_space<vmem>>, vector<1x4x8x8xbf16>
      %51 = vector.shape_cast %50 : vector<1x4x8x8xbf16> to vector<4x8x8xbf16>
      %52 = vector.shape_cast %49 : vector<4x8x8xbf16> to vector<1x4x8x8xbf16>
      tpu.vector_store %arg7[%c0_46, %c0_47, %c0_48, %c0_49], %52 {strides = array<i32>} : memref<1x4x8x8xbf16, #tpu.memory_space<vmem>>, vector<1x4x8x8xbf16>,
    } else {
    }
    return
  }
  func.func @transform_0(%arg0: i32, %arg1: i32) -> (i32, i32, i32, i32) {
    %c0_i32 = arith.constant 0 : i32
    %c0_i32_0 = arith.constant 0 : i32
    %c0_i32_1 = arith.constant 0 : i32
    %c0_i32_2 = arith.constant 0 : i32
    return %arg0, %c0_i32, %c0_i32_0, %c0_i32_1 : i32, i32, i32, i32
  }
  func.func @transform_1(%arg0: i32, %arg1: i32) -> (i32, i32, i32, i32) {
    %c0_i32 = arith.constant 0 : i32
    %c0_i32_0 = arith.constant 0 : i32
    %c0_i32_1 = arith.constant 0 : i32
    return %arg0, %c0_i32, %arg1, %c0_i32_0 : i32, i32, i32, i32
  }
  func.func @transform_2(%arg0: i32, %arg1: i32) -> (i32, i32, i32, i32) {
    %c0_i32 = arith.constant 0 : i32
    %c0_i32_0 = arith.constant 0 : i32
    %c0_i32_1 = arith.constant 0 : i32
    return %arg0, %c0_i32, %arg1, %c0_i32_0 : i32, i32, i32, i32
  }
  func.func @transform_3(%arg0: i32, %arg1: i32) -> (i32, i32) {
    %c0_i32 = arith.constant 0 : i32
    %c0_i32_0 = arith.constant 0 : i32
    return %c0_i32, %arg1 : i32, i32
  }
  func.func @transform_4(%arg0: i32, %arg1: i32) -> (i32, i32, i32) {
    %c0_i32 = arith.constant 0 : i32
    %c0_i32_0 = arith.constant 0 : i32
    return %arg0, %c0_i32, %arg1 : i32, i32, i32
  }
  func.func @transform_5(%arg0: i32, %arg1: i32) -> (i32, i32, i32, i32) {
    %c0_i32 = arith.constant 0 : i32
    %c0_i32_0 = arith.constant 0 : i32
    %c0_i32_1 = arith.constant 0 : i32
    %c0_i32_2 = arith.constant 0 : i32
    return %arg0, %c0_i32, %c0_i32_0, %c0_i32_1 : i32, i32, i32, i32
  }
}

module attributes {stable_mosaic.version = 11 : i64} {
  func.func @_linear_add_ln_kernel(%arg0: i32, %arg1: memref<8x32xbf16, #tpu.memory_space<vmem>>, %arg2: memref<8x32xf32, #tpu.memory_space<vmem>>, %arg3: memref<32x32xbf16, #tpu.memory_space<vmem>>, %arg4: memref<1x32xf32, #tpu.memory_space<vmem>>, %arg5: memref<1x32xf32, #tpu.memory_space<vmem>>, %arg6: memref<1x32xf32, #tpu.memory_space<vmem>>, %arg7: memref<8x32xf32, #tpu.memory_space<vmem>>, %arg8: memref<8x32xbf16, #tpu.memory_space<vmem>>) attributes {dimension_semantics = [#tpu.dimension_semantics<parallel>], iteration_bounds = array<i64: 2>, scalar_prefetch = 0 : i64, scratch_operands = 0 : i64, tpu.core_type = #tpu.core_type<tc>, window_params = [{transform_indices = @transform_0, window_bounds = array<i64: 8, 32>}, {transform_indices = @transform_1, window_bounds = array<i64: 8, 32>}, {pipeline_mode = #tpu.pipeline_mode<synchronous>, transform_indices = @transform_2, window_bounds = array<i64: 32, 32>}, {pipeline_mode = #tpu.pipeline_mode<synchronous>, transform_indices = @transform_3, window_bounds = array<i64: 1, 32>}, {pipeline_mode = #tpu.pipeline_mode<synchronous>, transform_indices = @transform_4, window_bounds = array<i64: 1, 32>}, {pipeline_mode = #tpu.pipeline_mode<synchronous>, transform_indices = @transform_5, window_bounds = array<i64: 1, 32>}, {transform_indices = @transform_6, window_bounds = array<i64: 8, 32>}, {transform_indices = @transform_7, window_bounds = array<i64: 8, 32>}]} {
    %c0 = arith.constant 0 : index
    %c0_0 = arith.constant 0 : index
    %0 = vector.load %arg1[%c0, %c0_0] : memref<8x32xbf16, #tpu.memory_space<vmem>>, vector<8x32xbf16>
    %c0_1 = arith.constant 0 : index
    %c0_2 = arith.constant 0 : index
    %1 = vector.load %arg3[%c0_1, %c0_2] : memref<32x32xbf16, #tpu.memory_space<vmem>>, vector<32x32xbf16>
    %cst = arith.constant dense<0.000000e+00> : vector<8x32xf32>
    %2 = tpu.matmul %0, %1, %cst {dimension_numbers = #tpu.dot_dimension_numbers<[1], [1], [0], [0], [0, 0, 1, 0], [], []>} : vector<8x32xbf16>, vector<32x32xbf16>, vector<8x32xf32> -> vector<8x32xf32>
    %c0_3 = arith.constant 0 : index
    %c0_4 = arith.constant 0 : index
    %3 = vector.load %arg4[%c0_3, %c0_4] : memref<1x32xf32, #tpu.memory_space<vmem>>, vector<1x32xf32>
    %4 = vector.broadcast %3 : vector<1x32xf32> to vector<8x32xf32>
    %5 = arith.addf %2, %4 : vector<8x32xf32>
    %c0_5 = arith.constant 0 : index
    %c0_6 = arith.constant 0 : index
    %6 = vector.load %arg2[%c0_5, %c0_6] : memref<8x32xf32, #tpu.memory_space<vmem>>, vector<8x32xf32>
    %7 = arith.addf %5, %6 : vector<8x32xf32>
    %cst_7 = arith.constant dense<0.000000e+00> : vector<8xf32>
    %8 = vector.multi_reduction <add>, %7, %cst_7 [1] : vector<8x32xf32> to vector<8xf32>
    %9 = vector.shape_cast %8 : vector<8xf32> to vector<8x1xf32>
    %cst_8 = arith.constant 3.200000e+01 : f32
    %10 = vector.broadcast %cst_8 : f32 to vector<8x1xf32>
    %11 = arith.divf %9, %10 : vector<8x1xf32>
    %12 = vector.broadcast %11 : vector<8x1xf32> to vector<8x32xf32>
    %13 = arith.subf %7, %12 : vector<8x32xf32>
    %14 = arith.mulf %13, %13 : vector<8x32xf32>
    %cst_9 = arith.constant dense<0.000000e+00> : vector<8xf32>
    %15 = vector.multi_reduction <add>, %14, %cst_9 [1] : vector<8x32xf32> to vector<8xf32>
    %16 = vector.shape_cast %15 : vector<8xf32> to vector<8x1xf32>
    %cst_10 = arith.constant 3.200000e+01 : f32
    %17 = vector.broadcast %cst_10 : f32 to vector<8x1xf32>
    %18 = arith.divf %16, %17 : vector<8x1xf32>
    %19 = vector.broadcast %11 : vector<8x1xf32> to vector<8x32xf32>
    %20 = arith.subf %7, %19 : vector<8x32xf32>
    %cst_11 = arith.constant 9.99999974E-6 : f32
    %21 = vector.broadcast %cst_11 : f32 to vector<8x1xf32>
    %22 = arith.addf %18, %21 : vector<8x1xf32>
    %23 = math.rsqrt %22 : vector<8x1xf32>
    %24 = vector.broadcast %23 : vector<8x1xf32> to vector<8x32xf32>
    %25 = arith.mulf %20, %24 : vector<8x32xf32>
    %c0_12 = arith.constant 0 : index
    %c0_13 = arith.constant 0 : index
    %26 = vector.load %arg5[%c0_12, %c0_13] : memref<1x32xf32, #tpu.memory_space<vmem>>, vector<1x32xf32>
    %27 = vector.broadcast %26 : vector<1x32xf32> to vector<8x32xf32>
    %28 = arith.mulf %25, %27 : vector<8x32xf32>
    %c0_14 = arith.constant 0 : index
    %c0_15 = arith.constant 0 : index
    %29 = vector.load %arg6[%c0_14, %c0_15] : memref<1x32xf32, #tpu.memory_space<vmem>>, vector<1x32xf32>
    %30 = vector.broadcast %29 : vector<1x32xf32> to vector<8x32xf32>
    %31 = arith.addf %28, %30 : vector<8x32xf32>
    %c0_16 = arith.constant 0 : index
    %c0_17 = arith.constant 0 : index
    %32 = vector.load %arg7[%c0_16, %c0_17] : memref<8x32xf32, #tpu.memory_space<vmem>>, vector<8x32xf32>
    tpu.vector_store %arg7[%c0_16, %c0_17], %31 {strides = array<i32>} : memref<8x32xf32, #tpu.memory_space<vmem>>, vector<8x32xf32>,
    %33 = arith.truncf %31 : vector<8x32xf32> to vector<8x32xbf16>
    %c0_18 = arith.constant 0 : index
    %c0_19 = arith.constant 0 : index
    %34 = vector.load %arg8[%c0_18, %c0_19] : memref<8x32xbf16, #tpu.memory_space<vmem>>, vector<8x32xbf16>
    tpu.vector_store %arg8[%c0_18, %c0_19], %33 {strides = array<i32>} : memref<8x32xbf16, #tpu.memory_space<vmem>>, vector<8x32xbf16>,
    return
  }
  func.func @transform_0(%arg0: i32) -> (i32, i32) {
    %c0_i32 = arith.constant 0 : i32
    %c0_i32_0 = arith.constant 0 : i32
    return %arg0, %c0_i32 : i32, i32
  }
  func.func @transform_1(%arg0: i32) -> (i32, i32) {
    %c0_i32 = arith.constant 0 : i32
    %c0_i32_0 = arith.constant 0 : i32
    return %arg0, %c0_i32 : i32, i32
  }
  func.func @transform_2(%arg0: i32) -> (i32, i32) {
    %c0_i32 = arith.constant 0 : i32
    %c0_i32_0 = arith.constant 0 : i32
    %c0_i32_1 = arith.constant 0 : i32
    return %c0_i32, %c0_i32_0 : i32, i32
  }
  func.func @transform_3(%arg0: i32) -> (i32, i32) {
    %c0_i32 = arith.constant 0 : i32
    %c0_i32_0 = arith.constant 0 : i32
    %c0_i32_1 = arith.constant 0 : i32
    return %c0_i32, %c0_i32_0 : i32, i32
  }
  func.func @transform_4(%arg0: i32) -> (i32, i32) {
    %c0_i32 = arith.constant 0 : i32
    %c0_i32_0 = arith.constant 0 : i32
    %c0_i32_1 = arith.constant 0 : i32
    return %c0_i32, %c0_i32_0 : i32, i32
  }
  func.func @transform_5(%arg0: i32) -> (i32, i32) {
    %c0_i32 = arith.constant 0 : i32
    %c0_i32_0 = arith.constant 0 : i32
    %c0_i32_1 = arith.constant 0 : i32
    return %c0_i32, %c0_i32_0 : i32, i32
  }
  func.func @transform_6(%arg0: i32) -> (i32, i32) {
    %c0_i32 = arith.constant 0 : i32
    %c0_i32_0 = arith.constant 0 : i32
    return %arg0, %c0_i32 : i32, i32
  }
  func.func @transform_7(%arg0: i32) -> (i32, i32) {
    %c0_i32 = arith.constant 0 : i32
    %c0_i32_0 = arith.constant 0 : i32
    return %arg0, %c0_i32 : i32, i32
  }
}

module attributes {stable_mosaic.version = 11 : i64} {
  func.func @_proj_kernel(%arg0: i32, %arg1: memref<8x32xbf16, #tpu.memory_space<vmem>>, %arg2: memref<32x32xbf16, #tpu.memory_space<vmem>>, %arg3: memref<1x32xf32, #tpu.memory_space<vmem>>, %arg4: memref<8x32xbf16, #tpu.memory_space<vmem>>) attributes {dimension_semantics = [#tpu.dimension_semantics<parallel>], iteration_bounds = array<i64: 2>, scalar_prefetch = 0 : i64, scratch_operands = 0 : i64, tpu.core_type = #tpu.core_type<tc>, window_params = [{transform_indices = @transform_0, window_bounds = array<i64: 8, 32>}, {pipeline_mode = #tpu.pipeline_mode<synchronous>, transform_indices = @transform_1, window_bounds = array<i64: 32, 32>}, {pipeline_mode = #tpu.pipeline_mode<synchronous>, transform_indices = @transform_2, window_bounds = array<i64: 1, 32>}, {transform_indices = @transform_3, window_bounds = array<i64: 8, 32>}]} {
    %c0 = arith.constant 0 : index
    %c0_0 = arith.constant 0 : index
    %0 = vector.load %arg1[%c0, %c0_0] : memref<8x32xbf16, #tpu.memory_space<vmem>>, vector<8x32xbf16>
    %c0_1 = arith.constant 0 : index
    %c0_2 = arith.constant 0 : index
    %1 = vector.load %arg2[%c0_1, %c0_2] : memref<32x32xbf16, #tpu.memory_space<vmem>>, vector<32x32xbf16>
    %cst = arith.constant dense<0.000000e+00> : vector<8x32xf32>
    %2 = tpu.matmul %0, %1, %cst {dimension_numbers = #tpu.dot_dimension_numbers<[1], [1], [0], [0], [0, 0, 1, 0], [], []>} : vector<8x32xbf16>, vector<32x32xbf16>, vector<8x32xf32> -> vector<8x32xf32>
    %c0_3 = arith.constant 0 : index
    %c0_4 = arith.constant 0 : index
    %3 = vector.load %arg3[%c0_3, %c0_4] : memref<1x32xf32, #tpu.memory_space<vmem>>, vector<1x32xf32>
    %4 = vector.broadcast %3 : vector<1x32xf32> to vector<8x32xf32>
    %5 = arith.addf %2, %4 : vector<8x32xf32>
    %6 = arith.truncf %5 : vector<8x32xf32> to vector<8x32xbf16>
    %c0_5 = arith.constant 0 : index
    %c0_6 = arith.constant 0 : index
    %7 = vector.load %arg4[%c0_5, %c0_6] : memref<8x32xbf16, #tpu.memory_space<vmem>>, vector<8x32xbf16>
    tpu.vector_store %arg4[%c0_5, %c0_6], %6 {strides = array<i32>} : memref<8x32xbf16, #tpu.memory_space<vmem>>, vector<8x32xbf16>,
    return
  }
  func.func @transform_0(%arg0: i32) -> (i32, i32) {
    %c0_i32 = arith.constant 0 : i32
    %c0_i32_0 = arith.constant 0 : i32
    return %arg0, %c0_i32 : i32, i32
  }
  func.func @transform_1(%arg0: i32) -> (i32, i32) {
    %c0_i32 = arith.constant 0 : i32
    %c0_i32_0 = arith.constant 0 : i32
    %c0_i32_1 = arith.constant 0 : i32
    return %c0_i32, %c0_i32_0 : i32, i32
  }
  func.func @transform_2(%arg0: i32) -> (i32, i32) {
    %c0_i32 = arith.constant 0 : i32
    %c0_i32_0 = arith.constant 0 : i32
    %c0_i32_1 = arith.constant 0 : i32
    return %c0_i32, %c0_i32_0 : i32, i32
  }
  func.func @transform_3(%arg0: i32) -> (i32, i32) {
    %c0_i32 = arith.constant 0 : i32
    %c0_i32_0 = arith.constant 0 : i32
    return %arg0, %c0_i32 : i32, i32
  }
}

module attributes {stable_mosaic.version = 11 : i64} {
  func.func @_cross_attn_kernel(%arg0: i32, %arg1: memref<1x4x8x8xbf16, #tpu.memory_space<vmem>>, %arg2: memref<1x4x10x8xbf16, #tpu.memory_space<vmem>>, %arg3: memref<1x4x10x8xbf16, #tpu.memory_space<vmem>>, %arg4: memref<1x4x8x8xbf16, #tpu.memory_space<vmem>>, %arg5: memref<1x8x10xf32, #tpu.memory_space<vmem>>) attributes {dimension_semantics = [#tpu.dimension_semantics<parallel>], iteration_bounds = array<i64: 2>, scalar_prefetch = 0 : i64, scratch_operands = 0 : i64, tpu.core_type = #tpu.core_type<tc>, window_params = [{transform_indices = @transform_0, window_bounds = array<i64: 1, 4, 8, 8>}, {transform_indices = @transform_1, window_bounds = array<i64: 1, 4, 10, 8>}, {transform_indices = @transform_2, window_bounds = array<i64: 1, 4, 10, 8>}, {transform_indices = @transform_3, window_bounds = array<i64: 1, 4, 8, 8>}, {transform_indices = @transform_4, window_bounds = array<i64: 1, 8, 10>}]} {
    %c0 = arith.constant 0 : index
    %c0_0 = arith.constant 0 : index
    %c0_1 = arith.constant 0 : index
    %c0_2 = arith.constant 0 : index
    %0 = vector.load %arg1[%c0, %c0_0, %c0_1, %c0_2] : memref<1x4x8x8xbf16, #tpu.memory_space<vmem>>, vector<1x4x8x8xbf16>
    %1 = vector.shape_cast %0 : vector<1x4x8x8xbf16> to vector<4x8x8xbf16>
    %c0_3 = arith.constant 0 : index
    %c0_4 = arith.constant 0 : index
    %c0_5 = arith.constant 0 : index
    %c0_6 = arith.constant 0 : index
    %2 = vector.load %arg2[%c0_3, %c0_4, %c0_5, %c0_6] : memref<1x4x10x8xbf16, #tpu.memory_space<vmem>>, vector<1x4x10x8xbf16>
    %3 = vector.shape_cast %2 : vector<1x4x10x8xbf16> to vector<4x10x8xbf16>
    %c0_7 = arith.constant 0 : index
    %c0_8 = arith.constant 0 : index
    %c0_9 = arith.constant 0 : index
    %c0_10 = arith.constant 0 : index
    %4 = vector.load %arg3[%c0_7, %c0_8, %c0_9, %c0_10] : memref<1x4x10x8xbf16, #tpu.memory_space<vmem>>, vector<1x4x10x8xbf16>
    %5 = vector.shape_cast %4 : vector<1x4x10x8xbf16> to vector<4x10x8xbf16>
    %cst = arith.constant dense<0.000000e+00> : vector<4x8x10xf32>
    %6 = tpu.matmul %1, %3, %cst {dimension_numbers = #tpu.dot_dimension_numbers<[2], [2], [1], [1], [0, 0, 0, 1, 1, 1], [0], [0]>} : vector<4x8x8xbf16>, vector<4x10x8xbf16>, vector<4x8x10xf32> -> vector<4x8x10xf32>
    %cst_11 = arith.constant dense<0xFF800000> : vector<4x8xf32>
    %7 = vector.multi_reduction <maximumf>, %6, %cst_11 [2] : vector<4x8x10xf32> to vector<4x8xf32>
    %8 = vector.shape_cast %7 : vector<4x8xf32> to vector<4x8x1xf32>
    %9 = vector.broadcast %8 : vector<4x8x1xf32> to vector<4x8x10xf32>
    %10 = arith.subf %6, %9 : vector<4x8x10xf32>
    %11 = math.exp %10 : vector<4x8x10xf32>
    %cst_12 = arith.constant dense<0.000000e+00> : vector<4x8xf32>
    %12 = vector.multi_reduction <add>, %11, %cst_12 [2] : vector<4x8x10xf32> to vector<4x8xf32>
    %13 = vector.shape_cast %12 : vector<4x8xf32> to vector<4x8x1xf32>
    %cst_13 = arith.constant 1.000000e+00 : f32
    %14 = vector.broadcast %cst_13 : f32 to vector<4x8x1xf32>
    %15 = arith.divf %14, %13 : vector<4x8x1xf32>
    %16 = vector.broadcast %15 : vector<4x8x1xf32> to vector<4x8x10xf32>
    %17 = arith.mulf %11, %16 : vector<4x8x10xf32>
    %18 = arith.truncf %17 : vector<4x8x10xf32> to vector<4x8x10xbf16>
    %cst_14 = arith.constant dense<0.000000e+00> : vector<4x8x8xf32>
    %19 = tpu.matmul %18, %5, %cst_14 {dimension_numbers = #tpu.dot_dimension_numbers<[2], [1], [1], [2], [0, 0, 0, 1, 1, 2], [0], [0]>} : vector<4x8x10xbf16>, vector<4x10x8xbf16>, vector<4x8x8xf32> -> vector<4x8x8xf32>
    %20 = arith.truncf %19 : vector<4x8x8xf32> to vector<4x8x8xbf16>
    %c0_15 = arith.constant 0 : index
    %c0_16 = arith.constant 0 : index
    %c0_17 = arith.constant 0 : index
    %c0_18 = arith.constant 0 : index
    %21 = vector.load %arg4[%c0_15, %c0_16, %c0_17, %c0_18] : memref<1x4x8x8xbf16, #tpu.memory_space<vmem>>, vector<1x4x8x8xbf16>
    %22 = vector.shape_cast %21 : vector<1x4x8x8xbf16> to vector<4x8x8xbf16>
    %23 = vector.shape_cast %20 : vector<4x8x8xbf16> to vector<1x4x8x8xbf16>
    tpu.vector_store %arg4[%c0_15, %c0_16, %c0_17, %c0_18], %23 {strides = array<i32>} : memref<1x4x8x8xbf16, #tpu.memory_space<vmem>>, vector<1x4x8x8xbf16>,
    %cst_19 = arith.constant dense<0.000000e+00> : vector<8x10xf32>
    %24 = vector.multi_reduction <add>, %17, %cst_19 [0] : vector<4x8x10xf32> to vector<8x10xf32>
    %cst_20 = arith.constant 4.000000e+00 : f32
    %25 = vector.broadcast %cst_20 : f32 to vector<8x10xf32>
    %26 = arith.divf %24, %25 : vector<8x10xf32>
    %c0_21 = arith.constant 0 : index
    %c0_22 = arith.constant 0 : index
    %c0_23 = arith.constant 0 : index
    %27 = vector.load %arg5[%c0_21, %c0_22, %c0_23] : memref<1x8x10xf32, #tpu.memory_space<vmem>>, vector<1x8x10xf32>
    %28 = vector.shape_cast %27 : vector<1x8x10xf32> to vector<8x10xf32>
    %29 = vector.shape_cast %26 : vector<8x10xf32> to vector<1x8x10xf32>
    tpu.vector_store %arg5[%c0_21, %c0_22, %c0_23], %29 {strides = array<i32>} : memref<1x8x10xf32, #tpu.memory_space<vmem>>, vector<1x8x10xf32>,
    return
  }
  func.func @transform_0(%arg0: i32) -> (i32, i32, i32, i32) {
    %c0_i32 = arith.constant 0 : i32
    %c0_i32_0 = arith.constant 0 : i32
    %c0_i32_1 = arith.constant 0 : i32
    %c0_i32_2 = arith.constant 0 : i32
    return %arg0, %c0_i32, %c0_i32_0, %c0_i32_1 : i32, i32, i32, i32
  }
  func.func @transform_1(%arg0: i32) -> (i32, i32, i32, i32) {
    %c0_i32 = arith.constant 0 : i32
    %c0_i32_0 = arith.constant 0 : i32
    %c0_i32_1 = arith.constant 0 : i32
    %c0_i32_2 = arith.constant 0 : i32
    return %arg0, %c0_i32, %c0_i32_0, %c0_i32_1 : i32, i32, i32, i32
  }
  func.func @transform_2(%arg0: i32) -> (i32, i32, i32, i32) {
    %c0_i32 = arith.constant 0 : i32
    %c0_i32_0 = arith.constant 0 : i32
    %c0_i32_1 = arith.constant 0 : i32
    %c0_i32_2 = arith.constant 0 : i32
    return %arg0, %c0_i32, %c0_i32_0, %c0_i32_1 : i32, i32, i32, i32
  }
  func.func @transform_3(%arg0: i32) -> (i32, i32, i32, i32) {
    %c0_i32 = arith.constant 0 : i32
    %c0_i32_0 = arith.constant 0 : i32
    %c0_i32_1 = arith.constant 0 : i32
    %c0_i32_2 = arith.constant 0 : i32
    return %arg0, %c0_i32, %c0_i32_0, %c0_i32_1 : i32, i32, i32, i32
  }
  func.func @transform_4(%arg0: i32) -> (i32, i32, i32) {
    %c0_i32 = arith.constant 0 : i32
    %c0_i32_0 = arith.constant 0 : i32
    %c0_i32_1 = arith.constant 0 : i32
    return %arg0, %c0_i32, %c0_i32_0 : i32, i32, i32
  }
}

module attributes {stable_mosaic.version = 11 : i64} {
  func.func @_linear_add_ln_kernel(%arg0: i32, %arg1: memref<8x32xbf16, #tpu.memory_space<vmem>>, %arg2: memref<8x32xf32, #tpu.memory_space<vmem>>, %arg3: memref<32x32xbf16, #tpu.memory_space<vmem>>, %arg4: memref<1x32xf32, #tpu.memory_space<vmem>>, %arg5: memref<1x32xf32, #tpu.memory_space<vmem>>, %arg6: memref<1x32xf32, #tpu.memory_space<vmem>>, %arg7: memref<8x32xf32, #tpu.memory_space<vmem>>) attributes {dimension_semantics = [#tpu.dimension_semantics<parallel>], iteration_bounds = array<i64: 2>, scalar_prefetch = 0 : i64, scratch_operands = 0 : i64, tpu.core_type = #tpu.core_type<tc>, window_params = [{transform_indices = @transform_0, window_bounds = array<i64: 8, 32>}, {transform_indices = @transform_1, window_bounds = array<i64: 8, 32>}, {pipeline_mode = #tpu.pipeline_mode<synchronous>, transform_indices = @transform_2, window_bounds = array<i64: 32, 32>}, {pipeline_mode = #tpu.pipeline_mode<synchronous>, transform_indices = @transform_3, window_bounds = array<i64: 1, 32>}, {pipeline_mode = #tpu.pipeline_mode<synchronous>, transform_indices = @transform_4, window_bounds = array<i64: 1, 32>}, {pipeline_mode = #tpu.pipeline_mode<synchronous>, transform_indices = @transform_5, window_bounds = array<i64: 1, 32>}, {transform_indices = @transform_6, window_bounds = array<i64: 8, 32>}]} {
    %c0 = arith.constant 0 : index
    %c0_0 = arith.constant 0 : index
    %0 = vector.load %arg1[%c0, %c0_0] : memref<8x32xbf16, #tpu.memory_space<vmem>>, vector<8x32xbf16>
    %c0_1 = arith.constant 0 : index
    %c0_2 = arith.constant 0 : index
    %1 = vector.load %arg3[%c0_1, %c0_2] : memref<32x32xbf16, #tpu.memory_space<vmem>>, vector<32x32xbf16>
    %cst = arith.constant dense<0.000000e+00> : vector<8x32xf32>
    %2 = tpu.matmul %0, %1, %cst {dimension_numbers = #tpu.dot_dimension_numbers<[1], [1], [0], [0], [0, 0, 1, 0], [], []>} : vector<8x32xbf16>, vector<32x32xbf16>, vector<8x32xf32> -> vector<8x32xf32>
    %c0_3 = arith.constant 0 : index
    %c0_4 = arith.constant 0 : index
    %3 = vector.load %arg4[%c0_3, %c0_4] : memref<1x32xf32, #tpu.memory_space<vmem>>, vector<1x32xf32>
    %4 = vector.broadcast %3 : vector<1x32xf32> to vector<8x32xf32>
    %5 = arith.addf %2, %4 : vector<8x32xf32>
    %c0_5 = arith.constant 0 : index
    %c0_6 = arith.constant 0 : index
    %6 = vector.load %arg2[%c0_5, %c0_6] : memref<8x32xf32, #tpu.memory_space<vmem>>, vector<8x32xf32>
    %7 = arith.addf %5, %6 : vector<8x32xf32>
    %cst_7 = arith.constant dense<0.000000e+00> : vector<8xf32>
    %8 = vector.multi_reduction <add>, %7, %cst_7 [1] : vector<8x32xf32> to vector<8xf32>
    %9 = vector.shape_cast %8 : vector<8xf32> to vector<8x1xf32>
    %cst_8 = arith.constant 3.200000e+01 : f32
    %10 = vector.broadcast %cst_8 : f32 to vector<8x1xf32>
    %11 = arith.divf %9, %10 : vector<8x1xf32>
    %12 = vector.broadcast %11 : vector<8x1xf32> to vector<8x32xf32>
    %13 = arith.subf %7, %12 : vector<8x32xf32>
    %14 = arith.mulf %13, %13 : vector<8x32xf32>
    %cst_9 = arith.constant dense<0.000000e+00> : vector<8xf32>
    %15 = vector.multi_reduction <add>, %14, %cst_9 [1] : vector<8x32xf32> to vector<8xf32>
    %16 = vector.shape_cast %15 : vector<8xf32> to vector<8x1xf32>
    %cst_10 = arith.constant 3.200000e+01 : f32
    %17 = vector.broadcast %cst_10 : f32 to vector<8x1xf32>
    %18 = arith.divf %16, %17 : vector<8x1xf32>
    %19 = vector.broadcast %11 : vector<8x1xf32> to vector<8x32xf32>
    %20 = arith.subf %7, %19 : vector<8x32xf32>
    %cst_11 = arith.constant 9.99999974E-6 : f32
    %21 = vector.broadcast %cst_11 : f32 to vector<8x1xf32>
    %22 = arith.addf %18, %21 : vector<8x1xf32>
    %23 = math.rsqrt %22 : vector<8x1xf32>
    %24 = vector.broadcast %23 : vector<8x1xf32> to vector<8x32xf32>
    %25 = arith.mulf %20, %24 : vector<8x32xf32>
    %c0_12 = arith.constant 0 : index
    %c0_13 = arith.constant 0 : index
    %26 = vector.load %arg5[%c0_12, %c0_13] : memref<1x32xf32, #tpu.memory_space<vmem>>, vector<1x32xf32>
    %27 = vector.broadcast %26 : vector<1x32xf32> to vector<8x32xf32>
    %28 = arith.mulf %25, %27 : vector<8x32xf32>
    %c0_14 = arith.constant 0 : index
    %c0_15 = arith.constant 0 : index
    %29 = vector.load %arg6[%c0_14, %c0_15] : memref<1x32xf32, #tpu.memory_space<vmem>>, vector<1x32xf32>
    %30 = vector.broadcast %29 : vector<1x32xf32> to vector<8x32xf32>
    %31 = arith.addf %28, %30 : vector<8x32xf32>
    %c0_16 = arith.constant 0 : index
    %c0_17 = arith.constant 0 : index
    %32 = vector.load %arg7[%c0_16, %c0_17] : memref<8x32xf32, #tpu.memory_space<vmem>>, vector<8x32xf32>
    tpu.vector_store %arg7[%c0_16, %c0_17], %31 {strides = array<i32>} : memref<8x32xf32, #tpu.memory_space<vmem>>, vector<8x32xf32>,
    return
  }
  func.func @transform_0(%arg0: i32) -> (i32, i32) {
    %c0_i32 = arith.constant 0 : i32
    %c0_i32_0 = arith.constant 0 : i32
    return %arg0, %c0_i32 : i32, i32
  }
  func.func @transform_1(%arg0: i32) -> (i32, i32) {
    %c0_i32 = arith.constant 0 : i32
    %c0_i32_0 = arith.constant 0 : i32
    return %arg0, %c0_i32 : i32, i32
  }
  func.func @transform_2(%arg0: i32) -> (i32, i32) {
    %c0_i32 = arith.constant 0 : i32
    %c0_i32_0 = arith.constant 0 : i32
    %c0_i32_1 = arith.constant 0 : i32
    return %c0_i32, %c0_i32_0 : i32, i32
  }
  func.func @transform_3(%arg0: i32) -> (i32, i32) {
    %c0_i32 = arith.constant 0 : i32
    %c0_i32_0 = arith.constant 0 : i32
    %c0_i32_1 = arith.constant 0 : i32
    return %c0_i32, %c0_i32_0 : i32, i32
  }
  func.func @transform_4(%arg0: i32) -> (i32, i32) {
    %c0_i32 = arith.constant 0 : i32
    %c0_i32_0 = arith.constant 0 : i32
    %c0_i32_1 = arith.constant 0 : i32
    return %c0_i32, %c0_i32_0 : i32, i32
  }
  func.func @transform_5(%arg0: i32) -> (i32, i32) {
    %c0_i32 = arith.constant 0 : i32
    %c0_i32_0 = arith.constant 0 : i32
    %c0_i32_1 = arith.constant 0 : i32
    return %c0_i32, %c0_i32_0 : i32, i32
  }
  func.func @transform_6(%arg0: i32) -> (i32, i32) {
    %c0_i32 = arith.constant 0 : i32
    %c0_i32_0 = arith.constant 0 : i32
    return %arg0, %c0_i32 : i32, i32
  }
}

module attributes {stable_mosaic.version = 11 : i64} {
  func.func @_ffn_add_ln_kernel(%arg0: i32, %arg1: i32, %arg2: memref<8x32xf32, #tpu.memory_space<vmem>>, %arg3: memref<64x32xbf16, #tpu.memory_space<vmem>>, %arg4: memref<1x64xf32, #tpu.memory_space<vmem>>, %arg5: memref<32x64xbf16, #tpu.memory_space<vmem>>, %arg6: memref<1x32xf32, #tpu.memory_space<vmem>>, %arg7: memref<1x32xf32, #tpu.memory_space<vmem>>, %arg8: memref<1x32xf32, #tpu.memory_space<vmem>>, %arg9: memref<8x32xf32, #tpu.memory_space<vmem>>, %arg10: memref<8x32xf32, #tpu.memory_space<vmem>>) attributes {dimension_semantics = [#tpu.dimension_semantics<parallel>, #tpu.dimension_semantics<arbitrary>], iteration_bounds = array<i64: 2, 1>, scalar_prefetch = 0 : i64, scratch_operands = 1 : i64, tpu.core_type = #tpu.core_type<tc>, window_params = [{transform_indices = @transform_0, window_bounds = array<i64: 8, 32>}, {transform_indices = @transform_1, window_bounds = array<i64: 64, 32>}, {transform_indices = @transform_2, window_bounds = array<i64: 1, 64>}, {transform_indices = @transform_3, window_bounds = array<i64: 32, 64>}, {pipeline_mode = #tpu.pipeline_mode<synchronous>, transform_indices = @transform_4, window_bounds = array<i64: 1, 32>}, {pipeline_mode = #tpu.pipeline_mode<synchronous>, transform_indices = @transform_5, window_bounds = array<i64: 1, 32>}, {pipeline_mode = #tpu.pipeline_mode<synchronous>, transform_indices = @transform_6, window_bounds = array<i64: 1, 32>}, {transform_indices = @transform_7, window_bounds = array<i64: 8, 32>}]} {
    %c0_i32 = arith.constant 0 : i32
    %0 = arith.cmpi eq, %arg1, %c0_i32 : i32
    %1 = arith.extui %0 : i1 to i32
    %c0_i32_0 = arith.constant 0 : i32
    %2 = arith.cmpi ne, %1, %c0_i32_0 : i32
    scf.if %2 {
      %cst_16 = arith.constant 0.000000e+00 : f32
      %21 = vector.broadcast %cst_16 : f32 to vector<8x32xf32>
      %c0_17 = arith.constant 0 : index
      %c0_18 = arith.constant 0 : index
      %22 = vector.load %arg10[%c0_17, %c0_18] : memref<8x32xf32, #tpu.memory_space<vmem>>, vector<8x32xf32>
      tpu.vector_store %arg10[%c0_17, %c0_18], %21 {strides = array<i32>} : memref<8x32xf32, #tpu.memory_space<vmem>>, vector<8x32xf32>,
    } else {
    }
    %c0 = arith.constant 0 : index
    %c0_1 = arith.constant 0 : index
    %3 = vector.load %arg2[%c0, %c0_1] : memref<8x32xf32, #tpu.memory_space<vmem>>, vector<8x32xf32>
    %4 = arith.truncf %3 : vector<8x32xf32> to vector<8x32xbf16>
    %c0_2 = arith.constant 0 : index
    %c0_3 = arith.constant 0 : index
    %5 = vector.load %arg3[%c0_2, %c0_3] : memref<64x32xbf16, #tpu.memory_space<vmem>>, vector<64x32xbf16>
    %cst = arith.constant dense<0.000000e+00> : vector<8x64xf32>
    %6 = tpu.matmul %4, %5, %cst {dimension_numbers = #tpu.dot_dimension_numbers<[1], [1], [0], [0], [0, 0, 1, 0], [], []>} : vector<8x32xbf16>, vector<64x32xbf16>, vector<8x64xf32> -> vector<8x64xf32>
    %c0_4 = arith.constant 0 : index
    %c0_5 = arith.constant 0 : index
    %7 = vector.load %arg4[%c0_4, %c0_5] : memref<1x64xf32, #tpu.memory_space<vmem>>, vector<1x64xf32>
    %8 = vector.broadcast %7 : vector<1x64xf32> to vector<8x64xf32>
    %9 = arith.addf %6, %8 : vector<8x64xf32>
    %cst_6 = arith.constant 0.000000e+00 : f32
    %10 = vector.broadcast %cst_6 : f32 to vector<8x64xf32>
    %11 = arith.maximumf %9, %10 : vector<8x64xf32>
    %12 = arith.truncf %11 : vector<8x64xf32> to vector<8x64xbf16>
    %c0_7 = arith.constant 0 : index
    %c0_8 = arith.constant 0 : index
    %13 = vector.load %arg10[%c0_7, %c0_8] : memref<8x32xf32, #tpu.memory_space<vmem>>, vector<8x32xf32>
    %c0_9 = arith.constant 0 : index
    %c0_10 = arith.constant 0 : index
    %14 = vector.load %arg5[%c0_9, %c0_10] : memref<32x64xbf16, #tpu.memory_space<vmem>>, vector<32x64xbf16>
    %cst_11 = arith.constant dense<0.000000e+00> : vector<8x32xf32>
    %15 = tpu.matmul %12, %14, %cst_11 {dimension_numbers = #tpu.dot_dimension_numbers<[1], [1], [0], [0], [0, 0, 1, 0], [], []>} : vector<8x64xbf16>, vector<32x64xbf16>, vector<8x32xf32> -> vector<8x32xf32>
    %16 = arith.addf %13, %15 : vector<8x32xf32>
    %c0_12 = arith.constant 0 : index
    %c0_13 = arith.constant 0 : index
    %17 = vector.load %arg10[%c0_12, %c0_13] : memref<8x32xf32, #tpu.memory_space<vmem>>, vector<8x32xf32>
    tpu.vector_store %arg10[%c0_12, %c0_13], %16 {strides = array<i32>} : memref<8x32xf32, #tpu.memory_space<vmem>>, vector<8x32xf32>,
    %c0_i32_14 = arith.constant 0 : i32
    %18 = arith.cmpi eq, %arg1, %c0_i32_14 : i32
    %19 = arith.extui %18 : i1 to i32
    %c0_i32_15 = arith.constant 0 : i32
    %20 = arith.cmpi ne, %19, %c0_i32_15 : i32
    scf.if %20 {
      %c0_16 = arith.constant 0 : index
      %c0_17 = arith.constant 0 : index
      %21 = vector.load %arg2[%c0_16, %c0_17] : memref<8x32xf32, #tpu.memory_space<vmem>>, vector<8x32xf32>
      %c0_18 = arith.constant 0 : index
      %c0_19 = arith.constant 0 : index
      %22 = vector.load %arg10[%c0_18, %c0_19] : memref<8x32xf32, #tpu.memory_space<vmem>>, vector<8x32xf32>
      %23 = arith.addf %21, %22 : vector<8x32xf32>
      %c0_20 = arith.constant 0 : index
      %c0_21 = arith.constant 0 : index
      %24 = vector.load %arg6[%c0_20, %c0_21] : memref<1x32xf32, #tpu.memory_space<vmem>>, vector<1x32xf32>
      %25 = vector.broadcast %24 : vector<1x32xf32> to vector<8x32xf32>
      %26 = arith.addf %23, %25 : vector<8x32xf32>
      %cst_22 = arith.constant dense<0.000000e+00> : vector<8xf32>
      %27 = vector.multi_reduction <add>, %26, %cst_22 [1] : vector<8x32xf32> to vector<8xf32>
      %28 = vector.shape_cast %27 : vector<8xf32> to vector<8x1xf32>
      %cst_23 = arith.constant 3.200000e+01 : f32
      %29 = vector.broadcast %cst_23 : f32 to vector<8x1xf32>
      %30 = arith.divf %28, %29 : vector<8x1xf32>
      %31 = vector.broadcast %30 : vector<8x1xf32> to vector<8x32xf32>
      %32 = arith.subf %26, %31 : vector<8x32xf32>
      %33 = arith.mulf %32, %32 : vector<8x32xf32>
      %cst_24 = arith.constant dense<0.000000e+00> : vector<8xf32>
      %34 = vector.multi_reduction <add>, %33, %cst_24 [1] : vector<8x32xf32> to vector<8xf32>
      %35 = vector.shape_cast %34 : vector<8xf32> to vector<8x1xf32>
      %cst_25 = arith.constant 3.200000e+01 : f32
      %36 = vector.broadcast %cst_25 : f32 to vector<8x1xf32>
      %37 = arith.divf %35, %36 : vector<8x1xf32>
      %38 = vector.broadcast %30 : vector<8x1xf32> to vector<8x32xf32>
      %39 = arith.subf %26, %38 : vector<8x32xf32>
      %cst_26 = arith.constant 9.99999974E-6 : f32
      %40 = vector.broadcast %cst_26 : f32 to vector<8x1xf32>
      %41 = arith.addf %37, %40 : vector<8x1xf32>
      %42 = math.rsqrt %41 : vector<8x1xf32>
      %43 = vector.broadcast %42 : vector<8x1xf32> to vector<8x32xf32>
      %44 = arith.mulf %39, %43 : vector<8x32xf32>
      %c0_27 = arith.constant 0 : index
      %c0_28 = arith.constant 0 : index
      %45 = vector.load %arg7[%c0_27, %c0_28] : memref<1x32xf32, #tpu.memory_space<vmem>>, vector<1x32xf32>
      %46 = vector.broadcast %45 : vector<1x32xf32> to vector<8x32xf32>
      %47 = arith.mulf %44, %46 : vector<8x32xf32>
      %c0_29 = arith.constant 0 : index
      %c0_30 = arith.constant 0 : index
      %48 = vector.load %arg8[%c0_29, %c0_30] : memref<1x32xf32, #tpu.memory_space<vmem>>, vector<1x32xf32>
      %49 = vector.broadcast %48 : vector<1x32xf32> to vector<8x32xf32>
      %50 = arith.addf %47, %49 : vector<8x32xf32>
      %c0_31 = arith.constant 0 : index
      %c0_32 = arith.constant 0 : index
      %51 = vector.load %arg9[%c0_31, %c0_32] : memref<8x32xf32, #tpu.memory_space<vmem>>, vector<8x32xf32>
      tpu.vector_store %arg9[%c0_31, %c0_32], %50 {strides = array<i32>} : memref<8x32xf32, #tpu.memory_space<vmem>>, vector<8x32xf32>,
    } else {
    }
    return
  }
  func.func @transform_0(%arg0: i32, %arg1: i32) -> (i32, i32) {
    %c0_i32 = arith.constant 0 : i32
    %c0_i32_0 = arith.constant 0 : i32
    return %arg0, %c0_i32 : i32, i32
  }
  func.func @transform_1(%arg0: i32, %arg1: i32) -> (i32, i32) {
    %c0_i32 = arith.constant 0 : i32
    %c0_i32_0 = arith.constant 0 : i32
    return %arg1, %c0_i32 : i32, i32
  }
  func.func @transform_2(%arg0: i32, %arg1: i32) -> (i32, i32) {
    %c0_i32 = arith.constant 0 : i32
    %c0_i32_0 = arith.constant 0 : i32
    return %c0_i32, %arg1 : i32, i32
  }
  func.func @transform_3(%arg0: i32, %arg1: i32) -> (i32, i32) {
    %c0_i32 = arith.constant 0 : i32
    %c0_i32_0 = arith.constant 0 : i32
    return %c0_i32, %arg1 : i32, i32
  }
  func.func @transform_4(%arg0: i32, %arg1: i32) -> (i32, i32) {
    %c0_i32 = arith.constant 0 : i32
    %c0_i32_0 = arith.constant 0 : i32
    %c0_i32_1 = arith.constant 0 : i32
    return %c0_i32, %c0_i32_0 : i32, i32
  }
  func.func @transform_5(%arg0: i32, %arg1: i32) -> (i32, i32) {
    %c0_i32 = arith.constant 0 : i32
    %c0_i32_0 = arith.constant 0 : i32
    %c0_i32_1 = arith.constant 0 : i32
    return %c0_i32, %c0_i32_0 : i32, i32
  }
  func.func @transform_6(%arg0: i32, %arg1: i32) -> (i32, i32) {
    %c0_i32 = arith.constant 0 : i32
    %c0_i32_0 = arith.constant 0 : i32
    %c0_i32_1 = arith.constant 0 : i32
    return %c0_i32, %c0_i32_0 : i32, i32
  }
  func.func @transform_7(%arg0: i32, %arg1: i32) -> (i32, i32) {
    %c0_i32 = arith.constant 0 : i32
    %c0_i32_0 = arith.constant 0 : i32
    return %arg0, %c0_i32 : i32, i32
  }
}

</mosaic_0001>

<llo_original>
// kernel: decoder_layer.8
$region0: #{decoder_layer.8}
  #allocation0 [shape = 'u32[]', space=smem, size = 0x4, offset = 0x4, fixed_abs, tag = 'smem constant byte address 0x4 - core index']
  #allocation1 [shape = 'u32[144,128]{1,0:T(1,128)}', space=vmem, size = 0x12000, scoped, tag = 'internal scratch']
  %s0 = inlined_call_operand.vmem [shape: bf16[16,32], index: 0, kind: input, shape index: {}]
  %s1 = inlined_call_operand.vmem [shape: bf16[96,32], index: 1, kind: input, shape index: {}]
  %s2 = inlined_call_operand.vmem [shape: f32[1,96], index: 2, kind: input, shape index: {}]
  %s3 = inlined_call_operand.vmem [shape: bf16[16,32], index: 3, kind: output, shape index: {0}]
  %s4 = inlined_call_operand.vmem [shape: bf16[16,32], index: 4, kind: output, shape index: {1}]
  %s5 = inlined_call_operand.vmem [shape: bf16[16,32], index: 5, kind: output, shape index: {2}]
  %6 = xla_tuple %s3, %s4, %s5
  %s7 = sld [smem:[#allocation0]]
  $region61: #{decoder_layer.8} parent=0
    _
  %s9 = ssub.s32 1, %s7
  %s10 = scalar_select 0, %s9, %s7
  loop: start=0, step=1, limit=4
  $region2: #{decoder_layer.8} parent=0 // loop_pre_header
    _
  $region3: #{decoder_layer.8} parent=0 // loop_header
    %s12 = sphi 0, %s16
    %p13 = scmp.ge.s32.totalorder %s12, 4
    %s22 = sphi 0, %s24
    %s25 = sphi 0, %s22
    %s26 = sphi 0, %s25
    %s42 = sphi 0, %s26
    %s46 = sphi 0, %s46
    %s48 = sphi 0, %s46
    %s49 = sphi 0, %s48
    %s63 = sphi 0, %s49
    %s67 = sphi 0, %s67
    %s69 = sphi 0, %s67
    %s70 = sphi 0, %s69
    %s84 = sphi 0, %s70
    %s90 = sphi 0, %s92
    %s93 = sphi 0, %s90
    %s94 = sphi 0, %s93
    %s110 = sphi 0, %s94
    %s116 = sphi 0, %s118
    %s119 = sphi 0, %s116
    %s120 = sphi 0, %s119
    %s136 = sphi 0, %s120
    %s142 = sphi 0, %s144
    %s145 = sphi 0, %s142
    %s146 = sphi 0, %s145
    %s162 = sphi 0, %s146
  $region4: #{decoder_layer.8} parent=0 // loop_header_branch
    %15 = sbr.rel (%p13) target = $region8
  $region5: #{decoder_layer.8} parent=0 // loop_body
    %s17 = ssub.s32 %s12, 1
    %s18 = ssub.s32 %s12, 2
    %s19 = sadd.s32 %s12, 1
    %s20 = ssub.s32 %s12, %s19
    %p21 = scmp.eq.s32.totalorder %s20, 0
    %s23 = sadd.s32 %s22, 1
    %s24 = scalar_select %p21, %s22, %s23
    %p27 = pneg %p21
    %p28 = scmp.eq.s32.totalorder %s12, 1
    %p29 = por %p27, %p28
    %p30 = scmp.ne.s32.totalorder %s22, %s25
    %p31 = scmp.eq.s32.totalorder %s12, 0
    %p32 = por %p30, %p31
    %p33 = scmp.ne.s32.totalorder %s22, %s25
    %p34 = scmp.eq.s32.totalorder %s17, 1
    %p35 = por %p33, %p34
    %p36 = scmp.ne.s32.totalorder %s25, %s26
    %p37 = scmp.eq.s32.totalorder %s17, 0
    %p38 = por %p36, %p37
    %p39 = scmp.ne.s32.totalorder %s25, %s26
    %p40 = scmp.eq.s32.totalorder %s18, 1
    %p41 = por %p39, %p40
    %p43 = scmp.ne.s32.totalorder %s26, %s42
    %p44 = scmp.eq.s32.totalorder %s18, 0
    %p45 = por %p43, %p44
    %s47 = sadd.s32 %s46, 1
    %p50 = scmp.eq.s32.totalorder %s12, 1
    %p51 = scmp.ne.s32.totalorder %s46, %s48
    %p52 = scmp.eq.s32.totalorder %s12, 0
    %p53 = por %p51, %p52
    %p54 = scmp.ne.s32.totalorder %s46, %s48
    %p55 = scmp.eq.s32.totalorder %s17, 1
    %p56 = por %p54, %p55
    %p57 = scmp.ne.s32.totalorder %s48, %s49
    %p58 = scmp.eq.s32.totalorder %s17, 0
    %p59 = por %p57, %p58
    %p60 = scmp.ne.s32.totalorder %s48, %s49
    %p61 = scmp.eq.s32.totalorder %s18, 1
    %p62 = por %p60, %p61
    %p64 = scmp.ne.s32.totalorder %s49, %s63
    %p65 = scmp.eq.s32.totalorder %s18, 0
    %p66 = por %p64, %p65
    %s68 = sadd.s32 %s67, 1
    %p71 = scmp.eq.s32.totalorder %s12, 1
    %p72 = scmp.ne.s32.totalorder %s67, %s69
    %p73 = scmp.eq.s32.totalorder %s12, 0
    %p74 = por %p72, %p73
    %p75 = scmp.ne.s32.totalorder %s67, %s69
    %p76 = scmp.eq.s32.totalorder %s17, 1
    %p77 = por %p75, %p76
    %p78 = scmp.ne.s32.totalorder %s69, %s70
    %p79 = scmp.eq.s32.totalorder %s17, 0
    %p80 = por %p78, %p79
    %p81 = scmp.ne.s32.totalorder %s69, %s70
    %p82 = scmp.eq.s32.totalorder %s18, 1
    %p83 = por %p81, %p82
    %p85 = scmp.ne.s32.totalorder %s70, %s84
    %p86 = scmp.eq.s32.totalorder %s18, 0
    %p87 = por %p85, %p86
    %s88 = ssub.s32 %s12, %s19
    %p89 = scmp.eq.s32.totalorder %s88, 0
    %s91 = sadd.s32 %s90, 1
    %s92 = scalar_select %p89, %s90, %s91
    %p95 = pneg %p89
    %p96 = scmp.eq.s32.totalorder %s12, 1
    %p97 = por %p95, %p96
    %p98 = scmp.ne.s32.totalorder %s90, %s93
    %p99 = scmp.eq.s32.totalorder %s12, 0
    %p100 = por %p98, %p99
    %p101 = scmp.ne.s32.totalorder %s90, %s93
    %p102 = scmp.eq.s32.totalorder %s17, 1
    %p103 = por %p101, %p102
    %p104 = scmp.ne.s32.totalorder %s93, %s94
    %p105 = scmp.eq.s32.totalorder %s17, 0
    %p106 = por %p104, %p105
    %p107 = scmp.ne.s32.totalorder %s93, %s94
    %p108 = scmp.eq.s32.totalorder %s18, 1
    %p109 = por %p107, %p108
    %p111 = scmp.ne.s32.totalorder %s94, %s110
    %p112 = scmp.eq.s32.totalorder %s18, 0
    %p113 = por %p111, %p112
    %s114 = ssub.s32 %s12, %s19
    %p115 = scmp.eq.s32.totalorder %s114, 0
    %s117 = sadd.s32 %s116, 1
    %s118 = scalar_select %p115, %s116, %s117
    %p121 = pneg %p115
    %p122 = scmp.eq.s32.totalorder %s12, 1
    %p123 = por %p121, %p122
    %p124 = scmp.ne.s32.totalorder %s116, %s119
    %p125 = scmp.eq.s32.totalorder %s12, 0
    %p126 = por %p124, %p125
    %p127 = scmp.ne.s32.totalorder %s116, %s119
    %p128 = scmp.eq.s32.totalorder %s17, 1
    %p129 = por %p127, %p128
    %p130 = scmp.ne.s32.totalorder %s119, %s120
    %p131 = scmp.eq.s32.totalorder %s17, 0
    %p132 = por %p130, %p131
    %p133 = scmp.ne.s32.totalorder %s119, %s120
    %p134 = scmp.eq.s32.totalorder %s18, 1
    %p135 = por %p133, %p134
    %p137 = scmp.ne.s32.totalorder %s120, %s136
    %p138 = scmp.eq.s32.totalorder %s18, 0
    %p139 = por %p137, %p138
    %s140 = ssub.s32 %s12, %s19
    %p141 = scmp.eq.s32.totalorder %s140, 0
    %s143 = sadd.s32 %s142, 1
    %s144 = scalar_select %p141, %s142, %s143
    %p147 = pneg %p141
    %p148 = scmp.eq.s32.totalorder %s12, 1
    %p149 = por %p147, %p148
    %p150 = scmp.ne.s32.totalorder %s142, %s145
    %p151 = scmp.eq.s32.totalorder %s12, 0
    %p152 = por %p150, %p151
    %p153 = scmp.ne.s32.totalorder %s142, %s145
    %p154 = scmp.eq.s32.totalorder %s17, 1
    %p155 = por %p153, %p154
    %p156 = scmp.ne.s32.totalorder %s145, %s146
    %p157 = scmp.eq.s32.totalorder %s17, 0
    %p158 = por %p156, %p157
    %p159 = scmp.ne.s32.totalorder %s145, %s146
    %p160 = scmp.eq.s32.totalorder %s18, 1
    %p161 = por %p159, %p160
    %p163 = scmp.ne.s32.totalorder %s146, %s162
    %p164 = scmp.eq.s32.totalorder %s18, 0
    %p165 = por %p163, %p164
    %p166 = scmp.le.s32.totalorder 1, %s12
    %p167 = scmp.lt.s32.totalorder %s12, 3
    %p168 = pnand %p166, %p167
    %p169 = pneg %p168
    // Predicated region
    $region9: #{decoder_layer.8} parent=5 // pred_check
      _
    $region10: #{decoder_layer.8} parent=5 // pred_check_branch
      %171 = sbr.rel (%p168) target = $region12
    $region11: #{decoder_layer.8} parent=5 // pred_region
      %s172 = ssub.s32 %s12, 1
      // Predicated region
      $region13: #{decoder_layer.8} parent=11 // pred_check
        %p173 = pneg %p59
      $region14: #{decoder_layer.8} parent=11 // pred_check_branch
        %175 = sbr.rel (%p173) target = $region16
      $region15: #{decoder_layer.8} parent=11 // pred_region
        _
      $region16: #{decoder_layer.8} parent=11 // pred_fallthru
        _
      // Predicated region
      $region17: #{decoder_layer.8} parent=11 // pred_check
        %p176 = pneg %p80
      $region18: #{decoder_layer.8} parent=11 // pred_check_branch
        %178 = sbr.rel (%p176) target = $region20
      $region19: #{decoder_layer.8} parent=11 // pred_region
        _
      $region20: #{decoder_layer.8} parent=11 // pred_fallthru
        _
    $region12: #{decoder_layer.8} parent=5 // pred_fallthru
      _
    %p179 = scmp.lt.s32.totalorder %s12, 2
    // Predicated region
    $region21: #{decoder_layer.8} parent=5 // pred_check
      %p180 = pneg %p179
    $region22: #{decoder_layer.8} parent=5 // pred_check_branch
      %182 = sbr.rel (%p180) target = $region24
    $region23: #{decoder_layer.8} parent=5 // pred_region
      // Predicated region
      $region25: #{decoder_layer.8} parent=23 // pred_check
        %p183 = pneg %p32
      $region26: #{decoder_layer.8} parent=23 // pred_check_branch
        %185 = sbr.rel (%p183) target = $region28
      $region27: #{decoder_layer.8} parent=23 // pred_region
        %p186 = scmp.lt.s32.totalorder %s12, 1
        %s187 = scalar_select %p186, %s12, 1
        %s188 = smul.addr %s187, 4
        %s189 = scalar_lea.vmem %s0, %s188
      $region28: #{decoder_layer.8} parent=23 // pred_fallthru
        _
    $region24: #{decoder_layer.8} parent=5 // pred_fallthru
      _
    %p190 = scmp.le.s32.totalorder 1, %s12
    %p191 = scmp.lt.s32.totalorder %s12, 3
    %p192 = pnand %p190, %p191
    %p193 = pneg %p192
    // Predicated region
    $region29: #{decoder_layer.8} parent=5 // pred_check
      _
    $region30: #{decoder_layer.8} parent=5 // pred_check_branch
      %195 = sbr.rel (%p192) target = $region32
    $region31: #{decoder_layer.8} parent=5 // pred_region
      %s196 = ssub.s32 %s12, 1
      %p197 = scmp.lt.s32.totalorder %s17, 1
      %s198 = scalar_select %p197, %s17, 1
      %s199 = smul.addr %s198, 4
      %s200 = scalar_lea.vmem %s0, %s199
      %p201 = pneg %p38
      %p202 = pneg %p35
      %p203 = pneg %p59
      %p204 = pneg %p56
      %p205 = pneg %p80
      %p206 = pneg %p77
      %p207 = pneg %p106
      %p208 = pneg %p103
      %p209 = scmp.lt.s32.totalorder %s17, 1
      %s210 = scalar_select %p209, %s17, 1
      %s211 = smul.addr %s210, 4
      %s212 = scalar_lea.vmem %s3, %s211
      %p213 = pneg %p132
      %p214 = pneg %p129
      %p215 = scmp.lt.s32.totalorder %s17, 1
      %s216 = scalar_select %p215, %s17, 1
      %s217 = smul.addr %s216, 4
      %s218 = scalar_lea.vmem %s4, %s217
      %p219 = pneg %p158
      %p220 = pneg %p155
      %p221 = scmp.lt.s32.totalorder %s17, 1
      %s222 = scalar_select %p221, %s17, 1
      %s223 = smul.addr %s222, 4
      %s224 = scalar_lea.vmem %s5, %s223
      %p225 = scmp.lt.s32.totalorder %s17, 1
      %s226 = scalar_select %p225, %s17, 1
      %s227 = smul.addr %s226, 4
      %s228 = scalar_lea.vmem %s0, %s227
      %p229 = scmp.lt.s32.totalorder %s17, 1
      %s230 = scalar_select %p229, %s17, 1
      %s231 = smul.addr %s230, 4
      %s232 = scalar_lea.vmem %s3, %s231
      %p233 = scmp.lt.s32.totalorder %s17, 1
      %s234 = scalar_select %p233, %s17, 1
      %s235 = smul.addr %s234, 4
      %s236 = scalar_lea.vmem %s4, %s235
      %p237 = scmp.lt.s32.totalorder %s17, 1
      %s238 = scalar_select %p237, %s17, 1
      %s239 = smul.addr %s238, 4
      %s240 = scalar_lea.vmem %s5, %s239
      %v242 = vld [vmem:[%s228] sm:$0xf]
      %v243 = vld [vmem:[%s1] sm:$0xf]
      %v244 = vld [vmem:[%s1 + $0x4] sm:$0xf]
      %v245 = vld [vmem:[%s1 + $0x8] sm:$0xf]
      %v246 = vld [vmem:[%s1 + $0xc] sm:$0xf]
      %v247 = vld [vmem:[%s1 + $0x10] sm:$0xf]
      %v248 = vld [vmem:[%s1 + $0x14] sm:$0xf]
      %v249 = vld [vmem:[%s1 + $0x18] sm:$0xf]
      %v250 = vld [vmem:[%s1 + $0x1c] sm:$0xf]
      %v251 = vld [vmem:[%s1 + $0x20] sm:$0xf]
      %v252 = vld [vmem:[%s1 + $0x24] sm:$0xf]
      %v253 = vld [vmem:[%s1 + $0x28] sm:$0xf]
      %v254 = vld [vmem:[%s1 + $0x2c] sm:$0xf]
      %v255 = vld [vmem:[%s2] sm:$0x1]
      %v257 = vlaneseq
      %v258 = vshrl.u32 %v257, 7
      %v259 = vsub.s32 0, %v258
      %v260 = vrot.slane %v255, %v259
      %v274 = vunpack.c.l.b16 %v243
      %v275 = vunpack.c.l.b16 %v244
      %v276 = vunpack.c.l.b16 %v245
      %v277 = vunpack.c.l.b16 %v246
      %v278 = vunpack.c.l.b16 %v247
      %v279 = vunpack.c.l.b16 %v248
      %v280 = vunpack.c.l.b16 %v249
      %v281 = vunpack.c.l.b16 %v250
      %v282 = vunpack.c.l.b16 %v251
      %v283 = vunpack.c.l.b16 %v252
      %v284 = vunpack.c.l.b16 %v253
      %v285 = vunpack.c.l.b16 %v254
      %v286 = vpack.c.b16 %v275, %v274
      %v287 = vpack.c.b16 %v277, %v276
      %v288 = vpack.c.b16 %v279, %v278
      %v289 = vpack.c.b16 %v281, %v280
      %v290 = vpack.c.b16 %v283, %v282
      %v291 = vpack.c.b16 %v285, %v284
      %vm292 = vcmask 261120
      %v294 = vsel %vm292, %v242, 0
      %v297 = vsel %vm292, %v286, 0
      %v300 = vsel %vm292, %v287, 0
      %v303 = vsel %vm292, %v288, 0
      %v306 = vsel %vm292, %v289, 0
      %v309 = vsel %vm292, %v290, 0
      %v312 = vsel %vm292, %v291, 0
      %314 = vmatprep.subr.bf16.mxu0 0
      %315 = vmatpush1.bf16.xpose.msra.mxu0 %v297
      %316 = vmatprep.subr.bf16.mxu0 0
      %317 = vmatpush1.bf16.xpose.msra.mxu0 %v300
      %318 = vmatprep.subr.bf16.mxu0 0
      %319 = vmatpush1.bf16.xpose.msra.mxu0 %v303
      %320 = vmatprep.subr.bf16.mxu0 0
      %321 = vmatpush1.bf16.xpose.msra.mxu0 %v306
      %322 = vmatprep.subr.bf16.mxu0 0
      %323 = vmatpush1.bf16.xpose.msra.mxu0 %v309
      %324 = vmatprep.subr.bf16.mxu0 0
      %325 = vmatpush1.bf16.xpose.msra.mxu0 %v312
      %326 = vmatprep.subr.bf16.mxu0 0
      %327 = vmatpush1.bf16.xpose.msra.mxu0 0
      %328 = vmatprep.subr.bf16.mxu0 0
      %329 = vmatpush1.bf16.xpose.msra.mxu0 0
      %330 = vmatprep.subr.bf16.mxu0 0
      %331 = vmatpush1.bf16.xpose.msra.mxu0 0
      %332 = vmatprep.subr.bf16.mxu0 0
      %333 = vmatpush1.bf16.xpose.msra.mxu0 0
      %334 = vmatprep.subr.bf16.mxu0 0
      %335 = vmatpush1.bf16.xpose.msra.mxu0 0
      %336 = vmatprep.subr.bf16.mxu0 0
      %337 = vmatpush1.bf16.xpose.msra.mxu0 0
      %338 = vmatprep.subr.bf16.mxu0 0
      %339 = vmatpush1.bf16.xpose.msra.mxu0 0
      %340 = vmatprep.subr.bf16.mxu0 0
      %341 = vmatpush1.bf16.xpose.msra.mxu0 0
      %342 = vmatprep.subr.bf16.mxu0 0
      %343 = vmatpush1.bf16.xpose.msra.mxu0 0
      %344 = vmatprep.subr.bf16.mxu0 0
      %345 = vmatpush1.bf16.xpose.msra.mxu0 0
      %346 = vmatprep.mubr.bf16.mxu0 0
      %347 = vmatmul.mubr.bf16.gmra.mrb[0].mxu0 %v294
      %v348 = vpop.f32.mrb[0].mxu0
      %v349 = vadd.f32 %v260, %v348
      %v350 = vpop.f32.mrb[0].mxu0
      %v351 = vpop.f32.mrb[0].mxu0
      %v352 = vpop.f32.mrb[0].mxu0
      %353 = vdwg.mxu0
      %v354 = vpack.c.bf16 %v349, %v349
      %vm355 = vcmask 257024
      %356 = vst.msk [vmem:[%s232] sm:$0xf] %vm355, %v354
      %v358 = vunpack.c.l.b16 %v354
      %v359 = vpack.c.b16 %v358, %v358
      %360 = vrot.lane.b32.xlu0 %v359, 96
      %v361 = vpop.permute.xlu0 %360
      %363 = vst.msk [vmem:[%s236] sm:$0xf] %vm355, %v361
      %364 = vrot.lane.b32.xlu0 %v359, 64
      %v365 = vpop.permute.xlu0 %364
      %367 = vst.msk [vmem:[%s240] sm:$0xf] %vm355, %v365
      %p368 = scmp.lt.s32.totalorder %s17, 1
      %s369 = scalar_select %p368, %s17, 1
      %s370 = smul.addr %s369, 4
      %s371 = scalar_lea.vmem %s3, %s370
      %p372 = scmp.lt.s32.totalorder %s17, 1
      %s373 = scalar_select %p372, %s17, 1
      %s374 = smul.addr %s373, 4
      %s375 = scalar_lea.vmem %s4, %s374
      %p376 = scmp.lt.s32.totalorder %s17, 1
      %s377 = scalar_select %p376, %s17, 1
      %s378 = smul.addr %s377, 4
      %s379 = scalar_lea.vmem %s5, %s378
      // Predicated region
      $region33: #{decoder_layer.8} parent=31 // pred_check
        %p380 = pneg %p103
      $region34: #{decoder_layer.8} parent=31 // pred_check_branch
        %382 = sbr.rel (%p380) target = $region36
      $region35: #{decoder_layer.8} parent=31 // pred_region
        _
      $region36: #{decoder_layer.8} parent=31 // pred_fallthru
        _
      // Predicated region
      $region37: #{decoder_layer.8} parent=31 // pred_check
        %p383 = pneg %p129
      $region38: #{decoder_layer.8} parent=31 // pred_check_branch
        %385 = sbr.rel (%p383) target = $region40
      $region39: #{decoder_layer.8} parent=31 // pred_region
        _
      $region40: #{decoder_layer.8} parent=31 // pred_fallthru
        _
      // Predicated region
      $region41: #{decoder_layer.8} parent=31 // pred_check
        %p386 = pneg %p155
      $region42: #{decoder_layer.8} parent=31 // pred_check_branch
        %388 = sbr.rel (%p386) target = $region44
      $region43: #{decoder_layer.8} parent=31 // pred_region
        _
      $region44: #{decoder_layer.8} parent=31 // pred_fallthru
        _
    $region32: #{decoder_layer.8} parent=5 // pred_fallthru
      _
    %p389 = scmp.le.s32.totalorder 2, %s12
    // Predicated region
    $region45: #{decoder_layer.8} parent=5 // pred_check
      %p390 = pneg %p389
    $region46: #{decoder_layer.8} parent=5 // pred_check_branch
      %392 = sbr.rel (%p390) target = $region48
    $region47: #{decoder_layer.8} parent=5 // pred_region
      %s393 = ssub.s32 %s12, 2
      // Predicated region
      $region49: #{decoder_layer.8} parent=47 // pred_check
        %p394 = pneg %p109
      $region50: #{decoder_layer.8} parent=47 // pred_check_branch
        %396 = sbr.rel (%p394) target = $region52
      $region51: #{decoder_layer.8} parent=47 // pred_region
        %p397 = scmp.lt.s32.totalorder %s18, 1
        %s398 = scalar_select %p397, %s18, 1
        %s399 = smul.addr %s398, 4
        %s400 = scalar_lea.vmem %s3, %s399
      $region52: #{decoder_layer.8} parent=47 // pred_fallthru
        _
      // Predicated region
      $region53: #{decoder_layer.8} parent=47 // pred_check
        %p401 = pneg %p135
      $region54: #{decoder_layer.8} parent=47 // pred_check_branch
        %403 = sbr.rel (%p401) target = $region56
      $region55: #{decoder_layer.8} parent=47 // pred_region
        %p404 = scmp.lt.s32.totalorder %s18, 1
        %s405 = scalar_select %p404, %s18, 1
        %s406 = smul.addr %s405, 4
        %s407 = scalar_lea.vmem %s4, %s406
      $region56: #{decoder_layer.8} parent=47 // pred_fallthru
        _
      // Predicated region
      $region57: #{decoder_layer.8} parent=47 // pred_check
        %p408 = pneg %p161
      $region58: #{decoder_layer.8} parent=47 // pred_check_branch
        %410 = sbr.rel (%p408) target = $region60
      $region59: #{decoder_layer.8} parent=47 // pred_region
        %p411 = scmp.lt.s32.totalorder %s18, 1
        %s412 = scalar_select %p411, %s18, 1
        %s413 = smul.addr %s412, 4
        %s414 = scalar_lea.vmem %s5, %s413
      $region60: #{decoder_layer.8} parent=47 // pred_fallthru
        _
    $region48: #{decoder_layer.8} parent=5 // pred_fallthru
      _
  $region6: #{decoder_layer.8} parent=0 // loop_footer
    %s16 = sadd.s32 1, %s12
  $region7: #{decoder_layer.8} parent=0 // loop_footer_branch
    %11 = sbr.rel target = $region3
  $region8: #{decoder_layer.8} parent=0 // loop_exit
    _

// kernel: decoder_layer.12
$region0: #{decoder_layer.12}
  #allocation0 [shape = 'u32[]', space=smem, size = 0x4, offset = 0x4, fixed_abs, tag = 'smem constant byte address 0x4 - core index']
  #allocation1 [shape = 'u32[144,128]{1,0:T(1,128)}', space=vmem, size = 0x12000, scoped, tag = 'internal scratch']
  %s0 = inlined_call_operand.vmem [shape: bf16[20,32], index: 0, kind: input, shape index: {}]
  %s1 = inlined_call_operand.vmem [shape: bf16[64,32], index: 1, kind: input, shape index: {}]
  %s2 = inlined_call_operand.vmem [shape: f32[1,64], index: 2, kind: input, shape index: {}]
  %s3 = inlined_call_operand.vmem [shape: bf16[20,32], index: 3, kind: output, shape index: {0}]
  %s4 = inlined_call_operand.vmem [shape: bf16[20,32], index: 4, kind: output, shape index: {1}]
  %5 = xla_tuple %s3, %s4
  %s6 = sld [smem:[#allocation0]]
  $region141: #{decoder_layer.12} parent=0
    _
  %s8 = ssub.s32 1, %s6
  %s9 = scalar_select 0, %s8, %s6
  $region1: #{decoder_layer.12} parent=0
    #allocation2 [shape = 'u8[8192]{0}', space=vmem, size = 0x2000, scoped, tag = 'output window, operand 0']
    #allocation3 [shape = 'u8[8192]{0}', space=vmem, size = 0x2000, scoped, tag = 'output window, operand 1']
    loop: start=0, step=1, limit=4
    $region2: #{decoder_layer.12} parent=1 // loop_pre_header
      _
    $region3: #{decoder_layer.12} parent=1 // loop_header
      %s11 = sphi 0, %s15
      %p12 = scmp.ge.s32.totalorder %s11, 4
      %s21 = sphi 0, %s23
      %s24 = sphi 0, %s21
      %s25 = sphi 0, %s24
      %s41 = sphi 0, %s25
      %s45 = sphi 0, %s45
      %s47 = sphi 0, %s45
      %s48 = sphi 0, %s47
      %s62 = sphi 0, %s48
      %s66 = sphi 0, %s66
      %s68 = sphi 0, %s66
      %s69 = sphi 0, %s68
      %s83 = sphi 0, %s69
      %s89 = sphi 0, %s91
      %s92 = sphi 0, %s89
      %s93 = sphi 0, %s92
      %s109 = sphi 0, %s93
      %s115 = sphi 0, %s117
      %s118 = sphi 0, %s115
      %s119 = sphi 0, %s118
      %s135 = sphi 0, %s119
    $region4: #{decoder_layer.12} parent=1 // loop_header_branch
      %14 = sbr.rel (%p12) target = $region8
    $region5: #{decoder_layer.12} parent=1 // loop_body
      %s16 = ssub.s32 %s11, 1
      %s17 = ssub.s32 %s11, 2
      %s18 = sadd.s32 %s11, 1
      %s19 = ssub.s32 %s11, %s18
      %p20 = scmp.eq.s32.totalorder %s19, 0
      %s22 = sadd.s32 %s21, 1
      %s23 = scalar_select %p20, %s21, %s22
      %p26 = pneg %p20
      %p27 = scmp.eq.s32.totalorder %s11, 1
      %p28 = por %p26, %p27
      %p29 = scmp.ne.s32.totalorder %s21, %s24
      %p30 = scmp.eq.s32.totalorder %s11, 0
      %p31 = por %p29, %p30
      %p32 = scmp.ne.s32.totalorder %s21, %s24
      %p33 = scmp.eq.s32.totalorder %s16, 1
      %p34 = por %p32, %p33
      %p35 = scmp.ne.s32.totalorder %s24, %s25
      %p36 = scmp.eq.s32.totalorder %s16, 0
      %p37 = por %p35, %p36
      %p38 = scmp.ne.s32.totalorder %s24, %s25
      %p39 = scmp.eq.s32.totalorder %s17, 1
      %p40 = por %p38, %p39
      %p42 = scmp.ne.s32.totalorder %s25, %s41
      %p43 = scmp.eq.s32.totalorder %s17, 0
      %p44 = por %p42, %p43
      %s46 = sadd.s32 %s45, 1
      %p49 = scmp.eq.s32.totalorder %s11, 1
      %p50 = scmp.ne.s32.totalorder %s45, %s47
      %p51 = scmp.eq.s32.totalorder %s11, 0
      %p52 = por %p50, %p51
      %p53 = scmp.ne.s32.totalorder %s45, %s47
      %p54 = scmp.eq.s32.totalorder %s16, 1
      %p55 = por %p53, %p54
      %p56 = scmp.ne.s32.totalorder %s47, %s48
      %p57 = scmp.eq.s32.totalorder %s16, 0
      %p58 = por %p56, %p57
      %p59 = scmp.ne.s32.totalorder %s47, %s48
      %p60 = scmp.eq.s32.totalorder %s17, 1
      %p61 = por %p59, %p60
      %p63 = scmp.ne.s32.totalorder %s48, %s62
      %p64 = scmp.eq.s32.totalorder %s17, 0
      %p65 = por %p63, %p64
      %s67 = sadd.s32 %s66, 1
      %p70 = scmp.eq.s32.totalorder %s11, 1
      %p71 = scmp.ne.s32.totalorder %s66, %s68
      %p72 = scmp.eq.s32.totalorder %s11, 0
      %p73 = por %p71, %p72
      %p74 = scmp.ne.s32.totalorder %s66, %s68
      %p75 = scmp.eq.s32.totalorder %s16, 1
      %p76 = por %p74, %p75
      %p77 = scmp.ne.s32.totalorder %s68, %s69
      %p78 = scmp.eq.s32.totalorder %s16, 0
      %p79 = por %p77, %p78
      %p80 = scmp.ne.s32.totalorder %s68, %s69
      %p81 = scmp.eq.s32.totalorder %s17, 1
      %p82 = por %p80, %p81
      %p84 = scmp.ne.s32.totalorder %s69, %s83
      %p85 = scmp.eq.s32.totalorder %s17, 0
      %p86 = por %p84, %p85
      %s87 = ssub.s32 %s11, %s18
      %p88 = scmp.eq.s32.totalorder %s87, 0
      %s90 = sadd.s32 %s89, 1
      %s91 = scalar_select %p88, %s89, %s90
      %p94 = pneg %p88
      %p95 = scmp.eq.s32.totalorder %s11, 1
      %p96 = por %p94, %p95
      %p97 = scmp.ne.s32.totalorder %s89, %s92
      %p98 = scmp.eq.s32.totalorder %s11, 0
      %p99 = por %p97, %p98
      %p100 = scmp.ne.s32.totalorder %s89, %s92
      %p101 = scmp.eq.s32.totalorder %s16, 1
      %p102 = por %p100, %p101
      %p103 = scmp.ne.s32.totalorder %s92, %s93
      %p104 = scmp.eq.s32.totalorder %s16, 0
      %p105 = por %p103, %p104
      %p106 = scmp.ne.s32.totalorder %s92, %s93
      %p107 = scmp.eq.s32.totalorder %s17, 1
      %p108 = por %p106, %p107
      %p110 = scmp.ne.s32.totalorder %s93, %s109
      %p111 = scmp.eq.s32.totalorder %s17, 0
      %p112 = por %p110, %p111
      %s113 = ssub.s32 %s11, %s18
      %p114 = scmp.eq.s32.totalorder %s113, 0
      %s116 = sadd.s32 %s115, 1
      %s117 = scalar_select %p114, %s115, %s116
      %p120 = pneg %p114
      %p121 = scmp.eq.s32.totalorder %s11, 1
      %p122 = por %p120, %p121
      %p123 = scmp.ne.s32.totalorder %s115, %s118
      %p124 = scmp.eq.s32.totalorder %s11, 0
      %p125 = por %p123, %p124
      %p126 = scmp.ne.s32.totalorder %s115, %s118
      %p127 = scmp.eq.s32.totalorder %s16, 1
      %p128 = por %p126, %p127
      %p129 = scmp.ne.s32.totalorder %s118, %s119
      %p130 = scmp.eq.s32.totalorder %s16, 0
      %p131 = por %p129, %p130
      %p132 = scmp.ne.s32.totalorder %s118, %s119
      %p133 = scmp.eq.s32.totalorder %s17, 1
      %p134 = por %p132, %p133
      %p136 = scmp.ne.s32.totalorder %s119, %s135
      %p137 = scmp.eq.s32.totalorder %s17, 0
      %p138 = por %p136, %p137
      %p139 = scmp.le.s32.totalorder 1, %s11
      %p140 = scmp.lt.s32.totalorder %s11, 3
      %p141 = pnand %p139, %p140
      %p142 = pneg %p141
      // Predicated region
      $region9: #{decoder_layer.12} parent=5 // pred_check
        _
      $region10: #{decoder_layer.12} parent=5 // pred_check_branch
        %144 = sbr.rel (%p141) target = $region12
      $region11: #{decoder_layer.12} parent=5 // pred_region
        %s145 = ssub.s32 %s11, 1
        // Predicated region
        $region13: #{decoder_layer.12} parent=11 // pred_check
          %p146 = pneg %p58
        $region14: #{decoder_layer.12} parent=11 // pred_check_branch
          %148 = sbr.rel (%p146) target = $region16
        $region15: #{decoder_layer.12} parent=11 // pred_region
          _
        $region16: #{decoder_layer.12} parent=11 // pred_fallthru
          _
        // Predicated region
        $region17: #{decoder_layer.12} parent=11 // pred_check
          %p149 = pneg %p79
        $region18: #{decoder_layer.12} parent=11 // pred_check_branch
          %151 = sbr.rel (%p149) target = $region20
        $region19: #{decoder_layer.12} parent=11 // pred_region
          _
        $region20: #{decoder_layer.12} parent=11 // pred_fallthru
          _
      $region12: #{decoder_layer.12} parent=5 // pred_fallthru
        _
      %p152 = scmp.lt.s32.totalorder %s11, 2
      // Predicated region
      $region21: #{decoder_layer.12} parent=5 // pred_check
        %p153 = pneg %p152
      $region22: #{decoder_layer.12} parent=5 // pred_check_branch
        %155 = sbr.rel (%p153) target = $region24
      $region23: #{decoder_layer.12} parent=5 // pred_region
        // Predicated region
        $region25: #{decoder_layer.12} parent=23 // pred_check
          %p156 = pneg %p31
        $region26: #{decoder_layer.12} parent=23 // pred_check_branch
          %158 = sbr.rel (%p156) target = $region28
        $region27: #{decoder_layer.12} parent=23 // pred_region
          %s159 = smul.u32 2, %s11
          %s160 = ssub.s32 3, %s159
          %p161 = scmp.lt.s32.totalorder %s160, 2
          %s162 = scalar_select %p161, %s160, 2
          %s163 = smul.u32 64, %s162
          %p164 = scmp.lt.s32.totalorder %s159, 2
          %s165 = scalar_select %p164, %s159, 2
          %s166 = smul.addr %s165, 4
          %s167 = scalar_lea.vmem %s0, %s166
          %s168 = smul.u32 2, %s11
          %s169 = ssub.s32 3, %s168
          %p170 = scmp.lt.s32.totalorder %s169, 2
          %s171 = scalar_select %p170, %s169, 2
          %s172 = smul.u32 64, %s171
        $region28: #{decoder_layer.12} parent=23 // pred_fallthru
          _
      $region24: #{decoder_layer.12} parent=5 // pred_fallthru
        _
      %p173 = scmp.le.s32.totalorder 1, %s11
      %p174 = scmp.lt.s32.totalorder %s11, 3
      %p175 = pnand %p173, %p174
      %p176 = pneg %p175
      // Predicated region
      $region29: #{decoder_layer.12} parent=5 // pred_check
        _
      $region30: #{decoder_layer.12} parent=5 // pred_check_branch
        %178 = sbr.rel (%p175) target = $region32
      $region31: #{decoder_layer.12} parent=5 // pred_region
        %s179 = ssub.s32 %s11, 1
        %s180 = smul.u32 2, %s16
        %s181 = ssub.s32 3, %s180
        %p182 = scmp.lt.s32.totalorder %s181, 2
        %s183 = scalar_select %p182, %s181, 2
        %s184 = smul.u32 64, %s183
        %p185 = scmp.lt.s32.totalorder %s180, 2
        %s186 = scalar_select %p185, %s180, 2
        %s187 = smul.addr %s186, 4
        %s188 = scalar_lea.vmem %s0, %s187
        %p189 = pneg %p37
        %p190 = pneg %p34
        %p191 = pneg %p58
        %p192 = pneg %p55
        %p193 = pneg %p79
        %p194 = pneg %p76
        %p195 = pneg %p105
        %p196 = pneg %p102
        %s197 = sand.u32 %s92, 1
        %s198 = sand.u32 %s92, 1
        %s199 = smul.addr %s198, 8
        %s200 = scalar_lea.vmem [#allocation2], %s199
        %p201 = pneg %p131
        %p202 = pneg %p128
        %s203 = sand.u32 %s118, 1
        %s204 = sand.u32 %s118, 1
        %s205 = smul.addr %s204, 8
        %s206 = scalar_lea.vmem [#allocation3], %s205
        %s207 = smul.u32 2, %s16
        %s208 = ssub.s32 3, %s207
        %p209 = scmp.lt.s32.totalorder %s208, 2
        %s210 = scalar_select %p209, %s208, 2
        %s211 = smul.u32 64, %s210
        %p212 = scmp.lt.s32.totalorder %s207, 2
        %s213 = scalar_select %p212, %s207, 2
        %s214 = smul.addr %s213, 4
        %s215 = scalar_lea.vmem %s0, %s214
        %s216 = smul.u32 2, %s16
        %s217 = ssub.s32 3, %s216
        %p218 = scmp.lt.s32.totalorder %s217, 2
        %s219 = scalar_select %p218, %s217, 2
        %s220 = smul.u32 64, %s219
        %s221 = smul.u32 2, %s16
        %s222 = ssub.s32 3, %s221
        %p223 = scmp.lt.s32.totalorder %s222, 2
        %s224 = scalar_select %p223, %s222, 2
        %s225 = smul.u32 64, %s224
        %s226 = smul.u32 2, %s16
        %s227 = ssub.s32 3, %s226
        %p228 = scmp.lt.s32.totalorder %s227, 2
        %s229 = scalar_select %p228, %s227, 2
        %s230 = smul.u32 64, %s229
        %v232 = vld [vmem:[%s215] sm:$0xf]
        %v233 = vld [vmem:[%s215 + $0x4] sm:$0xf]
        %v234 = vld [vmem:[%s1] sm:$0xf]
        %v235 = vld [vmem:[%s1 + $0x4] sm:$0xf]
        %v236 = vld [vmem:[%s1 + $0x8] sm:$0xf]
        %v237 = vld [vmem:[%s1 + $0xc] sm:$0xf]
        %v238 = vld [vmem:[%s1 + $0x10] sm:$0xf]
        %v239 = vld [vmem:[%s1 + $0x14] sm:$0xf]
        %v240 = vld [vmem:[%s1 + $0x18] sm:$0xf]
        %v241 = vld [vmem:[%s1 + $0x1c] sm:$0xf]
        %v242 = vld [vmem:[%s2] sm:$0x1]
        %v244 = vlaneseq
        %v245 = vshrl.u32 %v244, 7
        %v246 = vsub.s32 0, %v245
        %v247 = vrot.slane %v242, %v246
        %v251 = vunpack.c.l.b16 %v232
        %v252 = vunpack.c.l.b16 %v233
        %v253 = vpack.c.b16 %v252, %v251
        %v262 = vunpack.c.l.b16 %v234
        %v263 = vunpack.c.l.b16 %v235
        %v264 = vunpack.c.l.b16 %v236
        %v265 = vunpack.c.l.b16 %v237
        %v266 = vunpack.c.l.b16 %v238
        %v267 = vunpack.c.l.b16 %v239
        %v268 = vunpack.c.l.b16 %v240
        %v269 = vunpack.c.l.b16 %v241
        %v270 = vpack.c.b16 %v263, %v262
        %v271 = vpack.c.b16 %v265, %v264
        %v272 = vpack.c.b16 %v267, %v266
        %v273 = vpack.c.b16 %v269, %v268
        %vm274 = vcmask 261120
        %v276 = vsel %vm274, %v253, 0
        %v279 = vsel %vm274, %v270, 0
        %v282 = vsel %vm274, %v271, 0
        %v285 = vsel %vm274, %v272, 0
        %v288 = vsel %vm274, %v273, 0
        %290 = vmatprep.subr.bf16.mxu0 0
        %291 = vmatpush1.bf16.xpose.msra.mxu0 %v279
        %292 = vmatprep.subr.bf16.mxu0 0
        %293 = vmatpush1.bf16.xpose.msra.mxu0 %v282
        %294 = vmatprep.subr.bf16.mxu0 0
        %295 = vmatpush1.bf16.xpose.msra.mxu0 %v285
        %296 = vmatprep.subr.bf16.mxu0 0
        %297 = vmatpush1.bf16.xpose.msra.mxu0 %v288
        %298 = vmatprep.subr.bf16.mxu0 0
        %299 = vmatpush1.bf16.xpose.msra.mxu0 0
        %300 = vmatprep.subr.bf16.mxu0 0
        %301 = vmatpush1.bf16.xpose.msra.mxu0 0
        %302 = vmatprep.subr.bf16.mxu0 0
        %303 = vmatpush1.bf16.xpose.msra.mxu0 0
        %304 = vmatprep.subr.bf16.mxu0 0
        %305 = vmatpush1.bf16.xpose.msra.mxu0 0
        %306 = vmatprep.subr.bf16.mxu0 0
        %307 = vmatpush1.bf16.xpose.msra.mxu0 0
        %308 = vmatprep.subr.bf16.mxu0 0
        %309 = vmatpush1.bf16.xpose.msra.mxu0 0
        %310 = vmatprep.subr.bf16.mxu0 0
        %311 = vmatpush1.bf16.xpose.msra.mxu0 0
        %312 = vmatprep.subr.bf16.mxu0 0
        %313 = vmatpush1.bf16.xpose.msra.mxu0 0
        %314 = vmatprep.subr.bf16.mxu0 0
        %315 = vmatpush1.bf16.xpose.msra.mxu0 0
        %316 = vmatprep.subr.bf16.mxu0 0
        %317 = vmatpush1.bf16.xpose.msra.mxu0 0
        %318 = vmatprep.subr.bf16.mxu0 0
        %319 = vmatpush1.bf16.xpose.msra.mxu0 0
        %320 = vmatprep.subr.bf16.mxu0 0
        %321 = vmatpush1.bf16.xpose.msra.mxu0 0
        %322 = vmatprep.mubr.bf16.mxu0 0
        %323 = vmatmul.mubr.bf16.gmra.mrb[0].mxu0 %v276
        %v324 = vpop.f32.mrb[0].mxu0
        %v325 = vadd.f32 %v247, %v324
        %v326 = vpop.f32.mrb[0].mxu0
        %v327 = vpop.f32.mrb[0].mxu0
        %v328 = vadd.f32 %v247, %v327
        %v329 = vpop.f32.mrb[0].mxu0
        %330 = vdwg.mxu0
        %v331 = vpack.c.bf16 %v328, %v325
        %v333 = vunpack.c.l.b16 %v331
        %v334 = vunpack.c.h.b16 %v331
        %v335 = vpack.c.b16 %v333, %v333
        %v336 = vpack.c.b16 %v334, %v334
        %vm339 = vcmask 257024
        %340 = vst.msk [vmem:[%s200] sm:$0xf] %vm339, %v335
        %341 = vst.msk [vmem:[%s200 + $0x4] sm:$0xf] %vm339, %v336
        %342 = vrot.lane.b32.xlu0 %v335, 96
        %v343 = vpop.permute.xlu0 %342
        %344 = vrot.lane.b32.xlu0 %v336, 96
        %v345 = vpop.permute.xlu0 %344
        %348 = vst.msk [vmem:[%s206] sm:$0xf] %vm339, %v343
        %349 = vst.msk [vmem:[%s206 + $0x4] sm:$0xf] %vm339, %v345
        %s350 = sand.u32 %s92, 1
        %s351 = sand.u32 %s92, 1
        %s352 = smul.addr %s351, 8
        %s353 = scalar_lea.vmem [#allocation2], %s352
        %s354 = sand.u32 %s118, 1
        %s355 = sand.u32 %s118, 1
        %s356 = smul.addr %s355, 8
        %s357 = scalar_lea.vmem [#allocation3], %s356
        // Predicated region
        $region33: #{decoder_layer.12} parent=31 // pred_check
          %p358 = pneg %p102
        $region34: #{decoder_layer.12} parent=31 // pred_check_branch
          %360 = sbr.rel (%p358) target = $region36
        $region35: #{decoder_layer.12} parent=31 // pred_region
          %s361 = smul.u32 2, %s16
          %s362 = ssub.s32 3, %s361
          %p363 = scmp.lt.s32.totalorder %s362, 2
          %s364 = scalar_select %p363, %s362, 2
          %s365 = smul.u32 64, %s364
          %p366 = scmp.ne.s32.totalorder 0, %s365
          %s367 = smul.addr %s361, 4
          %s368 = scalar_lea.vmem %s3, %s367
          // Predicated region
          $region37: #{decoder_layer.12} parent=35 // pred_check
            %p369 = pneg %p366
          $region38: #{decoder_layer.12} parent=35 // pred_check_branch
            %371 = sbr.rel (%p369) target = $region40
          $region39: #{decoder_layer.12} parent=35 // pred_region
            // Predicated region
            $region41: #{decoder_layer.12} parent=39 // pred_check
              _
            $region42: #{decoder_layer.12} parent=39 // pred_check_branch
              %373 = sbr.rel target = $region44
            $region43: #{decoder_layer.12} parent=39 // pred_region
              // Predicated region
              $region63: #{decoder_layer.12} parent=43 // pred_check
                _
              $region64: #{decoder_layer.12} parent=43 // pred_check_branch
                %424 = sbr.rel (0) target = $region66
              $region65: #{decoder_layer.12} parent=43 // pred_region
                %s426 = sshrl.u32 %s364, 1
                // While loop
                $region67: #{decoder_layer.12} parent=65 // loop_pre_header
                  _
                $region68: #{decoder_layer.12} parent=65 // loop_header
                  %s428 = sphi 0, %s430
                  %p429 = scmp.ge.s32.totalorder %s428, %s426
                  %s433 = sphi 0, %s442
                  %s434 = sphi %s353, %s445
                  %s435 = sphi %s368, %s446
                $region69: #{decoder_layer.12} parent=65 // loop_header_branch
                  %432 = sbr.rel (%p429) target = $region73
                $region70: #{decoder_layer.12} parent=65 // loop_body
                  %v436 = vld [vmem:[%s434] sm:$0xf]
                  %437 = vst [vmem:[%s435] sm:$0xf] %v436
                  %v438 = vld [vmem:[%s434 + $0x4] sm:$0xf]
                  %439 = vst [vmem:[%s435 + $0x4] sm:$0xf] %v438
                  %s440 = sadd.s32 1, %s433
                  %p441 = scmp.ge.s32.totalorder %s440, %s426
                  %s442 = scalar_select %p441, 0, %s440
                  %s443 = smul.u32 %s442, 8
                  %s444 = smul.u32 %s442, 8
                  %s445 = scalar_lea.vmem %s353, %s443 [#allocation2]
                  %s446 = scalar_lea.vmem %s368, %s444
                $region71: #{decoder_layer.12} parent=65 // loop_footer
                  %s430 = sadd.s32 %s428, 1
                $region72: #{decoder_layer.12} parent=65 // loop_footer_branch
                  %427 = sbr.rel target = $region68
                $region73: #{decoder_layer.12} parent=65 // loop_exit
                  _
                %s447 = sshrl.u32 %s364, 1
                %s448 = sand.u32 %s364, 1
                %s449 = smul.u32 %s447, 2
                %s450 = smul.u32 4, %s449
                %s451 = scalar_lea.vmem %s353, %s450 [#allocation2]
                %s452 = smul.u32 4, %s449
                %s453 = scalar_lea.vmem %s368, %s452
                // While loop
                $region74: #{decoder_layer.12} parent=65 // loop_pre_header
                  _
                $region75: #{decoder_layer.12} parent=65 // loop_header
                  %s455 = sphi 0, %s457
                  %p456 = scmp.ge.s32.totalorder %s455, %s448
                  %s460 = sphi 0, %s467
                  %s461 = sphi %s451, %s470
                  %s462 = sphi %s453, %s471
                $region76: #{decoder_layer.12} parent=65 // loop_header_branch
                  %459 = sbr.rel (%p456) target = $region80
                $region77: #{decoder_layer.12} parent=65 // loop_body
                  %v463 = vld [vmem:[%s461] sm:$0xf]
                  %464 = vst [vmem:[%s462] sm:$0xf] %v463
                  %s465 = sadd.s32 1, %s460
                  %p466 = scmp.ge.s32.totalorder %s465, %s448
                  %s467 = scalar_select %p466, 0, %s465
                  %s468 = smul.u32 %s467, 4
                  %s469 = smul.u32 %s467, 4
                  %s470 = scalar_lea.vmem %s451, %s468 [#allocation2]
                  %s471 = scalar_lea.vmem %s453, %s469
                $region78: #{decoder_layer.12} parent=65 // loop_footer
                  %s457 = sadd.s32 %s455, 1
                $region79: #{decoder_layer.12} parent=65 // loop_footer_branch
                  %454 = sbr.rel target = $region75
                $region80: #{decoder_layer.12} parent=65 // loop_exit
                  _
              $region66: #{decoder_layer.12} parent=43 // pred_fallthru
                _
            $region44: #{decoder_layer.12} parent=39 // pred_fallthru
              _
            // Predicated region
            $region45: #{decoder_layer.12} parent=39 // pred_check
              _
            $region46: #{decoder_layer.12} parent=39 // pred_check_branch
              %375 = sbr.rel (0) target = $region48
            $region47: #{decoder_layer.12} parent=39 // pred_region
              %s377 = sshrl.u32 %s364, 1
              // While loop
              $region49: #{decoder_layer.12} parent=47 // loop_pre_header
                _
              $region50: #{decoder_layer.12} parent=47 // loop_header
                %s379 = sphi 0, %s381
                %p380 = scmp.ge.s32.totalorder %s379, %s377
                %s384 = sphi 0, %s393
                %s385 = sphi %s353, %s396
                %s386 = sphi %s368, %s397
              $region51: #{decoder_layer.12} parent=47 // loop_header_branch
                %383 = sbr.rel (%p380) target = $region55
              $region52: #{decoder_layer.12} parent=47 // loop_body
                %v387 = vld [vmem:[%s385] sm:$0xf]
                %388 = vst [vmem:[%s386] sm:$0xf] %v387
                %v389 = vld [vmem:[%s385 + $0x4] sm:$0xf]
                %390 = vst [vmem:[%s386 + $0x4] sm:$0xf] %v389
                %s391 = sadd.s32 1, %s384
                %p392 = scmp.ge.s32.totalorder %s391, %s377
                %s393 = scalar_select %p392, 0, %s391
                %s394 = smul.u32 %s393, 8
                %s395 = smul.u32 %s393, 8
                %s396 = scalar_lea.vmem %s353, %s394 [#allocation2]
                %s397 = scalar_lea.vmem %s368, %s395
              $region53: #{decoder_layer.12} parent=47 // loop_footer
                %s381 = sadd.s32 %s379, 1
              $region54: #{decoder_layer.12} parent=47 // loop_footer_branch
                %378 = sbr.rel target = $region50
              $region55: #{decoder_layer.12} parent=47 // loop_exit
                _
              %s398 = sshrl.u32 %s364, 1
              %s399 = sand.u32 %s364, 1
              %s400 = smul.u32 %s398, 2
              %s401 = smul.u32 4, %s400
              %s402 = scalar_lea.vmem %s353, %s401 [#allocation2]
              %s403 = smul.u32 4, %s400
              %s404 = scalar_lea.vmem %s368, %s403
              // While loop
              $region56: #{decoder_layer.12} parent=47 // loop_pre_header
                _
              $region57: #{decoder_layer.12} parent=47 // loop_header
                %s406 = sphi 0, %s408
                %p407 = scmp.ge.s32.totalorder %s406, %s399
                %s411 = sphi 0, %s418
                %s412 = sphi %s402, %s421
                %s413 = sphi %s404, %s422
              $region58: #{decoder_layer.12} parent=47 // loop_header_branch
                %410 = sbr.rel (%p407) target = $region62
              $region59: #{decoder_layer.12} parent=47 // loop_body
                %v414 = vld [vmem:[%s412] sm:$0xf]
                %415 = vst [vmem:[%s413] sm:$0xf] %v414
                %s416 = sadd.s32 1, %s411
                %p417 = scmp.ge.s32.totalorder %s416, %s399
                %s418 = scalar_select %p417, 0, %s416
                %s419 = smul.u32 %s418, 4
                %s420 = smul.u32 %s418, 4
                %s421 = scalar_lea.vmem %s402, %s419 [#allocation2]
                %s422 = scalar_lea.vmem %s404, %s420
              $region60: #{decoder_layer.12} parent=47 // loop_footer
                %s408 = sadd.s32 %s406, 1
              $region61: #{decoder_layer.12} parent=47 // loop_footer_branch
                %405 = sbr.rel target = $region57
              $region62: #{decoder_layer.12} parent=47 // loop_exit
                _
            $region48: #{decoder_layer.12} parent=39 // pred_fallthru
              _
          $region40: #{decoder_layer.12} parent=35 // pred_fallthru
            _
          %472 = vnop
        $region36: #{decoder_layer.12} parent=31 // pred_fallthru
          _
        // Predicated region
        $region81: #{decoder_layer.12} parent=31 // pred_check
          %p473 = pneg %p128
        $region82: #{decoder_layer.12} parent=31 // pred_check_branch
          %475 = sbr.rel (%p473) target = $region84
        $region83: #{decoder_layer.12} parent=31 // pred_region
          %s476 = smul.u32 2, %s16
          %s477 = ssub.s32 3, %s476
          %p478 = scmp.lt.s32.totalorder %s477, 2
          %s479 = scalar_select %p478, %s477, 2
          %s480 = smul.u32 64, %s479
          %p481 = scmp.ne.s32.totalorder 0, %s480
          %s482 = smul.addr %s476, 4
          %s483 = scalar_lea.vmem %s4, %s482
          // Predicated region
          $region85: #{decoder_layer.12} parent=83 // pred_check
            %p484 = pneg %p481
          $region86: #{decoder_layer.12} parent=83 // pred_check_branch
            %486 = sbr.rel (%p484) target = $region88
          $region87: #{decoder_layer.12} parent=83 // pred_region
            // Predicated region
            $region89: #{decoder_layer.12} parent=87 // pred_check
              _
            $region90: #{decoder_layer.12} parent=87 // pred_check_branch
              %488 = sbr.rel target = $region92
            $region91: #{decoder_layer.12} parent=87 // pred_region
              // Predicated region
              $region111: #{decoder_layer.12} parent=91 // pred_check
                _
              $region112: #{decoder_layer.12} parent=91 // pred_check_branch
                %539 = sbr.rel (0) target = $region114
              $region113: #{decoder_layer.12} parent=91 // pred_region
                %s541 = sshrl.u32 %s479, 1
                // While loop
                $region115: #{decoder_layer.12} parent=113 // loop_pre_header
                  _
                $region116: #{decoder_layer.12} parent=113 // loop_header
                  %s543 = sphi 0, %s545
                  %p544 = scmp.ge.s32.totalorder %s543, %s541
                  %s548 = sphi 0, %s557
                  %s549 = sphi %s357, %s560
                  %s550 = sphi %s483, %s561
                $region117: #{decoder_layer.12} parent=113 // loop_header_branch
                  %547 = sbr.rel (%p544) target = $region121
                $region118: #{decoder_layer.12} parent=113 // loop_body
                  %v551 = vld [vmem:[%s549] sm:$0xf]
                  %552 = vst [vmem:[%s550] sm:$0xf] %v551
                  %v553 = vld [vmem:[%s549 + $0x4] sm:$0xf]
                  %554 = vst [vmem:[%s550 + $0x4] sm:$0xf] %v553
                  %s555 = sadd.s32 1, %s548
                  %p556 = scmp.ge.s32.totalorder %s555, %s541
                  %s557 = scalar_select %p556, 0, %s555
                  %s558 = smul.u32 %s557, 8
                  %s559 = smul.u32 %s557, 8
                  %s560 = scalar_lea.vmem %s357, %s558 [#allocation3]
                  %s561 = scalar_lea.vmem %s483, %s559
                $region119: #{decoder_layer.12} parent=113 // loop_footer
                  %s545 = sadd.s32 %s543, 1
                $region120: #{decoder_layer.12} parent=113 // loop_footer_branch
                  %542 = sbr.rel target = $region116
                $region121: #{decoder_layer.12} parent=113 // loop_exit
                  _
                %s562 = sshrl.u32 %s479, 1
                %s563 = sand.u32 %s479, 1
                %s564 = smul.u32 %s562, 2
                %s565 = smul.u32 4, %s564
                %s566 = scalar_lea.vmem %s357, %s565 [#allocation3]
                %s567 = smul.u32 4, %s564
                %s568 = scalar_lea.vmem %s483, %s567
                // While loop
                $region122: #{decoder_layer.12} parent=113 // loop_pre_header
                  _
                $region123: #{decoder_layer.12} parent=113 // loop_header
                  %s570 = sphi 0, %s572
                  %p571 = scmp.ge.s32.totalorder %s570, %s563
                  %s575 = sphi 0, %s582
                  %s576 = sphi %s566, %s585
                  %s577 = sphi %s568, %s586
                $region124: #{decoder_layer.12} parent=113 // loop_header_branch
                  %574 = sbr.rel (%p571) target = $region128
                $region125: #{decoder_layer.12} parent=113 // loop_body
                  %v578 = vld [vmem:[%s576] sm:$0xf]
                  %579 = vst [vmem:[%s577] sm:$0xf] %v578
                  %s580 = sadd.s32 1, %s575
                  %p581 = scmp.ge.s32.totalorder %s580, %s563
                  %s582 = scalar_select %p581, 0, %s580
                  %s583 = smul.u32 %s582, 4
                  %s584 = smul.u32 %s582, 4
                  %s585 = scalar_lea.vmem %s566, %s583 [#allocation3]
                  %s586 = scalar_lea.vmem %s568, %s584
                $region126: #{decoder_layer.12} parent=113 // loop_footer
                  %s572 = sadd.s32 %s570, 1
                $region127: #{decoder_layer.12} parent=113 // loop_footer_branch
                  %569 = sbr.rel target = $region123
                $region128: #{decoder_layer.12} parent=113 // loop_exit
                  _
              $region114: #{decoder_layer.12} parent=91 // pred_fallthru
                _
            $region92: #{decoder_layer.12} parent=87 // pred_fallthru
              _
            // Predicated region
            $region93: #{decoder_layer.12} parent=87 // pred_check
              _
            $region94: #{decoder_layer.12} parent=87 // pred_check_branch
              %490 = sbr.rel (0) target = $region96
            $region95: #{decoder_layer.12} parent=87 // pred_region
              %s492 = sshrl.u32 %s479, 1
              // While loop
              $region97: #{decoder_layer.12} parent=95 // loop_pre_header
                _
              $region98: #{decoder_layer.12} parent=95 // loop_header
                %s494 = sphi 0, %s496
                %p495 = scmp.ge.s32.totalorder %s494, %s492
                %s499 = sphi 0, %s508
                %s500 = sphi %s357, %s511
                %s501 = sphi %s483, %s512
              $region99: #{decoder_layer.12} parent=95 // loop_header_branch
                %498 = sbr.rel (%p495) target = $region103
              $region100: #{decoder_layer.12} parent=95 // loop_body
                %v502 = vld [vmem:[%s500] sm:$0xf]
                %503 = vst [vmem:[%s501] sm:$0xf] %v502
                %v504 = vld [vmem:[%s500 + $0x4] sm:$0xf]
                %505 = vst [vmem:[%s501 + $0x4] sm:$0xf] %v504
                %s506 = sadd.s32 1, %s499
                %p507 = scmp.ge.s32.totalorder %s506, %s492
                %s508 = scalar_select %p507, 0, %s506
                %s509 = smul.u32 %s508, 8
                %s510 = smul.u32 %s508, 8
                %s511 = scalar_lea.vmem %s357, %s509 [#allocation3]
                %s512 = scalar_lea.vmem %s483, %s510
              $region101: #{decoder_layer.12} parent=95 // loop_footer
                %s496 = sadd.s32 %s494, 1
              $region102: #{decoder_layer.12} parent=95 // loop_footer_branch
                %493 = sbr.rel target = $region98
              $region103: #{decoder_layer.12} parent=95 // loop_exit
                _
              %s513 = sshrl.u32 %s479, 1
              %s514 = sand.u32 %s479, 1
              %s515 = smul.u32 %s513, 2
              %s516 = smul.u32 4, %s515
              %s517 = scalar_lea.vmem %s357, %s516 [#allocation3]
              %s518 = smul.u32 4, %s515
              %s519 = scalar_lea.vmem %s483, %s518
              // While loop
              $region104: #{decoder_layer.12} parent=95 // loop_pre_header
                _
              $region105: #{decoder_layer.12} parent=95 // loop_header
                %s521 = sphi 0, %s523
                %p522 = scmp.ge.s32.totalorder %s521, %s514
                %s526 = sphi 0, %s533
                %s527 = sphi %s517, %s536
                %s528 = sphi %s519, %s537
              $region106: #{decoder_layer.12} parent=95 // loop_header_branch
                %525 = sbr.rel (%p522) target = $region110
              $region107: #{decoder_layer.12} parent=95 // loop_body
                %v529 = vld [vmem:[%s527] sm:$0xf]
                %530 = vst [vmem:[%s528] sm:$0xf] %v529
                %s531 = sadd.s32 1, %s526
                %p532 = scmp.ge.s32.totalorder %s531, %s514
                %s533 = scalar_select %p532, 0, %s531
                %s534 = smul.u32 %s533, 4
                %s535 = smul.u32 %s533, 4
                %s536 = scalar_lea.vmem %s517, %s534 [#allocation3]
                %s537 = scalar_lea.vmem %s519, %s535
              $region108: #{decoder_layer.12} parent=95 // loop_footer
                %s523 = sadd.s32 %s521, 1
              $region109: #{decoder_layer.12} parent=95 // loop_footer_branch
                %520 = sbr.rel target = $region105
              $region110: #{decoder_layer.12} parent=95 // loop_exit
                _
            $region96: #{decoder_layer.12} parent=87 // pred_fallthru
              _
          $region88: #{decoder_layer.12} parent=83 // pred_fallthru
            _
          %587 = vnop
        $region84: #{decoder_layer.12} parent=31 // pred_fallthru
          _
      $region32: #{decoder_layer.12} parent=5 // pred_fallthru
        _
      %p588 = scmp.le.s32.totalorder 2, %s11
      // Predicated region
      $region129: #{decoder_layer.12} parent=5 // pred_check
        %p589 = pneg %p588
      $region130: #{decoder_layer.12} parent=5 // pred_check_branch
        %591 = sbr.rel (%p589) target = $region132
      $region131: #{decoder_layer.12} parent=5 // pred_region
        %s592 = ssub.s32 %s11, 2
        // Predicated region
        $region133: #{decoder_layer.12} parent=131 // pred_check
          %p593 = pneg %p108
        $region134: #{decoder_layer.12} parent=131 // pred_check_branch
          %595 = sbr.rel (%p593) target = $region136
        $region135: #{decoder_layer.12} parent=131 // pred_region
          %s596 = sand.u32 %s93, 1
          %s597 = sand.u32 %s93, 1
          %s598 = smul.addr %s597, 8
          %s599 = scalar_lea.vmem [#allocation2], %s598
        $region136: #{decoder_layer.12} parent=131 // pred_fallthru
          _
        // Predicated region
        $region137: #{decoder_layer.12} parent=131 // pred_check
          %p600 = pneg %p134
        $region138: #{decoder_layer.12} parent=131 // pred_check_branch
          %602 = sbr.rel (%p600) target = $region140
        $region139: #{decoder_layer.12} parent=131 // pred_region
          %s603 = sand.u32 %s119, 1
          %s604 = sand.u32 %s119, 1
          %s605 = smul.addr %s604, 8
          %s606 = scalar_lea.vmem [#allocation3], %s605
        $region140: #{decoder_layer.12} parent=131 // pred_fallthru
          _
      $region132: #{decoder_layer.12} parent=5 // pred_fallthru
        _
    $region6: #{decoder_layer.12} parent=1 // loop_footer
      %s15 = sadd.s32 1, %s11
    $region7: #{decoder_layer.12} parent=1 // loop_footer_branch
      %10 = sbr.rel target = $region3
    $region8: #{decoder_layer.12} parent=1 // loop_exit
      _

// kernel: decoder_layer.10
$region0: #{decoder_layer.10}
  #allocation0 [shape = 'u32[]', space=smem, size = 0x4, offset = 0x4, fixed_abs, tag = 'smem constant byte address 0x4 - core index']
  #allocation1 [shape = 'u32[144,128]{1,0:T(1,128)}', space=vmem, size = 0x12000, scoped, tag = 'internal scratch']
  %s0 = inlined_call_operand.vmem [shape: bf16[16,32], index: 0, kind: input, shape index: {}]
  %s1 = inlined_call_operand.vmem [shape: f32[16,32], index: 1, kind: input, shape index: {}]
  %s2 = inlined_call_operand.vmem [shape: bf16[32,32], index: 2, kind: input, shape index: {}]
  %s3 = inlined_call_operand.vmem [shape: f32[1,32], index: 3, kind: input, shape index: {}]
  %s4 = inlined_call_operand.vmem [shape: f32[1,32], index: 4, kind: input, shape index: {}]
  %s5 = inlined_call_operand.vmem [shape: f32[1,32], index: 5, kind: input, shape index: {}]
  %s6 = inlined_call_operand.vmem [shape: f32[16,32], index: 6, kind: output, shape index: {0}]
  %s7 = inlined_call_operand.vmem [shape: bf16[16,32], index: 7, kind: output, shape index: {1}]
  %8 = xla_tuple %s6, %s7
  %s9 = sld [smem:[#allocation0]]
  $region65: #{decoder_layer.10} parent=0
    _
  %s11 = ssub.s32 1, %s9
  %s12 = scalar_select 0, %s11, %s9
  loop: start=0, step=1, limit=4
  $region2: #{decoder_layer.10} parent=0 // loop_pre_header
    _
  $region3: #{decoder_layer.10} parent=0 // loop_header
    %s14 = sphi 0, %s18
    %p15 = scmp.ge.s32.totalorder %s14, 4
    %s24 = sphi 0, %s26
    %s27 = sphi 0, %s24
    %s28 = sphi 0, %s27
    %s44 = sphi 0, %s28
    %s50 = sphi 0, %s52
    %s53 = sphi 0, %s50
    %s54 = sphi 0, %s53
    %s70 = sphi 0, %s54
    %s74 = sphi 0, %s74
    %s76 = sphi 0, %s74
    %s77 = sphi 0, %s76
    %s91 = sphi 0, %s77
    %s95 = sphi 0, %s95
    %s97 = sphi 0, %s95
    %s98 = sphi 0, %s97
    %s112 = sphi 0, %s98
    %s116 = sphi 0, %s116
    %s118 = sphi 0, %s116
    %s119 = sphi 0, %s118
    %s133 = sphi 0, %s119
    %s137 = sphi 0, %s137
    %s139 = sphi 0, %s137
    %s140 = sphi 0, %s139
    %s154 = sphi 0, %s140
    %s160 = sphi 0, %s162
    %s163 = sphi 0, %s160
    %s164 = sphi 0, %s163
    %s180 = sphi 0, %s164
    %s186 = sphi 0, %s188
    %s189 = sphi 0, %s186
    %s190 = sphi 0, %s189
    %s206 = sphi 0, %s190
  $region4: #{decoder_layer.10} parent=0 // loop_header_branch
    %17 = sbr.rel (%p15) target = $region8
  $region5: #{decoder_layer.10} parent=0 // loop_body
    %s19 = ssub.s32 %s14, 1
    %s20 = ssub.s32 %s14, 2
    %s21 = sadd.s32 %s14, 1
    %s22 = ssub.s32 %s14, %s21
    %p23 = scmp.eq.s32.totalorder %s22, 0
    %s25 = sadd.s32 %s24, 1
    %s26 = scalar_select %p23, %s24, %s25
    %p29 = pneg %p23
    %p30 = scmp.eq.s32.totalorder %s14, 1
    %p31 = por %p29, %p30
    %p32 = scmp.ne.s32.totalorder %s24, %s27
    %p33 = scmp.eq.s32.totalorder %s14, 0
    %p34 = por %p32, %p33
    %p35 = scmp.ne.s32.totalorder %s24, %s27
    %p36 = scmp.eq.s32.totalorder %s19, 1
    %p37 = por %p35, %p36
    %p38 = scmp.ne.s32.totalorder %s27, %s28
    %p39 = scmp.eq.s32.totalorder %s19, 0
    %p40 = por %p38, %p39
    %p41 = scmp.ne.s32.totalorder %s27, %s28
    %p42 = scmp.eq.s32.totalorder %s20, 1
    %p43 = por %p41, %p42
    %p45 = scmp.ne.s32.totalorder %s28, %s44
    %p46 = scmp.eq.s32.totalorder %s20, 0
    %p47 = por %p45, %p46
    %s48 = ssub.s32 %s14, %s21
    %p49 = scmp.eq.s32.totalorder %s48, 0
    %s51 = sadd.s32 %s50, 1
    %s52 = scalar_select %p49, %s50, %s51
    %p55 = pneg %p49
    %p56 = scmp.eq.s32.totalorder %s14, 1
    %p57 = por %p55, %p56
    %p58 = scmp.ne.s32.totalorder %s50, %s53
    %p59 = scmp.eq.s32.totalorder %s14, 0
    %p60 = por %p58, %p59
    %p61 = scmp.ne.s32.totalorder %s50, %s53
    %p62 = scmp.eq.s32.totalorder %s19, 1
    %p63 = por %p61, %p62
    %p64 = scmp.ne.s32.totalorder %s53, %s54
    %p65 = scmp.eq.s32.totalorder %s19, 0
    %p66 = por %p64, %p65
    %p67 = scmp.ne.s32.totalorder %s53, %s54
    %p68 = scmp.eq.s32.totalorder %s20, 1
    %p69 = por %p67, %p68
    %p71 = scmp.ne.s32.totalorder %s54, %s70
    %p72 = scmp.eq.s32.totalorder %s20, 0
    %p73 = por %p71, %p72
    %s75 = sadd.s32 %s74, 1
    %p78 = scmp.eq.s32.totalorder %s14, 1
    %p79 = scmp.ne.s32.totalorder %s74, %s76
    %p80 = scmp.eq.s32.totalorder %s14, 0
    %p81 = por %p79, %p80
    %p82 = scmp.ne.s32.totalorder %s74, %s76
    %p83 = scmp.eq.s32.totalorder %s19, 1
    %p84 = por %p82, %p83
    %p85 = scmp.ne.s32.totalorder %s76, %s77
    %p86 = scmp.eq.s32.totalorder %s19, 0
    %p87 = por %p85, %p86
    %p88 = scmp.ne.s32.totalorder %s76, %s77
    %p89 = scmp.eq.s32.totalorder %s20, 1
    %p90 = por %p88, %p89
    %p92 = scmp.ne.s32.totalorder %s77, %s91
    %p93 = scmp.eq.s32.totalorder %s20, 0
    %p94 = por %p92, %p93
    %s96 = sadd.s32 %s95, 1
    %p99 = scmp.eq.s32.totalorder %s14, 1
    %p100 = scmp.ne.s32.totalorder %s95, %s97
    %p101 = scmp.eq.s32.totalorder %s14, 0
    %p102 = por %p100, %p101
    %p103 = scmp.ne.s32.totalorder %s95, %s97
    %p104 = scmp.eq.s32.totalorder %s19, 1
    %p105 = por %p103, %p104
    %p106 = scmp.ne.s32.totalorder %s97, %s98
    %p107 = scmp.eq.s32.totalorder %s19, 0
    %p108 = por %p106, %p107
    %p109 = scmp.ne.s32.totalorder %s97, %s98
    %p110 = scmp.eq.s32.totalorder %s20, 1
    %p111 = por %p109, %p110
    %p113 = scmp.ne.s32.totalorder %s98, %s112
    %p114 = scmp.eq.s32.totalorder %s20, 0
    %p115 = por %p113, %p114
    %s117 = sadd.s32 %s116, 1
    %p120 = scmp.eq.s32.totalorder %s14, 1
    %p121 = scmp.ne.s32.totalorder %s116, %s118
    %p122 = scmp.eq.s32.totalorder %s14, 0
    %p123 = por %p121, %p122
    %p124 = scmp.ne.s32.totalorder %s116, %s118
    %p125 = scmp.eq.s32.totalorder %s19, 1
    %p126 = por %p124, %p125
    %p127 = scmp.ne.s32.totalorder %s118, %s119
    %p128 = scmp.eq.s32.totalorder %s19, 0
    %p129 = por %p127, %p128
    %p130 = scmp.ne.s32.totalorder %s118, %s119
    %p131 = scmp.eq.s32.totalorder %s20, 1
    %p132 = por %p130, %p131
    %p134 = scmp.ne.s32.totalorder %s119, %s133
    %p135 = scmp.eq.s32.totalorder %s20, 0
    %p136 = por %p134, %p135
    %s138 = sadd.s32 %s137, 1
    %p141 = scmp.eq.s32.totalorder %s14, 1
    %p142 = scmp.ne.s32.totalorder %s137, %s139
    %p143 = scmp.eq.s32.totalorder %s14, 0
    %p144 = por %p142, %p143
    %p145 = scmp.ne.s32.totalorder %s137, %s139
    %p146 = scmp.eq.s32.totalorder %s19, 1
    %p147 = por %p145, %p146
    %p148 = scmp.ne.s32.totalorder %s139, %s140
    %p149 = scmp.eq.s32.totalorder %s19, 0
    %p150 = por %p148, %p149
    %p151 = scmp.ne.s32.totalorder %s139, %s140
    %p152 = scmp.eq.s32.totalorder %s20, 1
    %p153 = por %p151, %p152
    %p155 = scmp.ne.s32.totalorder %s140, %s154
    %p156 = scmp.eq.s32.totalorder %s20, 0
    %p157 = por %p155, %p156
    %s158 = ssub.s32 %s14, %s21
    %p159 = scmp.eq.s32.totalorder %s158, 0
    %s161 = sadd.s32 %s160, 1
    %s162 = scalar_select %p159, %s160, %s161
    %p165 = pneg %p159
    %p166 = scmp.eq.s32.totalorder %s14, 1
    %p167 = por %p165, %p166
    %p168 = scmp.ne.s32.totalorder %s160, %s163
    %p169 = scmp.eq.s32.totalorder %s14, 0
    %p170 = por %p168, %p169
    %p171 = scmp.ne.s32.totalorder %s160, %s163
    %p172 = scmp.eq.s32.totalorder %s19, 1
    %p173 = por %p171, %p172
    %p174 = scmp.ne.s32.totalorder %s163, %s164
    %p175 = scmp.eq.s32.totalorder %s19, 0
    %p176 = por %p174, %p175
    %p177 = scmp.ne.s32.totalorder %s163, %s164
    %p178 = scmp.eq.s32.totalorder %s20, 1
    %p179 = por %p177, %p178
    %p181 = scmp.ne.s32.totalorder %s164, %s180
    %p182 = scmp.eq.s32.totalorder %s20, 0
    %p183 = por %p181, %p182
    %s184 = ssub.s32 %s14, %s21
    %p185 = scmp.eq.s32.totalorder %s184, 0
    %s187 = sadd.s32 %s186, 1
    %s188 = scalar_select %p185, %s186, %s187
    %p191 = pneg %p185
    %p192 = scmp.eq.s32.totalorder %s14, 1
    %p193 = por %p191, %p192
    %p194 = scmp.ne.s32.totalorder %s186, %s189
    %p195 = scmp.eq.s32.totalorder %s14, 0
    %p196 = por %p194, %p195
    %p197 = scmp.ne.s32.totalorder %s186, %s189
    %p198 = scmp.eq.s32.totalorder %s19, 1
    %p199 = por %p197, %p198
    %p200 = scmp.ne.s32.totalorder %s189, %s190
    %p201 = scmp.eq.s32.totalorder %s19, 0
    %p202 = por %p200, %p201
    %p203 = scmp.ne.s32.totalorder %s189, %s190
    %p204 = scmp.eq.s32.totalorder %s20, 1
    %p205 = por %p203, %p204
    %p207 = scmp.ne.s32.totalorder %s190, %s206
    %p208 = scmp.eq.s32.totalorder %s20, 0
    %p209 = por %p207, %p208
    %p210 = scmp.le.s32.totalorder 1, %s14
    %p211 = scmp.lt.s32.totalorder %s14, 3
    %p212 = pnand %p210, %p211
    %p213 = pneg %p212
    // Predicated region
    $region9: #{decoder_layer.10} parent=5 // pred_check
      _
    $region10: #{decoder_layer.10} parent=5 // pred_check_branch
      %215 = sbr.rel (%p212) target = $region12
    $region11: #{decoder_layer.10} parent=5 // pred_region
      %s216 = ssub.s32 %s14, 1
      // Predicated region
      $region13: #{decoder_layer.10} parent=11 // pred_check
        %p217 = pneg %p87
      $region14: #{decoder_layer.10} parent=11 // pred_check_branch
        %219 = sbr.rel (%p217) target = $region16
      $region15: #{decoder_layer.10} parent=11 // pred_region
        _
      $region16: #{decoder_layer.10} parent=11 // pred_fallthru
        _
      // Predicated region
      $region17: #{decoder_layer.10} parent=11 // pred_check
        %p220 = pneg %p108
      $region18: #{decoder_layer.10} parent=11 // pred_check_branch
        %222 = sbr.rel (%p220) target = $region20
      $region19: #{decoder_layer.10} parent=11 // pred_region
        _
      $region20: #{decoder_layer.10} parent=11 // pred_fallthru
        _
      // Predicated region
      $region21: #{decoder_layer.10} parent=11 // pred_check
        %p223 = pneg %p129
      $region22: #{decoder_layer.10} parent=11 // pred_check_branch
        %225 = sbr.rel (%p223) target = $region24
      $region23: #{decoder_layer.10} parent=11 // pred_region
        _
      $region24: #{decoder_layer.10} parent=11 // pred_fallthru
        _
      // Predicated region
      $region25: #{decoder_layer.10} parent=11 // pred_check
        %p226 = pneg %p150
      $region26: #{decoder_layer.10} parent=11 // pred_check_branch
        %228 = sbr.rel (%p226) target = $region28
      $region27: #{decoder_layer.10} parent=11 // pred_region
        _
      $region28: #{decoder_layer.10} parent=11 // pred_fallthru
        _
    $region12: #{decoder_layer.10} parent=5 // pred_fallthru
      _
    %p229 = scmp.lt.s32.totalorder %s14, 2
    // Predicated region
    $region29: #{decoder_layer.10} parent=5 // pred_check
      %p230 = pneg %p229
    $region30: #{decoder_layer.10} parent=5 // pred_check_branch
      %232 = sbr.rel (%p230) target = $region32
    $region31: #{decoder_layer.10} parent=5 // pred_region
      // Predicated region
      $region33: #{decoder_layer.10} parent=31 // pred_check
        %p233 = pneg %p34
      $region34: #{decoder_layer.10} parent=31 // pred_check_branch
        %235 = sbr.rel (%p233) target = $region36
      $region35: #{decoder_layer.10} parent=31 // pred_region
        %p236 = scmp.lt.s32.totalorder %s14, 1
        %s237 = scalar_select %p236, %s14, 1
        %s238 = smul.addr %s237, 4
        %s239 = scalar_lea.vmem %s0, %s238
      $region36: #{decoder_layer.10} parent=31 // pred_fallthru
        _
      // Predicated region
      $region37: #{decoder_layer.10} parent=31 // pred_check
        %p240 = pneg %p60
      $region38: #{decoder_layer.10} parent=31 // pred_check_branch
        %242 = sbr.rel (%p240) target = $region40
      $region39: #{decoder_layer.10} parent=31 // pred_region
        %p243 = scmp.lt.s32.totalorder %s14, 1
        %s244 = scalar_select %p243, %s14, 1
        %s245 = smul.addr %s244, 8
        %s246 = scalar_lea.vmem %s1, %s245
      $region40: #{decoder_layer.10} parent=31 // pred_fallthru
        _
    $region32: #{decoder_layer.10} parent=5 // pred_fallthru
      _
    %p247 = scmp.le.s32.totalorder 1, %s14
    %p248 = scmp.lt.s32.totalorder %s14, 3
    %p249 = pnand %p247, %p248
    %p250 = pneg %p249
    // Predicated region
    $region41: #{decoder_layer.10} parent=5 // pred_check
      _
    $region42: #{decoder_layer.10} parent=5 // pred_check_branch
      %252 = sbr.rel (%p249) target = $region44
    $region43: #{decoder_layer.10} parent=5 // pred_region
      %s253 = ssub.s32 %s14, 1
      %p254 = scmp.lt.s32.totalorder %s19, 1
      %s255 = scalar_select %p254, %s19, 1
      %s256 = smul.addr %s255, 4
      %s257 = scalar_lea.vmem %s0, %s256
      %p258 = pneg %p40
      %p259 = pneg %p37
      %p260 = scmp.lt.s32.totalorder %s19, 1
      %s261 = scalar_select %p260, %s19, 1
      %s262 = smul.addr %s261, 8
      %s263 = scalar_lea.vmem %s1, %s262
      %p264 = pneg %p66
      %p265 = pneg %p63
      %p266 = pneg %p87
      %p267 = pneg %p84
      %p268 = pneg %p108
      %p269 = pneg %p105
      %p270 = pneg %p129
      %p271 = pneg %p126
      %p272 = pneg %p150
      %p273 = pneg %p147
      %p274 = pneg %p176
      %p275 = pneg %p173
      %p276 = scmp.lt.s32.totalorder %s19, 1
      %s277 = scalar_select %p276, %s19, 1
      %s278 = smul.addr %s277, 8
      %s279 = scalar_lea.vmem %s6, %s278
      %p280 = pneg %p202
      %p281 = pneg %p199
      %p282 = scmp.lt.s32.totalorder %s19, 1
      %s283 = scalar_select %p282, %s19, 1
      %s284 = smul.addr %s283, 4
      %s285 = scalar_lea.vmem %s7, %s284
      %p286 = scmp.lt.s32.totalorder %s19, 1
      %s287 = scalar_select %p286, %s19, 1
      %s288 = smul.addr %s287, 4
      %s289 = scalar_lea.vmem %s0, %s288
      %p290 = scmp.lt.s32.totalorder %s19, 1
      %s291 = scalar_select %p290, %s19, 1
      %s292 = smul.addr %s291, 8
      %s293 = scalar_lea.vmem %s1, %s292
      %p294 = scmp.lt.s32.totalorder %s19, 1
      %s295 = scalar_select %p294, %s19, 1
      %s296 = smul.addr %s295, 8
      %s297 = scalar_lea.vmem %s6, %s296
      %p298 = scmp.lt.s32.totalorder %s19, 1
      %s299 = scalar_select %p298, %s19, 1
      %s300 = smul.addr %s299, 4
      %s301 = scalar_lea.vmem %s7, %s300
      %v303 = vld [vmem:[%s289] sm:$0xf]
      %v304 = vld [vmem:[%s2] sm:$0xf]
      %v305 = vld [vmem:[%s2 + $0x4] sm:$0xf]
      %v306 = vld [vmem:[%s2 + $0x8] sm:$0xf]
      %v307 = vld [vmem:[%s2 + $0xc] sm:$0xf]
      %v308 = vld [vmem:[%s3] sm:$0x1]
      %v310 = vlaneseq
      %v311 = vshrl.u32 %v310, 7
      %v312 = vsub.s32 0, %v311
      %v313 = vrot.slane %v308, %v312
      %v319 = vunpack.c.l.b16 %v304
      %v320 = vunpack.c.l.b16 %v305
      %v321 = vunpack.c.l.b16 %v306
      %v322 = vunpack.c.l.b16 %v307
      %v323 = vpack.c.b16 %v320, %v319
      %v324 = vpack.c.b16 %v322, %v321
      %vm325 = vcmask 261120
      %v327 = vsel %vm325, %v303, 0
      %v330 = vsel %vm325, %v323, 0
      %v333 = vsel %vm325, %v324, 0
      %335 = vmatprep.subr.bf16.mxu0 0
      %336 = vmatpush1.bf16.xpose.msra.mxu0 %v330
      %337 = vmatprep.subr.bf16.mxu0 0
      %338 = vmatpush1.bf16.xpose.msra.mxu0 %v333
      %339 = vmatprep.subr.bf16.mxu0 0
      %340 = vmatpush1.bf16.xpose.msra.mxu0 0
      %341 = vmatprep.subr.bf16.mxu0 0
      %342 = vmatpush1.bf16.xpose.msra.mxu0 0
      %343 = vmatprep.subr.bf16.mxu0 0
      %344 = vmatpush1.bf16.xpose.msra.mxu0 0
      %345 = vmatprep.subr.bf16.mxu0 0
      %346 = vmatpush1.bf16.xpose.msra.mxu0 0
      %347 = vmatprep.subr.bf16.mxu0 0
      %348 = vmatpush1.bf16.xpose.msra.mxu0 0
      %349 = vmatprep.subr.bf16.mxu0 0
      %350 = vmatpush1.bf16.xpose.msra.mxu0 0
      %351 = vmatprep.subr.bf16.mxu0 0
      %352 = vmatpush1.bf16.xpose.msra.mxu0 0
      %353 = vmatprep.subr.bf16.mxu0 0
      %354 = vmatpush1.bf16.xpose.msra.mxu0 0
      %355 = vmatprep.subr.bf16.mxu0 0
      %356 = vmatpush1.bf16.xpose.msra.mxu0 0
      %357 = vmatprep.subr.bf16.mxu0 0
      %358 = vmatpush1.bf16.xpose.msra.mxu0 0
      %359 = vmatprep.subr.bf16.mxu0 0
      %360 = vmatpush1.bf16.xpose.msra.mxu0 0
      %361 = vmatprep.subr.bf16.mxu0 0
      %362 = vmatpush1.bf16.xpose.msra.mxu0 0
      %363 = vmatprep.subr.bf16.mxu0 0
      %364 = vmatpush1.bf16.xpose.msra.mxu0 0
      %365 = vmatprep.subr.bf16.mxu0 0
      %366 = vmatpush1.bf16.xpose.msra.mxu0 0
      %367 = vmatprep.mubr.bf16.mxu0 0
      %368 = vmatmul.mubr.bf16.gmra.mrb[0].mxu0 %v327
      %v369 = vpop.f32.mrb[0].mxu0
      %v370 = vadd.f32 %v313, %v369
      %v371 = vpop.f32.mrb[0].mxu0
      %v372 = vpop.f32.mrb[0].mxu0
      %v373 = vpop.f32.mrb[0].mxu0
      %374 = vdwg.mxu0
      %v375 = vld [vmem:[%s293] sm:$0xff]
      %v376 = vadd.f32 %v370, %v375
      %v377 = vsel %vm325, %v376, 0.0
      %378 = vadd.xlane.f32.xlu0 %v377
      %v379 = vpop.xlane.xlu0 %378
      %v380 = vrcp.pop 32.0
      %v381 = vmul.f32 %v379, %v380
      %v382 = vsub.f32 %v376, %v381
      %v383 = vmul.f32 %v382, %v382
      %v384 = vsel %vm325, %v383, 0.0
      %385 = vadd.xlane.f32.xlu0 %v384
      %v386 = vpop.xlane.xlu0 %385
      %v387 = vmul.f32 %v386, %v380
      %v388 = vadd.f32 %v387, 1e-05
      %v389 = vrsqrt.pop %v388
      %v390 = vmul.f32 %v382, %v389
      %v391 = vld [vmem:[%s4] sm:$0x1]
      %v393 = vlaneseq
      %v394 = vshrl.u32 %v393, 7
      %v395 = vsub.s32 0, %v394
      %v396 = vrot.slane %v391, %v395
      %v398 = vmul.f32 %v390, %v396
      %v399 = vld [vmem:[%s5] sm:$0x1]
      %v401 = vlaneseq
      %v402 = vshrl.u32 %v401, 7
      %v403 = vsub.s32 0, %v402
      %v404 = vrot.slane %v399, %v403
      %v406 = vadd.f32 %v398, %v404
      %407 = vst.msk [vmem:[%s297] sm:$0xff] %vm325, %v406
      %v408 = vpack.c.bf16 %v406, %v406
      %vm409 = vcmask 257024
      %410 = vst.msk [vmem:[%s301] sm:$0xf] %vm409, %v408
      %p411 = scmp.lt.s32.totalorder %s19, 1
      %s412 = scalar_select %p411, %s19, 1
      %s413 = smul.addr %s412, 8
      %s414 = scalar_lea.vmem %s6, %s413
      %p415 = scmp.lt.s32.totalorder %s19, 1
      %s416 = scalar_select %p415, %s19, 1
      %s417 = smul.addr %s416, 4
      %s418 = scalar_lea.vmem %s7, %s417
      // Predicated region
      $region45: #{decoder_layer.10} parent=43 // pred_check
        %p419 = pneg %p173
      $region46: #{decoder_layer.10} parent=43 // pred_check_branch
        %421 = sbr.rel (%p419) target = $region48
      $region47: #{decoder_layer.10} parent=43 // pred_region
        _
      $region48: #{decoder_layer.10} parent=43 // pred_fallthru
        _
      // Predicated region
      $region49: #{decoder_layer.10} parent=43 // pred_check
        %p422 = pneg %p199
      $region50: #{decoder_layer.10} parent=43 // pred_check_branch
        %424 = sbr.rel (%p422) target = $region52
      $region51: #{decoder_layer.10} parent=43 // pred_region
        _
      $region52: #{decoder_layer.10} parent=43 // pred_fallthru
        _
    $region44: #{decoder_layer.10} parent=5 // pred_fallthru
      _
    %p425 = scmp.le.s32.totalorder 2, %s14
    // Predicated region
    $region53: #{decoder_layer.10} parent=5 // pred_check
      %p426 = pneg %p425
    $region54: #{decoder_layer.10} parent=5 // pred_check_branch
      %428 = sbr.rel (%p426) target = $region56
    $region55: #{decoder_layer.10} parent=5 // pred_region
      %s429 = ssub.s32 %s14, 2
      // Predicated region
      $region57: #{decoder_layer.10} parent=55 // pred_check
        %p430 = pneg %p179
      $region58: #{decoder_layer.10} parent=55 // pred_check_branch
        %432 = sbr.rel (%p430) target = $region60
      $region59: #{decoder_layer.10} parent=55 // pred_region
        %p433 = scmp.lt.s32.totalorder %s20, 1
        %s434 = scalar_select %p433, %s20, 1
        %s435 = smul.addr %s434, 8
        %s436 = scalar_lea.vmem %s6, %s435
      $region60: #{decoder_layer.10} parent=55 // pred_fallthru
        _
      // Predicated region
      $region61: #{decoder_layer.10} parent=55 // pred_check
        %p437 = pneg %p205
      $region62: #{decoder_layer.10} parent=55 // pred_check_branch
        %439 = sbr.rel (%p437) target = $region64
      $region63: #{decoder_layer.10} parent=55 // pred_region
        %p440 = scmp.lt.s32.totalorder %s20, 1
        %s441 = scalar_select %p440, %s20, 1
        %s442 = smul.addr %s441, 4
        %s443 = scalar_lea.vmem %s7, %s442
      $region64: #{decoder_layer.10} parent=55 // pred_fallthru
        _
    $region56: #{decoder_layer.10} parent=5 // pred_fallthru
      _
  $region6: #{decoder_layer.10} parent=0 // loop_footer
    %s18 = sadd.s32 1, %s14
  $region7: #{decoder_layer.10} parent=0 // loop_footer_branch
    %13 = sbr.rel target = $region3
  $region8: #{decoder_layer.10} parent=0 // loop_exit
    _

// kernel: decoder_layer.9
$region0: #{decoder_layer.9}
  #allocation0 [shape = 'u32[]', space=smem, size = 0x4, offset = 0x4, fixed_abs, tag = 'smem constant byte address 0x4 - core index']
  #allocation1 [shape = 'u32[144,128]{1,0:T(1,128)}', space=vmem, size = 0x12000, scoped, tag = 'internal scratch']
  #allocation2 [shape = 'f32[4,8,1]{2,1,0:T(8,128)}', space=vmem, size = 0x4000, scoped, tag = 'scratch operand']
  #allocation3 [shape = 'f32[4,8,1]{2,1,0:T(8,128)}', space=vmem, size = 0x4000, scoped, tag = 'scratch operand']
  #allocation4 [shape = 'f32[4,8,8]{2,1,0:T(8,128)}', space=vmem, size = 0x4000, scoped, tag = 'scratch operand']
  %s0 = inlined_call_operand.vmem [shape: bf16[2,4,8,8], index: 0, kind: input, shape index: {}]
  %s1 = inlined_call_operand.vmem [shape: bf16[2,4,8,8], index: 1, kind: input, shape index: {}]
  %s2 = inlined_call_operand.vmem [shape: bf16[2,4,8,8], index: 2, kind: input, shape index: {}]
  %s3 = inlined_call_operand.vmem [shape: f32[8,8], index: 3, kind: input, shape index: {}]
  %s4 = inlined_call_operand.vmem [shape: f32[2,1,8], index: 4, kind: input, shape index: {}]
  %s5 = inlined_call_operand.vmem [shape: bf16[2,4,8,8], index: 5, kind: output, shape index: {}]
  %s6 = sld [smem:[#allocation0]]
  $region61: #{decoder_layer.9} parent=0
    _
  %s8 = ssub.s32 1, %s6
  %s9 = scalar_select 0, %s8, %s6
  loop: start=0, step=1, limit=4
  $region2: #{decoder_layer.9} parent=0 // loop_pre_header
    _
  $region3: #{decoder_layer.9} parent=0 // loop_header
    %s11 = sphi 0, %s15
    %p12 = scmp.ge.s32.totalorder %s11, 4
    %s18 = sphi 0, %s30
    %s19 = sphi 0, %s26
    %s20 = sphi 0, %s18
    %s21 = sphi 0, %s19
    %s22 = sphi 0, %s20
    %s23 = sphi 0, %s21
    %s33 = sphi 0, %s35
    %s36 = sphi 0, %s33
    %s37 = sphi 0, %s36
    %s53 = sphi 0, %s37
    %s61 = sphi 0, %s63
    %s64 = sphi 0, %s61
    %s65 = sphi 0, %s64
    %s81 = sphi 0, %s65
    %s89 = sphi 0, %s91
    %s92 = sphi 0, %s89
    %s93 = sphi 0, %s92
    %s109 = sphi 0, %s93
    %s115 = sphi 0, %s117
    %s118 = sphi 0, %s115
    %s119 = sphi 0, %s118
    %s135 = sphi 0, %s119
    %s143 = sphi 0, %s145
    %s146 = sphi 0, %s143
    %s147 = sphi 0, %s146
    %s163 = sphi 0, %s147
    %s169 = sphi 0, %s171
    %s172 = sphi 0, %s169
    %s173 = sphi 0, %s172
    %s189 = sphi 0, %s173
  $region4: #{decoder_layer.9} parent=0 // loop_header_branch
    %14 = sbr.rel (%p12) target = $region8
  $region5: #{decoder_layer.9} parent=0 // loop_body
    %s16 = ssub.s32 %s11, 1
    %s17 = ssub.s32 %s11, 2
    %s24 = sadd.s32 1, %s19
    %p25 = scmp.ge.s32.totalorder %s24, 1
    %s26 = scalar_select %p25, 0, %s24
    %s27 = sadd.s32 1, %s18
    %s28 = scalar_select %p25, %s27, %s18
    %p29 = scmp.ge.s32.totalorder %s28, 2
    %s30 = scalar_select %p29, 0, %s28
    %s31 = ssub.s32 %s18, %s30
    %p32 = scmp.eq.s32.totalorder %s31, 0
    %s34 = sadd.s32 %s33, 1
    %s35 = scalar_select %p32, %s33, %s34
    %p38 = pneg %p32
    %p39 = scmp.eq.s32.totalorder %s11, 1
    %p40 = por %p38, %p39
    %p41 = scmp.ne.s32.totalorder %s33, %s36
    %p42 = scmp.eq.s32.totalorder %s11, 0
    %p43 = por %p41, %p42
    %p44 = scmp.ne.s32.totalorder %s33, %s36
    %p45 = scmp.eq.s32.totalorder %s16, 1
    %p46 = por %p44, %p45
    %p47 = scmp.ne.s32.totalorder %s36, %s37
    %p48 = scmp.eq.s32.totalorder %s16, 0
    %p49 = por %p47, %p48
    %p50 = scmp.ne.s32.totalorder %s36, %s37
    %p51 = scmp.eq.s32.totalorder %s17, 1
    %p52 = por %p50, %p51
    %p54 = scmp.ne.s32.totalorder %s37, %s53
    %p55 = scmp.eq.s32.totalorder %s17, 0
    %p56 = por %p54, %p55
    %s57 = ssub.s32 %s18, %s30
    %s58 = ssub.s32 %s19, %s26
    %s59 = sor.u32 %s57, %s58
    %p60 = scmp.eq.s32.totalorder %s59, 0
    %s62 = sadd.s32 %s61, 1
    %s63 = scalar_select %p60, %s61, %s62
    %p66 = pneg %p60
    %p67 = scmp.eq.s32.totalorder %s11, 1
    %p68 = por %p66, %p67
    %p69 = scmp.ne.s32.totalorder %s61, %s64
    %p70 = scmp.eq.s32.totalorder %s11, 0
    %p71 = por %p69, %p70
    %p72 = scmp.ne.s32.totalorder %s61, %s64
    %p73 = scmp.eq.s32.totalorder %s16, 1
    %p74 = por %p72, %p73
    %p75 = scmp.ne.s32.totalorder %s64, %s65
    %p76 = scmp.eq.s32.totalorder %s16, 0
    %p77 = por %p75, %p76
    %p78 = scmp.ne.s32.totalorder %s64, %s65
    %p79 = scmp.eq.s32.totalorder %s17, 1
    %p80 = por %p78, %p79
    %p82 = scmp.ne.s32.totalorder %s65, %s81
    %p83 = scmp.eq.s32.totalorder %s17, 0
    %p84 = por %p82, %p83
    %s85 = ssub.s32 %s18, %s30
    %s86 = ssub.s32 %s19, %s26
    %s87 = sor.u32 %s85, %s86
    %p88 = scmp.eq.s32.totalorder %s87, 0
    %s90 = sadd.s32 %s89, 1
    %s91 = scalar_select %p88, %s89, %s90
    %p94 = pneg %p88
    %p95 = scmp.eq.s32.totalorder %s11, 1
    %p96 = por %p94, %p95
    %p97 = scmp.ne.s32.totalorder %s89, %s92
    %p98 = scmp.eq.s32.totalorder %s11, 0
    %p99 = por %p97, %p98
    %p100 = scmp.ne.s32.totalorder %s89, %s92
    %p101 = scmp.eq.s32.totalorder %s16, 1
    %p102 = por %p100, %p101
    %p103 = scmp.ne.s32.totalorder %s92, %s93
    %p104 = scmp.eq.s32.totalorder %s16, 0
    %p105 = por %p103, %p104
    %p106 = scmp.ne.s32.totalorder %s92, %s93
    %p107 = scmp.eq.s32.totalorder %s17, 1
    %p108 = por %p106, %p107
    %p110 = scmp.ne.s32.totalorder %s93, %s109
    %p111 = scmp.eq.s32.totalorder %s17, 0
    %p112 = por %p110, %p111
    %s113 = ssub.s32 %s19, %s26
    %p114 = scmp.eq.s32.totalorder %s113, 0
    %s116 = sadd.s32 %s115, 1
    %s117 = scalar_select %p114, %s115, %s116
    %p120 = pneg %p114
    %p121 = scmp.eq.s32.totalorder %s11, 1
    %p122 = por %p120, %p121
    %p123 = scmp.ne.s32.totalorder %s115, %s118
    %p124 = scmp.eq.s32.totalorder %s11, 0
    %p125 = por %p123, %p124
    %p126 = scmp.ne.s32.totalorder %s115, %s118
    %p127 = scmp.eq.s32.totalorder %s16, 1
    %p128 = por %p126, %p127
    %p129 = scmp.ne.s32.totalorder %s118, %s119
    %p130 = scmp.eq.s32.totalorder %s16, 0
    %p131 = por %p129, %p130
    %p132 = scmp.ne.s32.totalorder %s118, %s119
    %p133 = scmp.eq.s32.totalorder %s17, 1
    %p134 = por %p132, %p133
    %p136 = scmp.ne.s32.totalorder %s119, %s135
    %p137 = scmp.eq.s32.totalorder %s17, 0
    %p138 = por %p136, %p137
    %s139 = ssub.s32 %s18, %s30
    %s140 = ssub.s32 %s19, %s26
    %s141 = sor.u32 %s139, %s140
    %p142 = scmp.eq.s32.totalorder %s141, 0
    %s144 = sadd.s32 %s143, 1
    %s145 = scalar_select %p142, %s143, %s144
    %p148 = pneg %p142
    %p149 = scmp.eq.s32.totalorder %s11, 1
    %p150 = por %p148, %p149
    %p151 = scmp.ne.s32.totalorder %s143, %s146
    %p152 = scmp.eq.s32.totalorder %s11, 0
    %p153 = por %p151, %p152
    %p154 = scmp.ne.s32.totalorder %s143, %s146
    %p155 = scmp.eq.s32.totalorder %s16, 1
    %p156 = por %p154, %p155
    %p157 = scmp.ne.s32.totalorder %s146, %s147
    %p158 = scmp.eq.s32.totalorder %s16, 0
    %p159 = por %p157, %p158
    %p160 = scmp.ne.s32.totalorder %s146, %s147
    %p161 = scmp.eq.s32.totalorder %s17, 1
    %p162 = por %p160, %p161
    %p164 = scmp.ne.s32.totalorder %s147, %s163
    %p165 = scmp.eq.s32.totalorder %s17, 0
    %p166 = por %p164, %p165
    %s167 = ssub.s32 %s18, %s30
    %p168 = scmp.eq.s32.totalorder %s167, 0
    %s170 = sadd.s32 %s169, 1
    %s171 = scalar_select %p168, %s169, %s170
    %p174 = pneg %p168
    %p175 = scmp.eq.s32.totalorder %s11, 1
    %p176 = por %p174, %p175
    %p177 = scmp.ne.s32.totalorder %s169, %s172
    %p178 = scmp.eq.s32.totalorder %s11, 0
    %p179 = por %p177, %p178
    %p180 = scmp.ne.s32.totalorder %s169, %s172
    %p181 = scmp.eq.s32.totalorder %s16, 1
    %p182 = por %p180, %p181
    %p183 = scmp.ne.s32.totalorder %s172, %s173
    %p184 = scmp.eq.s32.totalorder %s16, 0
    %p185 = por %p183, %p184
    %p186 = scmp.ne.s32.totalorder %s172, %s173
    %p187 = scmp.eq.s32.totalorder %s17, 1
    %p188 = por %p186, %p187
    %p190 = scmp.ne.s32.totalorder %s173, %s189
    %p191 = scmp.eq.s32.totalorder %s17, 0
    %p192 = por %p190, %p191
    %p193 = scmp.le.s32.totalorder 1, %s11
    %p194 = scmp.lt.s32.totalorder %s11, 3
    %p195 = pnand %p193, %p194
    %p196 = pneg %p195
    // Predicated region
    $region9: #{decoder_layer.9} parent=5 // pred_check
      _
    $region10: #{decoder_layer.9} parent=5 // pred_check_branch
      %198 = sbr.rel (%p195) target = $region12
    $region11: #{decoder_layer.9} parent=5 // pred_region
      %s199 = ssub.s32 %s11, 1
      // Predicated region
      $region13: #{decoder_layer.9} parent=11 // pred_check
        %p200 = pneg %p131
      $region14: #{decoder_layer.9} parent=11 // pred_check_branch
        %202 = sbr.rel (%p200) target = $region16
      $region15: #{decoder_layer.9} parent=11 // pred_region
        %p203 = scmp.lt.s32.totalorder %s21, 0
        %s204 = scalar_select %p203, %s21, 0
        %s205 = smul.addr %s204, 8
        %s206 = scalar_lea.vmem %s3, %s205
      $region16: #{decoder_layer.9} parent=11 // pred_fallthru
        _
    $region12: #{decoder_layer.9} parent=5 // pred_fallthru
      _
    %p207 = scmp.lt.s32.totalorder %s11, 2
    // Predicated region
    $region17: #{decoder_layer.9} parent=5 // pred_check
      %p208 = pneg %p207
    $region18: #{decoder_layer.9} parent=5 // pred_check_branch
      %210 = sbr.rel (%p208) target = $region20
    $region19: #{decoder_layer.9} parent=5 // pred_region
      // Predicated region
      $region21: #{decoder_layer.9} parent=19 // pred_check
        %p211 = pneg %p43
      $region22: #{decoder_layer.9} parent=19 // pred_check_branch
        %213 = sbr.rel (%p211) target = $region24
      $region23: #{decoder_layer.9} parent=19 // pred_region
        %p214 = scmp.lt.s32.totalorder %s18, 1
        %s215 = scalar_select %p214, %s18, 1
        %s216 = smul.addr %s215, 4
        %s217 = smul.addr %s216, 4
        %s218 = scalar_lea.vmem %s0, %s217
      $region24: #{decoder_layer.9} parent=19 // pred_fallthru
        _
      // Predicated region
      $region25: #{decoder_layer.9} parent=19 // pred_check
        %p219 = pneg %p71
      $region26: #{decoder_layer.9} parent=19 // pred_check_branch
        %221 = sbr.rel (%p219) target = $region28
      $region27: #{decoder_layer.9} parent=19 // pred_region
        %p222 = scmp.lt.s32.totalorder %s18, 1
        %s223 = scalar_select %p222, %s18, 1
        %p224 = scmp.lt.s32.totalorder %s19, 0
        %s225 = scalar_select %p224, %s19, 0
        %s226 = smul.addr %s223, 4
        %s227 = sadd.s32 %s225, %s226
        %s228 = smul.addr %s227, 4
        %s229 = scalar_lea.vmem %s1, %s228
      $region28: #{decoder_layer.9} parent=19 // pred_fallthru
        _
      // Predicated region
      $region29: #{decoder_layer.9} parent=19 // pred_check
        %p230 = pneg %p99
      $region30: #{decoder_layer.9} parent=19 // pred_check_branch
        %232 = sbr.rel (%p230) target = $region32
      $region31: #{decoder_layer.9} parent=19 // pred_region
        %p233 = scmp.lt.s32.totalorder %s18, 1
        %s234 = scalar_select %p233, %s18, 1
        %p235 = scmp.lt.s32.totalorder %s19, 0
        %s236 = scalar_select %p235, %s19, 0
        %s237 = smul.addr %s234, 4
        %s238 = sadd.s32 %s236, %s237
        %s239 = smul.addr %s238, 4
        %s240 = scalar_lea.vmem %s2, %s239
      $region32: #{decoder_layer.9} parent=19 // pred_fallthru
        _
      // Predicated region
      $region33: #{decoder_layer.9} parent=19 // pred_check
        %p241 = pneg %p153
      $region34: #{decoder_layer.9} parent=19 // pred_check_branch
        %243 = sbr.rel (%p241) target = $region36
      $region35: #{decoder_layer.9} parent=19 // pred_region
        %p244 = scmp.lt.s32.totalorder %s18, 1
        %s245 = scalar_select %p244, %s18, 1
        %p246 = scmp.lt.s32.totalorder %s19, 0
        %s247 = scalar_select %p246, %s19, 0
        %s248 = sadd.s32 %s247, %s245
        %s249 = scalar_lea.vmem %s4, %s248
      $region36: #{decoder_layer.9} parent=19 // pred_fallthru
        _
    $region20: #{decoder_layer.9} parent=5 // pred_fallthru
      _
    %p250 = scmp.le.s32.totalorder 1, %s11
    %p251 = scmp.lt.s32.totalorder %s11, 3
    %p252 = pnand %p250, %p251
    %p253 = pneg %p252
    // Predicated region
    $region37: #{decoder_layer.9} parent=5 // pred_check
      _
    $region38: #{decoder_layer.9} parent=5 // pred_check_branch
      %255 = sbr.rel (%p252) target = $region40
    $region39: #{decoder_layer.9} parent=5 // pred_region
      %s256 = ssub.s32 %s11, 1
      %p257 = scmp.lt.s32.totalorder %s20, 1
      %s258 = scalar_select %p257, %s20, 1
      %s259 = smul.addr %s258, 4
      %s260 = smul.addr %s259, 4
      %s261 = scalar_lea.vmem %s0, %s260
      %p262 = pneg %p49
      %p263 = pneg %p46
      %p264 = scmp.lt.s32.totalorder %s20, 1
      %s265 = scalar_select %p264, %s20, 1
      %p266 = scmp.lt.s32.totalorder %s21, 0
      %s267 = scalar_select %p266, %s21, 0
      %s268 = smul.addr %s265, 4
      %s269 = sadd.s32 %s267, %s268
      %s270 = smul.addr %s269, 4
      %s271 = scalar_lea.vmem %s1, %s270
      %p272 = pneg %p77
      %p273 = pneg %p74
      %p274 = scmp.lt.s32.totalorder %s20, 1
      %s275 = scalar_select %p274, %s20, 1
      %p276 = scmp.lt.s32.totalorder %s21, 0
      %s277 = scalar_select %p276, %s21, 0
      %s278 = smul.addr %s275, 4
      %s279 = sadd.s32 %s277, %s278
      %s280 = smul.addr %s279, 4
      %s281 = scalar_lea.vmem %s2, %s280
      %p282 = pneg %p105
      %p283 = pneg %p102
      %p284 = scmp.lt.s32.totalorder %s21, 0
      %s285 = scalar_select %p284, %s21, 0
      %s286 = smul.addr %s285, 8
      %s287 = scalar_lea.vmem %s3, %s286
      %p288 = pneg %p131
      %p289 = pneg %p128
      %p290 = scmp.lt.s32.totalorder %s20, 1
      %s291 = scalar_select %p290, %s20, 1
      %p292 = scmp.lt.s32.totalorder %s21, 0
      %s293 = scalar_select %p292, %s21, 0
      %s294 = sadd.s32 %s293, %s291
      %s295 = scalar_lea.vmem %s4, %s294
      %p296 = pneg %p159
      %p297 = pneg %p156
      %p298 = pneg %p185
      %p299 = pneg %p182
      %p300 = scmp.lt.s32.totalorder %s20, 1
      %s301 = scalar_select %p300, %s20, 1
      %s302 = smul.addr %s301, 4
      %s303 = smul.addr %s302, 4
      %s304 = scalar_lea.vmem %s5, %s303
      %p305 = scmp.lt.s32.totalorder %s20, 1
      %s306 = scalar_select %p305, %s20, 1
      %s307 = smul.addr %s306, 4
      %s308 = smul.addr %s307, 4
      %s309 = scalar_lea.vmem %s0, %s308
      %p310 = scmp.lt.s32.totalorder %s20, 1
      %s311 = scalar_select %p310, %s20, 1
      %p312 = scmp.lt.s32.totalorder %s21, 0
      %s313 = scalar_select %p312, %s21, 0
      %s314 = smul.addr %s311, 4
      %s315 = sadd.s32 %s313, %s314
      %s316 = smul.addr %s315, 4
      %s317 = scalar_lea.vmem %s1, %s316
      %p318 = scmp.lt.s32.totalorder %s20, 1
      %s319 = scalar_select %p318, %s20, 1
      %p320 = scmp.lt.s32.totalorder %s21, 0
      %s321 = scalar_select %p320, %s21, 0
      %s322 = smul.addr %s319, 4
      %s323 = sadd.s32 %s321, %s322
      %s324 = smul.addr %s323, 4
      %s325 = scalar_lea.vmem %s2, %s324
      %p326 = scmp.lt.s32.totalorder %s21, 0
      %s327 = scalar_select %p326, %s21, 0
      %s328 = smul.addr %s327, 8
      %s329 = scalar_lea.vmem %s3, %s328
      %p330 = scmp.lt.s32.totalorder %s20, 1
      %s331 = scalar_select %p330, %s20, 1
      %p332 = scmp.lt.s32.totalorder %s21, 0
      %s333 = scalar_select %p332, %s21, 0
      %s334 = sadd.s32 %s333, %s331
      %s335 = scalar_lea.vmem %s4, %s334
      %p336 = scmp.lt.s32.totalorder %s20, 1
      %s337 = scalar_select %p336, %s20, 1
      %s338 = smul.addr %s337, 4
      %s339 = smul.addr %s338, 4
      %s340 = scalar_lea.vmem %s5, %s339
      %p342 = scmp.eq.s32.totalorder %s21, 0
      // Predicated region
      $region41: #{decoder_layer.9} parent=39 // pred_check
        %p343 = pneg %p342
      $region42: #{decoder_layer.9} parent=39 // pred_check_branch
        %345 = sbr.rel (%p343) target = $region44
      $region43: #{decoder_layer.9} parent=39 // pred_region
        %vm346 = vcmask 7168
        %347 = vst.msk [vmem:[#allocation2] sm:$0xff] %vm346, -inf
        %348 = vst.msk [vmem:[#allocation2 + $0x8] sm:$0xff] %vm346, -inf
        %349 = vst.msk [vmem:[#allocation2 + $0x10] sm:$0xff] %vm346, -inf
        %350 = vst.msk [vmem:[#allocation2 + $0x18] sm:$0xff] %vm346, -inf
        %351 = vst.msk [vmem:[#allocation3] sm:$0xff] %vm346, 0.0
        %352 = vst.msk [vmem:[#allocation3 + $0x8] sm:$0xff] %vm346, 0.0
        %353 = vst.msk [vmem:[#allocation3 + $0x10] sm:$0xff] %vm346, 0.0
        %354 = vst.msk [vmem:[#allocation3 + $0x18] sm:$0xff] %vm346, 0.0
        %vm355 = vcmask 64512
        %356 = vst.msk [vmem:[#allocation4] sm:$0xff] %vm355, 0.0
        %357 = vst.msk [vmem:[#allocation4 + $0x8] sm:$0xff] %vm355, 0.0
        %358 = vst.msk [vmem:[#allocation4 + $0x10] sm:$0xff] %vm355, 0.0
        %359 = vst.msk [vmem:[#allocation4 + $0x18] sm:$0xff] %vm355, 0.0
      $region44: #{decoder_layer.9} parent=39 // pred_fallthru
        _
      %v360 = vld [vmem:[%s309] sm:$0xf]
      %v361 = vld [vmem:[%s309 + $0x4] sm:$0xf]
      %v362 = vld [vmem:[%s309 + $0x8] sm:$0xf]
      %v363 = vld [vmem:[%s309 + $0xc] sm:$0xf]
      %v364 = vld [vmem:[%s317] sm:$0xf]
      %v365 = vld [vmem:[%s317 + $0x4] sm:$0xf]
      %v366 = vld [vmem:[%s317 + $0x8] sm:$0xf]
      %v367 = vld [vmem:[%s317 + $0xc] sm:$0xf]
      %v368 = vld [vmem:[%s325] sm:$0xf]
      %v369 = vld [vmem:[%s325 + $0x4] sm:$0xf]
      %v370 = vld [vmem:[%s325 + $0x8] sm:$0xf]
      %v371 = vld [vmem:[%s325 + $0xc] sm:$0xf]
      %v372 = vld [vmem:[%s329] sm:$0xff]
      %v373 = vld [vmem:[%s335] sm:$0x1]
      %v375 = vlaneseq
      %v376 = vshrl.u32 %v375, 7
      %v377 = vsub.s32 0, %v376
      %v378 = vrot.slane %v373, %v377
      %v380 = vadd.f32 %v372, %v378
      %vm381 = vcmask 64512
      %v383 = vsel %vm381, %v360, 0
      %v386 = vsel %vm381, %v364, 0
      %388 = vmatprep.subr.bf16.mxu0 0
      %389 = vmatpush1.bf16.xpose.msra.mxu0 %v386
      %390 = vmatprep.subr.bf16.mxu0 0
      %391 = vmatpush1.bf16.xpose.msra.mxu0 0
      %392 = vmatprep.subr.bf16.mxu0 0
      %393 = vmatpush1.bf16.xpose.msra.mxu0 0
      %394 = vmatprep.subr.bf16.mxu0 0
      %395 = vmatpush1.bf16.xpose.msra.mxu0 0
      %396 = vmatprep.subr.bf16.mxu0 0
      %397 = vmatpush1.bf16.xpose.msra.mxu0 0
      %398 = vmatprep.subr.bf16.mxu0 0
      %399 = vmatpush1.bf16.xpose.msra.mxu0 0
      %400 = vmatprep.subr.bf16.mxu0 0
      %401 = vmatpush1.bf16.xpose.msra.mxu0 0
      %402 = vmatprep.subr.bf16.mxu0 0
      %403 = vmatpush1.bf16.xpose.msra.mxu0 0
      %404 = vmatprep.subr.bf16.mxu0 0
      %405 = vmatpush1.bf16.xpose.msra.mxu0 0
      %406 = vmatprep.subr.bf16.mxu0 0
      %407 = vmatpush1.bf16.xpose.msra.mxu0 0
      %408 = vmatprep.subr.bf16.mxu0 0
      %409 = vmatpush1.bf16.xpose.msra.mxu0 0
      %410 = vmatprep.subr.bf16.mxu0 0
      %411 = vmatpush1.bf16.xpose.msra.mxu0 0
      %412 = vmatprep.subr.bf16.mxu0 0
      %413 = vmatpush1.bf16.xpose.msra.mxu0 0
      %414 = vmatprep.subr.bf16.mxu0 0
      %415 = vmatpush1.bf16.xpose.msra.mxu0 0
      %416 = vmatprep.subr.bf16.mxu0 0
      %417 = vmatpush1.bf16.xpose.msra.mxu0 0
      %418 = vmatprep.subr.bf16.mxu0 0
      %419 = vmatpush1.bf16.xpose.msra.mxu0 0
      %420 = vmatprep.mubr.bf16.mxu0 0
      %421 = vmatmul.mubr.bf16.gmra.mrb[0].mxu0 %v383
      %v422 = vpop.f32.mrb[0].mxu0
      %v423 = vadd.f32 %v380, %v422
      %v424 = vpop.f32.mrb[0].mxu0
      %v425 = vpop.f32.mrb[0].mxu0
      %v426 = vpop.f32.mrb[0].mxu0
      %427 = vdwg.mxu0
      %v429 = vsel %vm381, %v361, 0
      %v432 = vsel %vm381, %v365, 0
      %434 = vmatprep.subr.bf16.mxu0 0
      %435 = vmatpush1.bf16.xpose.msra.mxu0 %v432
      %436 = vmatprep.subr.bf16.mxu0 0
      %437 = vmatpush1.bf16.xpose.msra.mxu0 0
      %438 = vmatprep.subr.bf16.mxu0 0
      %439 = vmatpush1.bf16.xpose.msra.mxu0 0
      %440 = vmatprep.subr.bf16.mxu0 0
      %441 = vmatpush1.bf16.xpose.msra.mxu0 0
      %442 = vmatprep.subr.bf16.mxu0 0
      %443 = vmatpush1.bf16.xpose.msra.mxu0 0
      %444 = vmatprep.subr.bf16.mxu0 0
      %445 = vmatpush1.bf16.xpose.msra.mxu0 0
      %446 = vmatprep.subr.bf16.mxu0 0
      %447 = vmatpush1.bf16.xpose.msra.mxu0 0
      %448 = vmatprep.subr.bf16.mxu0 0
      %449 = vmatpush1.bf16.xpose.msra.mxu0 0
      %450 = vmatprep.subr.bf16.mxu0 0
      %451 = vmatpush1.bf16.xpose.msra.mxu0 0
      %452 = vmatprep.subr.bf16.mxu0 0
      %453 = vmatpush1.bf16.xpose.msra.mxu0 0
      %454 = vmatprep.subr.bf16.mxu0 0
      %455 = vmatpush1.bf16.xpose.msra.mxu0 0
      %456 = vmatprep.subr.bf16.mxu0 0
      %457 = vmatpush1.bf16.xpose.msra.mxu0 0
      %458 = vmatprep.subr.bf16.mxu0 0
      %459 = vmatpush1.bf16.xpose.msra.mxu0 0
      %460 = vmatprep.subr.bf16.mxu0 0
      %461 = vmatpush1.bf16.xpose.msra.mxu0 0
      %462 = vmatprep.subr.bf16.mxu0 0
      %463 = vmatpush1.bf16.xpose.msra.mxu0 0
      %464 = vmatprep.subr.bf16.mxu0 0
      %465 = vmatpush1.bf16.xpose.msra.mxu0 0
      %466 = vmatprep.mubr.bf16.mxu0 0
      %467 = vmatmul.mubr.bf16.gmra.mrb[0].mxu0 %v429
      %v468 = vpop.f32.mrb[0].mxu0
      %v469 = vadd.f32 %v380, %v468
      %v470 = vpop.f32.mrb[0].mxu0
      %v471 = vpop.f32.mrb[0].mxu0
      %v472 = vpop.f32.mrb[0].mxu0
      %473 = vdwg.mxu0
      %v475 = vsel %vm381, %v362, 0
      %v478 = vsel %vm381, %v366, 0
      %480 = vmatprep.subr.bf16.mxu0 0
      %481 = vmatpush1.bf16.xpose.msra.mxu0 %v478
      %482 = vmatprep.subr.bf16.mxu0 0
      %483 = vmatpush1.bf16.xpose.msra.mxu0 0
      %484 = vmatprep.subr.bf16.mxu0 0
      %485 = vmatpush1.bf16.xpose.msra.mxu0 0
      %486 = vmatprep.subr.bf16.mxu0 0
      %487 = vmatpush1.bf16.xpose.msra.mxu0 0
      %488 = vmatprep.subr.bf16.mxu0 0
      %489 = vmatpush1.bf16.xpose.msra.mxu0 0
      %490 = vmatprep.subr.bf16.mxu0 0
      %491 = vmatpush1.bf16.xpose.msra.mxu0 0
      %492 = vmatprep.subr.bf16.mxu0 0
      %493 = vmatpush1.bf16.xpose.msra.mxu0 0
      %494 = vmatprep.subr.bf16.mxu0 0
      %495 = vmatpush1.bf16.xpose.msra.mxu0 0
      %496 = vmatprep.subr.bf16.mxu0 0
      %497 = vmatpush1.bf16.xpose.msra.mxu0 0
      %498 = vmatprep.subr.bf16.mxu0 0
      %499 = vmatpush1.bf16.xpose.msra.mxu0 0
      %500 = vmatprep.subr.bf16.mxu0 0
      %501 = vmatpush1.bf16.xpose.msra.mxu0 0
      %502 = vmatprep.subr.bf16.mxu0 0
      %503 = vmatpush1.bf16.xpose.msra.mxu0 0
      %504 = vmatprep.subr.bf16.mxu0 0
      %505 = vmatpush1.bf16.xpose.msra.mxu0 0
      %506 = vmatprep.subr.bf16.mxu0 0
      %507 = vmatpush1.bf16.xpose.msra.mxu0 0
      %508 = vmatprep.subr.bf16.mxu0 0
      %509 = vmatpush1.bf16.xpose.msra.mxu0 0
      %510 = vmatprep.subr.bf16.mxu0 0
      %511 = vmatpush1.bf16.xpose.msra.mxu0 0
      %512 = vmatprep.mubr.bf16.mxu0 0
      %513 = vmatmul.mubr.bf16.gmra.mrb[0].mxu0 %v475
      %v514 = vpop.f32.mrb[0].mxu0
      %v515 = vadd.f32 %v380, %v514
      %v516 = vpop.f32.mrb[0].mxu0
      %v517 = vpop.f32.mrb[0].mxu0
      %v518 = vpop.f32.mrb[0].mxu0
      %519 = vdwg.mxu0
      %v521 = vsel %vm381, %v363, 0
      %v524 = vsel %vm381, %v367, 0
      %526 = vmatprep.subr.bf16.mxu0 0
      %527 = vmatpush1.bf16.xpose.msra.mxu0 %v524
      %528 = vmatprep.subr.bf16.mxu0 0
      %529 = vmatpush1.bf16.xpose.msra.mxu0 0
      %530 = vmatprep.subr.bf16.mxu0 0
      %531 = vmatpush1.bf16.xpose.msra.mxu0 0
      %532 = vmatprep.subr.bf16.mxu0 0
      %533 = vmatpush1.bf16.xpose.msra.mxu0 0
      %534 = vmatprep.subr.bf16.mxu0 0
      %535 = vmatpush1.bf16.xpose.msra.mxu0 0
      %536 = vmatprep.subr.bf16.mxu0 0
      %537 = vmatpush1.bf16.xpose.msra.mxu0 0
      %538 = vmatprep.subr.bf16.mxu0 0
      %539 = vmatpush1.bf16.xpose.msra.mxu0 0
      %540 = vmatprep.subr.bf16.mxu0 0
      %541 = vmatpush1.bf16.xpose.msra.mxu0 0
      %542 = vmatprep.subr.bf16.mxu0 0
      %543 = vmatpush1.bf16.xpose.msra.mxu0 0
      %544 = vmatprep.subr.bf16.mxu0 0
      %545 = vmatpush1.bf16.xpose.msra.mxu0 0
      %546 = vmatprep.subr.bf16.mxu0 0
      %547 = vmatpush1.bf16.xpose.msra.mxu0 0
      %548 = vmatprep.subr.bf16.mxu0 0
      %549 = vmatpush1.bf16.xpose.msra.mxu0 0
      %550 = vmatprep.subr.bf16.mxu0 0
      %551 = vmatpush1.bf16.xpose.msra.mxu0 0
      %552 = vmatprep.subr.bf16.mxu0 0
      %553 = vmatpush1.bf16.xpose.msra.mxu0 0
      %554 = vmatprep.subr.bf16.mxu0 0
      %555 = vmatpush1.bf16.xpose.msra.mxu0 0
      %556 = vmatprep.subr.bf16.mxu0 0
      %557 = vmatpush1.bf16.xpose.msra.mxu0 0
      %558 = vmatprep.mubr.bf16.mxu0 0
      %559 = vmatmul.mubr.bf16.gmra.mrb[0].mxu0 %v521
      %v560 = vpop.f32.mrb[0].mxu0
      %v561 = vadd.f32 %v380, %v560
      %v562 = vpop.f32.mrb[0].mxu0
      %v563 = vpop.f32.mrb[0].mxu0
      %v564 = vpop.f32.mrb[0].mxu0
      %565 = vdwg.mxu0
      %v566 = vld [vmem:[#allocation2] sm:$0xff]
      %v567 = vld [vmem:[#allocation2 + $0x8] sm:$0xff]
      %v568 = vld [vmem:[#allocation2 + $0x10] sm:$0xff]
      %v569 = vld [vmem:[#allocation2 + $0x18] sm:$0xff]
      %v570 = vsel %vm381, %v423, -inf
      %571 = vmax.xlane.f32.xlu0 %v570
      %v572 = vpop.xlane.xlu0 %571
      %v573 = vsel %vm381, %v469, -inf
      %574 = vmax.xlane.f32.xlu0 %v573
      %v575 = vpop.xlane.xlu0 %574
      %v576 = vsel %vm381, %v515, -inf
      %577 = vmax.xlane.f32.xlu0 %v576
      %v578 = vpop.xlane.xlu0 %577
      %v579 = vsel %vm381, %v561, -inf
      %580 = vmax.xlane.f32.xlu0 %v579
      %v581 = vpop.xlane.xlu0 %580
      %v582 = vmax.f32 %v566, %v572
      %v583 = vmax.f32 %v567, %v575
      %v584 = vmax.f32 %v568, %v578
      %v585 = vmax.f32 %v569, %v581
      %v586 = vsub.f32 %v566, %v582
      %v587 = vsub.f32 %v567, %v583
      %v588 = vsub.f32 %v568, %v584
      %v589 = vsub.f32 %v569, %v585
      %v590 = vmul.f32 %v586, 1.442695
      %v591 = vpow.pop %v590
      %v592 = vmul.f32 %v587, 1.442695
      %v593 = vpow.pop %v592
      %v594 = vmul.f32 %v588, 1.442695
      %v595 = vpow.pop %v594
      %v596 = vmul.f32 %v589, 1.442695
      %v597 = vpow.pop %v596
      %599 = vset.pattern.permute.xlu0 0
      %600 = vperm.xlu0 %599, %v582
      %v601 = vpop.permute.xlu0 %600
      %604 = vset.pattern.permute.xlu0 0
      %605 = vperm.xlu0 %604, %v583
      %v606 = vpop.permute.xlu0 %605
      %609 = vset.pattern.permute.xlu0 0
      %610 = vperm.xlu0 %609, %v584
      %v611 = vpop.permute.xlu0 %610
      %614 = vset.pattern.permute.xlu0 0
      %615 = vperm.xlu0 %614, %v585
      %v616 = vpop.permute.xlu0 %615
      %v618 = vsub.f32 %v423, %v601
      %v619 = vsub.f32 %v469, %v606
      %v620 = vsub.f32 %v515, %v611
      %v621 = vsub.f32 %v561, %v616
      %v622 = vmul.f32 %v618, 1.442695
      %v623 = vpow.pop %v622
      %v624 = vmul.f32 %v619, 1.442695
      %v625 = vpow.pop %v624
      %v626 = vmul.f32 %v620, 1.442695
      %v627 = vpow.pop %v626
      %v628 = vmul.f32 %v621, 1.442695
      %v629 = vpow.pop %v628
      %v630 = vld [vmem:[#allocation3] sm:$0xff]
      %v631 = vld [vmem:[#allocation3 + $0x8] sm:$0xff]
      %v632 = vld [vmem:[#allocation3 + $0x10] sm:$0xff]
      %v633 = vld [vmem:[#allocation3 + $0x18] sm:$0xff]
      %v634 = vmul.f32 %v591, %v630
      %v635 = vmul.f32 %v593, %v631
      %v636 = vmul.f32 %v595, %v632
      %v637 = vmul.f32 %v597, %v633
      %v638 = vsel %vm381, %v623, 0.0
      %639 = vadd.xlane.f32.xlu0 %v638
      %v640 = vpop.xlane.xlu0 %639
      %v641 = vsel %vm381, %v625, 0.0
      %642 = vadd.xlane.f32.xlu0 %v641
      %v643 = vpop.xlane.xlu0 %642
      %v644 = vsel %vm381, %v627, 0.0
      %645 = vadd.xlane.f32.xlu0 %v644
      %v646 = vpop.xlane.xlu0 %645
      %v647 = vsel %vm381, %v629, 0.0
      %648 = vadd.xlane.f32.xlu0 %v647
      %v649 = vpop.xlane.xlu0 %648
      %v650 = vadd.f32 %v634, %v640
      %v651 = vadd.f32 %v635, %v643
      %v652 = vadd.f32 %v636, %v646
      %v653 = vadd.f32 %v637, %v649
      %vm654 = vcmask 7168
      %655 = vst.msk [vmem:[#allocation3] sm:$0xff] %vm654, %v650
      %656 = vst.msk [vmem:[#allocation3 + $0x8] sm:$0xff] %vm654, %v651
      %657 = vst.msk [vmem:[#allocation3 + $0x10] sm:$0xff] %vm654, %v652
      %658 = vst.msk [vmem:[#allocation3 + $0x18] sm:$0xff] %vm654, %v653
      %v659 = vld [vmem:[#allocation4] sm:$0xff]
      %v660 = vld [vmem:[#allocation4 + $0x8] sm:$0xff]
      %v661 = vld [vmem:[#allocation4 + $0x10] sm:$0xff]
      %v662 = vld [vmem:[#allocation4 + $0x18] sm:$0xff]
      %664 = vset.pattern.permute.xlu0 0
      %665 = vperm.xlu0 %664, %v591
      %v666 = vpop.permute.xlu0 %665
      %669 = vset.pattern.permute.xlu0 0
      %670 = vperm.xlu0 %669, %v593
      %v671 = vpop.permute.xlu0 %670
      %674 = vset.pattern.permute.xlu0 0
      %675 = vperm.xlu0 %674, %v595
      %v676 = vpop.permute.xlu0 %675
      %679 = vset.pattern.permute.xlu0 0
      %680 = vperm.xlu0 %679, %v597
      %v681 = vpop.permute.xlu0 %680
      %v683 = vmul.f32 %v666, %v659
      %v684 = vmul.f32 %v671, %v660
      %v685 = vmul.f32 %v676, %v661
      %v686 = vmul.f32 %v681, %v662
      %v687 = vpack.c.bf16 %v623, %v623
      %v688 = vpack.c.bf16 %v625, %v625
      %v689 = vpack.c.bf16 %v627, %v627
      %v690 = vpack.c.bf16 %v629, %v629
      %v692 = vsel %vm381, %v687, 0
      %vm694 = vcmask 1043456
      %v696 = vsel %vm694, %v368, 0
      %698 = vmatprep.subr.bf16.mxu0 0
      %699 = vmatpush1.bf16.msra.mxu0 %v696
      %700 = vmatprep.subr.bf16.mxu0 0
      %701 = vmatpush1.bf16.msra.mxu0 0
      %702 = vmatprep.subr.bf16.mxu0 0
      %703 = vmatpush1.bf16.msra.mxu0 0
      %704 = vmatprep.subr.bf16.mxu0 0
      %705 = vmatpush1.bf16.msra.mxu0 0
      %706 = vmatprep.subr.bf16.mxu0 0
      %707 = vmatpush1.bf16.msra.mxu0 0
      %708 = vmatprep.subr.bf16.mxu0 0
      %709 = vmatpush1.bf16.msra.mxu0 0
      %710 = vmatprep.subr.bf16.mxu0 0
      %711 = vmatpush1.bf16.msra.mxu0 0
      %712 = vmatprep.subr.bf16.mxu0 0
      %713 = vmatpush1.bf16.msra.mxu0 0
      %714 = vmatprep.subr.bf16.mxu0 0
      %715 = vmatpush1.bf16.msra.mxu0 0
      %716 = vmatprep.subr.bf16.mxu0 0
      %717 = vmatpush1.bf16.msra.mxu0 0
      %718 = vmatprep.subr.bf16.mxu0 0
      %719 = vmatpush1.bf16.msra.mxu0 0
      %720 = vmatprep.subr.bf16.mxu0 0
      %721 = vmatpush1.bf16.msra.mxu0 0
      %722 = vmatprep.subr.bf16.mxu0 0
      %723 = vmatpush1.bf16.msra.mxu0 0
      %724 = vmatprep.subr.bf16.mxu0 0
      %725 = vmatpush1.bf16.msra.mxu0 0
      %726 = vmatprep.subr.bf16.mxu0 0
      %727 = vmatpush1.bf16.msra.mxu0 0
      %728 = vmatprep.subr.bf16.mxu0 0
      %729 = vmatpush1.bf16.msra.mxu0 0
      %730 = vmatprep.mubr.bf16.mxu0 0
      %731 = vmatmul.mubr.bf16.gmra.mrb[0].mxu0 %v692
      %v732 = vpop.f32.mrb[0].mxu0
      %v733 = vadd.f32 0.0, %v732
      %v734 = vpop.f32.mrb[0].mxu0
      %v735 = vpop.f32.mrb[0].mxu0
      %v736 = vpop.f32.mrb[0].mxu0
      %737 = vdwg.mxu0
      %v739 = vsel %vm381, %v688, 0
      %v742 = vsel %vm694, %v369, 0
      %744 = vmatprep.subr.bf16.mxu0 0
      %745 = vmatpush1.bf16.msra.mxu0 %v742
      %746 = vmatprep.subr.bf16.mxu0 0
      %747 = vmatpush1.bf16.msra.mxu0 0
      %748 = vmatprep.subr.bf16.mxu0 0
      %749 = vmatpush1.bf16.msra.mxu0 0
      %750 = vmatprep.subr.bf16.mxu0 0
      %751 = vmatpush1.bf16.msra.mxu0 0
      %752 = vmatprep.subr.bf16.mxu0 0
      %753 = vmatpush1.bf16.msra.mxu0 0
      %754 = vmatprep.subr.bf16.mxu0 0
      %755 = vmatpush1.bf16.msra.mxu0 0
      %756 = vmatprep.subr.bf16.mxu0 0
      %757 = vmatpush1.bf16.msra.mxu0 0
      %758 = vmatprep.subr.bf16.mxu0 0
      %759 = vmatpush1.bf16.msra.mxu0 0
      %760 = vmatprep.subr.bf16.mxu0 0
      %761 = vmatpush1.bf16.msra.mxu0 0
      %762 = vmatprep.subr.bf16.mxu0 0
      %763 = vmatpush1.bf16.msra.mxu0 0
      %764 = vmatprep.subr.bf16.mxu0 0
      %765 = vmatpush1.bf16.msra.mxu0 0
      %766 = vmatprep.subr.bf16.mxu0 0
      %767 = vmatpush1.bf16.msra.mxu0 0
      %768 = vmatprep.subr.bf16.mxu0 0
      %769 = vmatpush1.bf16.msra.mxu0 0
      %770 = vmatprep.subr.bf16.mxu0 0
      %771 = vmatpush1.bf16.msra.mxu0 0
      %772 = vmatprep.subr.bf16.mxu0 0
      %773 = vmatpush1.bf16.msra.mxu0 0
      %774 = vmatprep.subr.bf16.mxu0 0
      %775 = vmatpush1.bf16.msra.mxu0 0
      %776 = vmatprep.mubr.bf16.mxu0 0
      %777 = vmatmul.mubr.bf16.gmra.mrb[0].mxu0 %v739
      %v778 = vpop.f32.mrb[0].mxu0
      %v779 = vadd.f32 0.0, %v778
      %v780 = vpop.f32.mrb[0].mxu0
      %v781 = vpop.f32.mrb[0].mxu0
      %v782 = vpop.f32.mrb[0].mxu0
      %783 = vdwg.mxu0
      %v785 = vsel %vm381, %v689, 0
      %v788 = vsel %vm694, %v370, 0
      %790 = vmatprep.subr.bf16.mxu0 0
      %791 = vmatpush1.bf16.msra.mxu0 %v788
      %792 = vmatprep.subr.bf16.mxu0 0
      %793 = vmatpush1.bf16.msra.mxu0 0
      %794 = vmatprep.subr.bf16.mxu0 0
      %795 = vmatpush1.bf16.msra.mxu0 0
      %796 = vmatprep.subr.bf16.mxu0 0
      %797 = vmatpush1.bf16.msra.mxu0 0
      %798 = vmatprep.subr.bf16.mxu0 0
      %799 = vmatpush1.bf16.msra.mxu0 0
      %800 = vmatprep.subr.bf16.mxu0 0
      %801 = vmatpush1.bf16.msra.mxu0 0
      %802 = vmatprep.subr.bf16.mxu0 0
      %803 = vmatpush1.bf16.msra.mxu0 0
      %804 = vmatprep.subr.bf16.mxu0 0
      %805 = vmatpush1.bf16.msra.mxu0 0
      %806 = vmatprep.subr.bf16.mxu0 0
      %807 = vmatpush1.bf16.msra.mxu0 0
      %808 = vmatprep.subr.bf16.mxu0 0
      %809 = vmatpush1.bf16.msra.mxu0 0
      %810 = vmatprep.subr.bf16.mxu0 0
      %811 = vmatpush1.bf16.msra.mxu0 0
      %812 = vmatprep.subr.bf16.mxu0 0
      %813 = vmatpush1.bf16.msra.mxu0 0
      %814 = vmatprep.subr.bf16.mxu0 0
      %815 = vmatpush1.bf16.msra.mxu0 0
      %816 = vmatprep.subr.bf16.mxu0 0
      %817 = vmatpush1.bf16.msra.mxu0 0
      %818 = vmatprep.subr.bf16.mxu0 0
      %819 = vmatpush1.bf16.msra.mxu0 0
      %820 = vmatprep.subr.bf16.mxu0 0
      %821 = vmatpush1.bf16.msra.mxu0 0
      %822 = vmatprep.mubr.bf16.mxu0 0
      %823 = vmatmul.mubr.bf16.gmra.mrb[0].mxu0 %v785
      %v824 = vpop.f32.mrb[0].mxu0
      %v825 = vadd.f32 0.0, %v824
      %v826 = vpop.f32.mrb[0].mxu0
      %v827 = vpop.f32.mrb[0].mxu0
      %v828 = vpop.f32.mrb[0].mxu0
      %829 = vdwg.mxu0
      %v831 = vsel %vm381, %v690, 0
      %v834 = vsel %vm694, %v371, 0
      %836 = vmatprep.subr.bf16.mxu0 0
      %837 = vmatpush1.bf16.msra.mxu0 %v834
      %838 = vmatprep.subr.bf16.mxu0 0
      %839 = vmatpush1.bf16.msra.mxu0 0
      %840 = vmatprep.subr.bf16.mxu0 0
      %841 = vmatpush1.bf16.msra.mxu0 0
      %842 = vmatprep.subr.bf16.mxu0 0
      %843 = vmatpush1.bf16.msra.mxu0 0
      %844 = vmatprep.subr.bf16.mxu0 0
      %845 = vmatpush1.bf16.msra.mxu0 0
      %846 = vmatprep.subr.bf16.mxu0 0
      %847 = vmatpush1.bf16.msra.mxu0 0
      %848 = vmatprep.subr.bf16.mxu0 0
      %849 = vmatpush1.bf16.msra.mxu0 0
      %850 = vmatprep.subr.bf16.mxu0 0
      %851 = vmatpush1.bf16.msra.mxu0 0
      %852 = vmatprep.subr.bf16.mxu0 0
      %853 = vmatpush1.bf16.msra.mxu0 0
      %854 = vmatprep.subr.bf16.mxu0 0
      %855 = vmatpush1.bf16.msra.mxu0 0
      %856 = vmatprep.subr.bf16.mxu0 0
      %857 = vmatpush1.bf16.msra.mxu0 0
      %858 = vmatprep.subr.bf16.mxu0 0
      %859 = vmatpush1.bf16.msra.mxu0 0
      %860 = vmatprep.subr.bf16.mxu0 0
      %861 = vmatpush1.bf16.msra.mxu0 0
      %862 = vmatprep.subr.bf16.mxu0 0
      %863 = vmatpush1.bf16.msra.mxu0 0
      %864 = vmatprep.subr.bf16.mxu0 0
      %865 = vmatpush1.bf16.msra.mxu0 0
      %866 = vmatprep.subr.bf16.mxu0 0
      %867 = vmatpush1.bf16.msra.mxu0 0
      %868 = vmatprep.mubr.bf16.mxu0 0
      %869 = vmatmul.mubr.bf16.gmra.mrb[0].mxu0 %v831
      %v870 = vpop.f32.mrb[0].mxu0
      %v871 = vadd.f32 0.0, %v870
      %v872 = vpop.f32.mrb[0].mxu0
      %v873 = vpop.f32.mrb[0].mxu0
      %v874 = vpop.f32.mrb[0].mxu0
      %875 = vdwg.mxu0
      %v876 = vadd.f32 %v683, %v733
      %v877 = vadd.f32 %v684, %v779
      %v878 = vadd.f32 %v685, %v825
      %v879 = vadd.f32 %v686, %v871
      %880 = vst.msk [vmem:[#allocation4] sm:$0xff] %vm381, %v876
      %881 = vst.msk [vmem:[#allocation4 + $0x8] sm:$0xff] %vm381, %v877
      %882 = vst.msk [vmem:[#allocation4 + $0x10] sm:$0xff] %vm381, %v878
      %883 = vst.msk [vmem:[#allocation4 + $0x18] sm:$0xff] %vm381, %v879
      %884 = vst.msk [vmem:[#allocation2] sm:$0xff] %vm654, %v582
      %885 = vst.msk [vmem:[#allocation2 + $0x8] sm:$0xff] %vm654, %v583
      %886 = vst.msk [vmem:[#allocation2 + $0x10] sm:$0xff] %vm654, %v584
      %887 = vst.msk [vmem:[#allocation2 + $0x18] sm:$0xff] %vm654, %v585
      // Predicated region
      $region45: #{decoder_layer.9} parent=39 // pred_check
        %p888 = pneg %p342
      $region46: #{decoder_layer.9} parent=39 // pred_check_branch
        %890 = sbr.rel (%p888) target = $region48
      $region47: #{decoder_layer.9} parent=39 // pred_region
        %v891 = vld [vmem:[#allocation4] sm:$0xff]
        %v892 = vld [vmem:[#allocation4 + $0x8] sm:$0xff]
        %v893 = vld [vmem:[#allocation4 + $0x10] sm:$0xff]
        %v894 = vld [vmem:[#allocation4 + $0x18] sm:$0xff]
        %v895 = vld [vmem:[#allocation3] sm:$0xff]
        %v896 = vld [vmem:[#allocation3 + $0x8] sm:$0xff]
        %v897 = vld [vmem:[#allocation3 + $0x10] sm:$0xff]
        %v898 = vld [vmem:[#allocation3 + $0x18] sm:$0xff]
        %v899 = vrcp.pop %v895
        %v900 = vrcp.pop %v896
        %v901 = vrcp.pop %v897
        %v902 = vrcp.pop %v898
        %904 = vset.pattern.permute.xlu0 0
        %905 = vperm.xlu0 %904, %v899
        %v906 = vpop.permute.xlu0 %905
        %909 = vset.pattern.permute.xlu0 0
        %910 = vperm.xlu0 %909, %v900
        %v911 = vpop.permute.xlu0 %910
        %914 = vset.pattern.permute.xlu0 0
        %915 = vperm.xlu0 %914, %v901
        %v916 = vpop.permute.xlu0 %915
        %919 = vset.pattern.permute.xlu0 0
        %920 = vperm.xlu0 %919, %v902
        %v921 = vpop.permute.xlu0 %920
        %v923 = vmul.f32 %v891, %v906
        %v924 = vmul.f32 %v892, %v911
        %v925 = vmul.f32 %v893, %v916
        %v926 = vmul.f32 %v894, %v921
        %v927 = vpack.c.bf16 %v923, %v923
        %v928 = vpack.c.bf16 %v924, %v924
        %v929 = vpack.c.bf16 %v925, %v925
        %v930 = vpack.c.bf16 %v926, %v926
        %vm931 = vcmask 60416
        %932 = vst.msk [vmem:[%s340] sm:$0xf] %vm931, %v927
        %933 = vst.msk [vmem:[%s340 + $0x4] sm:$0xf] %vm931, %v928
        %934 = vst.msk [vmem:[%s340 + $0x8] sm:$0xf] %vm931, %v929
        %935 = vst.msk [vmem:[%s340 + $0xc] sm:$0xf] %vm931, %v930
      $region48: #{decoder_layer.9} parent=39 // pred_fallthru
        _
      %p936 = scmp.lt.s32.totalorder %s20, 1
      %s937 = scalar_select %p936, %s20, 1
      %s938 = smul.addr %s937, 4
      %s939 = smul.addr %s938, 4
      %s940 = scalar_lea.vmem %s5, %s939
      // Predicated region
      $region49: #{decoder_layer.9} parent=39 // pred_check
        %p941 = pneg %p182
      $region50: #{decoder_layer.9} parent=39 // pred_check_branch
        %943 = sbr.rel (%p941) target = $region52
      $region51: #{decoder_layer.9} parent=39 // pred_region
        _
      $region52: #{decoder_layer.9} parent=39 // pred_fallthru
        _
    $region40: #{decoder_layer.9} parent=5 // pred_fallthru
      _
    %p944 = scmp.le.s32.totalorder 2, %s11
    // Predicated region
    $region53: #{decoder_layer.9} parent=5 // pred_check
      %p945 = pneg %p944
    $region54: #{decoder_layer.9} parent=5 // pred_check_branch
      %947 = sbr.rel (%p945) target = $region56
    $region55: #{decoder_layer.9} parent=5 // pred_region
      %s948 = ssub.s32 %s11, 2
      // Predicated region
      $region57: #{decoder_layer.9} parent=55 // pred_check
        %p949 = pneg %p188
      $region58: #{decoder_layer.9} parent=55 // pred_check_branch
        %951 = sbr.rel (%p949) target = $region60
      $region59: #{decoder_layer.9} parent=55 // pred_region
        %p952 = scmp.lt.s32.totalorder %s22, 1
        %s953 = scalar_select %p952, %s22, 1
        %s954 = smul.addr %s953, 4
        %s955 = smul.addr %s954, 4
        %s956 = scalar_lea.vmem %s5, %s955
      $region60: #{decoder_layer.9} parent=55 // pred_fallthru
        _
    $region56: #{decoder_layer.9} parent=5 // pred_fallthru
      _
  $region6: #{decoder_layer.9} parent=0 // loop_footer
    %s15 = sadd.s32 1, %s11
  $region7: #{decoder_layer.9} parent=0 // loop_footer_branch
    %10 = sbr.rel target = $region3
  $region8: #{decoder_layer.9} parent=0 // loop_exit
    _

// kernel: decoder_layer.11
$region0: #{decoder_layer.11}
  #allocation0 [shape = 'u32[]', space=smem, size = 0x4, offset = 0x4, fixed_abs, tag = 'smem constant byte address 0x4 - core index']
  #allocation1 [shape = 'u32[144,128]{1,0:T(1,128)}', space=vmem, size = 0x12000, scoped, tag = 'internal scratch']
  %s0 = inlined_call_operand.vmem [shape: bf16[16,32], index: 0, kind: input, shape index: {}]
  %s1 = inlined_call_operand.vmem [shape: bf16[32,32], index: 1, kind: input, shape index: {}]
  %s2 = inlined_call_operand.vmem [shape: f32[1,32], index: 2, kind: input, shape index: {}]
  %s3 = inlined_call_operand.vmem [shape: bf16[16,32], index: 3, kind: output, shape index: {}]
  %s4 = sld [smem:[#allocation0]]
  $region45: #{decoder_layer.11} parent=0
    _
  %s6 = ssub.s32 1, %s4
  %s7 = scalar_select 0, %s6, %s4
  loop: start=0, step=1, limit=4
  $region2: #{decoder_layer.11} parent=0 // loop_pre_header
    _
  $region3: #{decoder_layer.11} parent=0 // loop_header
    %s9 = sphi 0, %s13
    %p10 = scmp.ge.s32.totalorder %s9, 4
    %s19 = sphi 0, %s21
    %s22 = sphi 0, %s19
    %s23 = sphi 0, %s22
    %s39 = sphi 0, %s23
    %s43 = sphi 0, %s43
    %s45 = sphi 0, %s43
    %s46 = sphi 0, %s45
    %s60 = sphi 0, %s46
    %s64 = sphi 0, %s64
    %s66 = sphi 0, %s64
    %s67 = sphi 0, %s66
    %s81 = sphi 0, %s67
    %s87 = sphi 0, %s89
    %s90 = sphi 0, %s87
    %s91 = sphi 0, %s90
    %s107 = sphi 0, %s91
  $region4: #{decoder_layer.11} parent=0 // loop_header_branch
    %12 = sbr.rel (%p10) target = $region8
  $region5: #{decoder_layer.11} parent=0 // loop_body
    %s14 = ssub.s32 %s9, 1
    %s15 = ssub.s32 %s9, 2
    %s16 = sadd.s32 %s9, 1
    %s17 = ssub.s32 %s9, %s16
    %p18 = scmp.eq.s32.totalorder %s17, 0
    %s20 = sadd.s32 %s19, 1
    %s21 = scalar_select %p18, %s19, %s20
    %p24 = pneg %p18
    %p25 = scmp.eq.s32.totalorder %s9, 1
    %p26 = por %p24, %p25
    %p27 = scmp.ne.s32.totalorder %s19, %s22
    %p28 = scmp.eq.s32.totalorder %s9, 0
    %p29 = por %p27, %p28
    %p30 = scmp.ne.s32.totalorder %s19, %s22
    %p31 = scmp.eq.s32.totalorder %s14, 1
    %p32 = por %p30, %p31
    %p33 = scmp.ne.s32.totalorder %s22, %s23
    %p34 = scmp.eq.s32.totalorder %s14, 0
    %p35 = por %p33, %p34
    %p36 = scmp.ne.s32.totalorder %s22, %s23
    %p37 = scmp.eq.s32.totalorder %s15, 1
    %p38 = por %p36, %p37
    %p40 = scmp.ne.s32.totalorder %s23, %s39
    %p41 = scmp.eq.s32.totalorder %s15, 0
    %p42 = por %p40, %p41
    %s44 = sadd.s32 %s43, 1
    %p47 = scmp.eq.s32.totalorder %s9, 1
    %p48 = scmp.ne.s32.totalorder %s43, %s45
    %p49 = scmp.eq.s32.totalorder %s9, 0
    %p50 = por %p48, %p49
    %p51 = scmp.ne.s32.totalorder %s43, %s45
    %p52 = scmp.eq.s32.totalorder %s14, 1
    %p53 = por %p51, %p52
    %p54 = scmp.ne.s32.totalorder %s45, %s46
    %p55 = scmp.eq.s32.totalorder %s14, 0
    %p56 = por %p54, %p55
    %p57 = scmp.ne.s32.totalorder %s45, %s46
    %p58 = scmp.eq.s32.totalorder %s15, 1
    %p59 = por %p57, %p58
    %p61 = scmp.ne.s32.totalorder %s46, %s60
    %p62 = scmp.eq.s32.totalorder %s15, 0
    %p63 = por %p61, %p62
    %s65 = sadd.s32 %s64, 1
    %p68 = scmp.eq.s32.totalorder %s9, 1
    %p69 = scmp.ne.s32.totalorder %s64, %s66
    %p70 = scmp.eq.s32.totalorder %s9, 0
    %p71 = por %p69, %p70
    %p72 = scmp.ne.s32.totalorder %s64, %s66
    %p73 = scmp.eq.s32.totalorder %s14, 1
    %p74 = por %p72, %p73
    %p75 = scmp.ne.s32.totalorder %s66, %s67
    %p76 = scmp.eq.s32.totalorder %s14, 0
    %p77 = por %p75, %p76
    %p78 = scmp.ne.s32.totalorder %s66, %s67
    %p79 = scmp.eq.s32.totalorder %s15, 1
    %p80 = por %p78, %p79
    %p82 = scmp.ne.s32.totalorder %s67, %s81
    %p83 = scmp.eq.s32.totalorder %s15, 0
    %p84 = por %p82, %p83
    %s85 = ssub.s32 %s9, %s16
    %p86 = scmp.eq.s32.totalorder %s85, 0
    %s88 = sadd.s32 %s87, 1
    %s89 = scalar_select %p86, %s87, %s88
    %p92 = pneg %p86
    %p93 = scmp.eq.s32.totalorder %s9, 1
    %p94 = por %p92, %p93
    %p95 = scmp.ne.s32.totalorder %s87, %s90
    %p96 = scmp.eq.s32.totalorder %s9, 0
    %p97 = por %p95, %p96
    %p98 = scmp.ne.s32.totalorder %s87, %s90
    %p99 = scmp.eq.s32.totalorder %s14, 1
    %p100 = por %p98, %p99
    %p101 = scmp.ne.s32.totalorder %s90, %s91
    %p102 = scmp.eq.s32.totalorder %s14, 0
    %p103 = por %p101, %p102
    %p104 = scmp.ne.s32.totalorder %s90, %s91
    %p105 = scmp.eq.s32.totalorder %s15, 1
    %p106 = por %p104, %p105
    %p108 = scmp.ne.s32.totalorder %s91, %s107
    %p109 = scmp.eq.s32.totalorder %s15, 0
    %p110 = por %p108, %p109
    %p111 = scmp.le.s32.totalorder 1, %s9
    %p112 = scmp.lt.s32.totalorder %s9, 3
    %p113 = pnand %p111, %p112
    %p114 = pneg %p113
    // Predicated region
    $region9: #{decoder_layer.11} parent=5 // pred_check
      _
    $region10: #{decoder_layer.11} parent=5 // pred_check_branch
      %116 = sbr.rel (%p113) target = $region12
    $region11: #{decoder_layer.11} parent=5 // pred_region
      %s117 = ssub.s32 %s9, 1
      // Predicated region
      $region13: #{decoder_layer.11} parent=11 // pred_check
        %p118 = pneg %p56
      $region14: #{decoder_layer.11} parent=11 // pred_check_branch
        %120 = sbr.rel (%p118) target = $region16
      $region15: #{decoder_layer.11} parent=11 // pred_region
        _
      $region16: #{decoder_layer.11} parent=11 // pred_fallthru
        _
      // Predicated region
      $region17: #{decoder_layer.11} parent=11 // pred_check
        %p121 = pneg %p77
      $region18: #{decoder_layer.11} parent=11 // pred_check_branch
        %123 = sbr.rel (%p121) target = $region20
      $region19: #{decoder_layer.11} parent=11 // pred_region
        _
      $region20: #{decoder_layer.11} parent=11 // pred_fallthru
        _
    $region12: #{decoder_layer.11} parent=5 // pred_fallthru
      _
    %p124 = scmp.lt.s32.totalorder %s9, 2
    // Predicated region
    $region21: #{decoder_layer.11} parent=5 // pred_check
      %p125 = pneg %p124
    $region22: #{decoder_layer.11} parent=5 // pred_check_branch
      %127 = sbr.rel (%p125) target = $region24
    $region23: #{decoder_layer.11} parent=5 // pred_region
      // Predicated region
      $region25: #{decoder_layer.11} parent=23 // pred_check
        %p128 = pneg %p29
      $region26: #{decoder_layer.11} parent=23 // pred_check_branch
        %130 = sbr.rel (%p128) target = $region28
      $region27: #{decoder_layer.11} parent=23 // pred_region
        %p131 = scmp.lt.s32.totalorder %s9, 1
        %s132 = scalar_select %p131, %s9, 1
        %s133 = smul.addr %s132, 4
        %s134 = scalar_lea.vmem %s0, %s133
      $region28: #{decoder_layer.11} parent=23 // pred_fallthru
        _
    $region24: #{decoder_layer.11} parent=5 // pred_fallthru
      _
    %p135 = scmp.le.s32.totalorder 1, %s9
    %p136 = scmp.lt.s32.totalorder %s9, 3
    %p137 = pnand %p135, %p136
    %p138 = pneg %p137
    // Predicated region
    $region29: #{decoder_layer.11} parent=5 // pred_check
      _
    $region30: #{decoder_layer.11} parent=5 // pred_check_branch
      %140 = sbr.rel (%p137) target = $region32
    $region31: #{decoder_layer.11} parent=5 // pred_region
      %s141 = ssub.s32 %s9, 1
      %p142 = scmp.lt.s32.totalorder %s14, 1
      %s143 = scalar_select %p142, %s14, 1
      %s144 = smul.addr %s143, 4
      %s145 = scalar_lea.vmem %s0, %s144
      %p146 = pneg %p35
      %p147 = pneg %p32
      %p148 = pneg %p56
      %p149 = pneg %p53
      %p150 = pneg %p77
      %p151 = pneg %p74
      %p152 = pneg %p103
      %p153 = pneg %p100
      %p154 = scmp.lt.s32.totalorder %s14, 1
      %s155 = scalar_select %p154, %s14, 1
      %s156 = smul.addr %s155, 4
      %s157 = scalar_lea.vmem %s3, %s156
      %p158 = scmp.lt.s32.totalorder %s14, 1
      %s159 = scalar_select %p158, %s14, 1
      %s160 = smul.addr %s159, 4
      %s161 = scalar_lea.vmem %s0, %s160
      %p162 = scmp.lt.s32.totalorder %s14, 1
      %s163 = scalar_select %p162, %s14, 1
      %s164 = smul.addr %s163, 4
      %s165 = scalar_lea.vmem %s3, %s164
      %v167 = vld [vmem:[%s161] sm:$0xf]
      %v168 = vld [vmem:[%s1] sm:$0xf]
      %v169 = vld [vmem:[%s1 + $0x4] sm:$0xf]
      %v170 = vld [vmem:[%s1 + $0x8] sm:$0xf]
      %v171 = vld [vmem:[%s1 + $0xc] sm:$0xf]
      %v172 = vld [vmem:[%s2] sm:$0x1]
      %v174 = vlaneseq
      %v175 = vshrl.u32 %v174, 7
      %v176 = vsub.s32 0, %v175
      %v177 = vrot.slane %v172, %v176
      %v183 = vunpack.c.l.b16 %v168
      %v184 = vunpack.c.l.b16 %v169
      %v185 = vunpack.c.l.b16 %v170
      %v186 = vunpack.c.l.b16 %v171
      %v187 = vpack.c.b16 %v184, %v183
      %v188 = vpack.c.b16 %v186, %v185
      %vm189 = vcmask 261120
      %v191 = vsel %vm189, %v167, 0
      %v194 = vsel %vm189, %v187, 0
      %v197 = vsel %vm189, %v188, 0
      %199 = vmatprep.subr.bf16.mxu0 0
      %200 = vmatpush1.bf16.xpose.msra.mxu0 %v194
      %201 = vmatprep.subr.bf16.mxu0 0
      %202 = vmatpush1.bf16.xpose.msra.mxu0 %v197
      %203 = vmatprep.subr.bf16.mxu0 0
      %204 = vmatpush1.bf16.xpose.msra.mxu0 0
      %205 = vmatprep.subr.bf16.mxu0 0
      %206 = vmatpush1.bf16.xpose.msra.mxu0 0
      %207 = vmatprep.subr.bf16.mxu0 0
      %208 = vmatpush1.bf16.xpose.msra.mxu0 0
      %209 = vmatprep.subr.bf16.mxu0 0
      %210 = vmatpush1.bf16.xpose.msra.mxu0 0
      %211 = vmatprep.subr.bf16.mxu0 0
      %212 = vmatpush1.bf16.xpose.msra.mxu0 0
      %213 = vmatprep.subr.bf16.mxu0 0
      %214 = vmatpush1.bf16.xpose.msra.mxu0 0
      %215 = vmatprep.subr.bf16.mxu0 0
      %216 = vmatpush1.bf16.xpose.msra.mxu0 0
      %217 = vmatprep.subr.bf16.mxu0 0
      %218 = vmatpush1.bf16.xpose.msra.mxu0 0
      %219 = vmatprep.subr.bf16.mxu0 0
      %220 = vmatpush1.bf16.xpose.msra.mxu0 0
      %221 = vmatprep.subr.bf16.mxu0 0
      %222 = vmatpush1.bf16.xpose.msra.mxu0 0
      %223 = vmatprep.subr.bf16.mxu0 0
      %224 = vmatpush1.bf16.xpose.msra.mxu0 0
      %225 = vmatprep.subr.bf16.mxu0 0
      %226 = vmatpush1.bf16.xpose.msra.mxu0 0
      %227 = vmatprep.subr.bf16.mxu0 0
      %228 = vmatpush1.bf16.xpose.msra.mxu0 0
      %229 = vmatprep.subr.bf16.mxu0 0
      %230 = vmatpush1.bf16.xpose.msra.mxu0 0
      %231 = vmatprep.mubr.bf16.mxu0 0
      %232 = vmatmul.mubr.bf16.gmra.mrb[0].mxu0 %v191
      %v233 = vpop.f32.mrb[0].mxu0
      %v234 = vadd.f32 %v177, %v233
      %v235 = vpop.f32.mrb[0].mxu0
      %v236 = vpop.f32.mrb[0].mxu0
      %v237 = vpop.f32.mrb[0].mxu0
      %238 = vdwg.mxu0
      %v239 = vpack.c.bf16 %v234, %v234
      %vm240 = vcmask 257024
      %241 = vst.msk [vmem:[%s165] sm:$0xf] %vm240, %v239
      %p242 = scmp.lt.s32.totalorder %s14, 1
      %s243 = scalar_select %p242, %s14, 1
      %s244 = smul.addr %s243, 4
      %s245 = scalar_lea.vmem %s3, %s244
      // Predicated region
      $region33: #{decoder_layer.11} parent=31 // pred_check
        %p246 = pneg %p100
      $region34: #{decoder_layer.11} parent=31 // pred_check_branch
        %248 = sbr.rel (%p246) target = $region36
      $region35: #{decoder_layer.11} parent=31 // pred_region
        _
      $region36: #{decoder_layer.11} parent=31 // pred_fallthru
        _
    $region32: #{decoder_layer.11} parent=5 // pred_fallthru
      _
    %p249 = scmp.le.s32.totalorder 2, %s9
    // Predicated region
    $region37: #{decoder_layer.11} parent=5 // pred_check
      %p250 = pneg %p249
    $region38: #{decoder_layer.11} parent=5 // pred_check_branch
      %252 = sbr.rel (%p250) target = $region40
    $region39: #{decoder_layer.11} parent=5 // pred_region
      %s253 = ssub.s32 %s9, 2
      // Predicated region
      $region41: #{decoder_layer.11} parent=39 // pred_check
        %p254 = pneg %p106
      $region42: #{decoder_layer.11} parent=39 // pred_check_branch
        %256 = sbr.rel (%p254) target = $region44
      $region43: #{decoder_layer.11} parent=39 // pred_region
        %p257 = scmp.lt.s32.totalorder %s15, 1
        %s258 = scalar_select %p257, %s15, 1
        %s259 = smul.addr %s258, 4
        %s260 = scalar_lea.vmem %s3, %s259
      $region44: #{decoder_layer.11} parent=39 // pred_fallthru
        _
    $region40: #{decoder_layer.11} parent=5 // pred_fallthru
      _
  $region6: #{decoder_layer.11} parent=0 // loop_footer
    %s13 = sadd.s32 1, %s9
  $region7: #{decoder_layer.11} parent=0 // loop_footer_branch
    %8 = sbr.rel target = $region3
  $region8: #{decoder_layer.11} parent=0 // loop_exit
    _

// kernel: decoder_layer.14
$region0: #{decoder_layer.14}
  #allocation0 [shape = 'u32[]', space=smem, size = 0x4, offset = 0x4, fixed_abs, tag = 'smem constant byte address 0x4 - core index']
  #allocation1 [shape = 'u32[144,128]{1,0:T(1,128)}', space=vmem, size = 0x12000, scoped, tag = 'internal scratch']
  %s0 = inlined_call_operand.vmem [shape: bf16[16,32], index: 0, kind: input, shape index: {}]
  %s1 = inlined_call_operand.vmem [shape: f32[16,32], index: 1, kind: input, shape index: {}]
  %s2 = inlined_call_operand.vmem [shape: bf16[32,32], index: 2, kind: input, shape index: {}]
  %s3 = inlined_call_operand.vmem [shape: f32[1,32], index: 3, kind: input, shape index: {}]
  %s4 = inlined_call_operand.vmem [shape: f32[1,32], index: 4, kind: input, shape index: {}]
  %s5 = inlined_call_operand.vmem [shape: f32[1,32], index: 5, kind: input, shape index: {}]
  %s6 = inlined_call_operand.vmem [shape: f32[16,32], index: 6, kind: output, shape index: {}]
  %s7 = sld [smem:[#allocation0]]
  $region57: #{decoder_layer.14} parent=0
    _
  %s9 = ssub.s32 1, %s7
  %s10 = scalar_select 0, %s9, %s7
  loop: start=0, step=1, limit=4
  $region2: #{decoder_layer.14} parent=0 // loop_pre_header
    _
  $region3: #{decoder_layer.14} parent=0 // loop_header
    %s12 = sphi 0, %s16
    %p13 = scmp.ge.s32.totalorder %s12, 4
    %s22 = sphi 0, %s24
    %s25 = sphi 0, %s22
    %s26 = sphi 0, %s25
    %s42 = sphi 0, %s26
    %s48 = sphi 0, %s50
    %s51 = sphi 0, %s48
    %s52 = sphi 0, %s51
    %s68 = sphi 0, %s52
    %s72 = sphi 0, %s72
    %s74 = sphi 0, %s72
    %s75 = sphi 0, %s74
    %s89 = sphi 0, %s75
    %s93 = sphi 0, %s93
    %s95 = sphi 0, %s93
    %s96 = sphi 0, %s95
    %s110 = sphi 0, %s96
    %s114 = sphi 0, %s114
    %s116 = sphi 0, %s114
    %s117 = sphi 0, %s116
    %s131 = sphi 0, %s117
    %s135 = sphi 0, %s135
    %s137 = sphi 0, %s135
    %s138 = sphi 0, %s137
    %s152 = sphi 0, %s138
    %s158 = sphi 0, %s160
    %s161 = sphi 0, %s158
    %s162 = sphi 0, %s161
    %s178 = sphi 0, %s162
  $region4: #{decoder_layer.14} parent=0 // loop_header_branch
    %15 = sbr.rel (%p13) target = $region8
  $region5: #{decoder_layer.14} parent=0 // loop_body
    %s17 = ssub.s32 %s12, 1
    %s18 = ssub.s32 %s12, 2
    %s19 = sadd.s32 %s12, 1
    %s20 = ssub.s32 %s12, %s19
    %p21 = scmp.eq.s32.totalorder %s20, 0
    %s23 = sadd.s32 %s22, 1
    %s24 = scalar_select %p21, %s22, %s23
    %p27 = pneg %p21
    %p28 = scmp.eq.s32.totalorder %s12, 1
    %p29 = por %p27, %p28
    %p30 = scmp.ne.s32.totalorder %s22, %s25
    %p31 = scmp.eq.s32.totalorder %s12, 0
    %p32 = por %p30, %p31
    %p33 = scmp.ne.s32.totalorder %s22, %s25
    %p34 = scmp.eq.s32.totalorder %s17, 1
    %p35 = por %p33, %p34
    %p36 = scmp.ne.s32.totalorder %s25, %s26
    %p37 = scmp.eq.s32.totalorder %s17, 0
    %p38 = por %p36, %p37
    %p39 = scmp.ne.s32.totalorder %s25, %s26
    %p40 = scmp.eq.s32.totalorder %s18, 1
    %p41 = por %p39, %p40
    %p43 = scmp.ne.s32.totalorder %s26, %s42
    %p44 = scmp.eq.s32.totalorder %s18, 0
    %p45 = por %p43, %p44
    %s46 = ssub.s32 %s12, %s19
    %p47 = scmp.eq.s32.totalorder %s46, 0
    %s49 = sadd.s32 %s48, 1
    %s50 = scalar_select %p47, %s48, %s49
    %p53 = pneg %p47
    %p54 = scmp.eq.s32.totalorder %s12, 1
    %p55 = por %p53, %p54
    %p56 = scmp.ne.s32.totalorder %s48, %s51
    %p57 = scmp.eq.s32.totalorder %s12, 0
    %p58 = por %p56, %p57
    %p59 = scmp.ne.s32.totalorder %s48, %s51
    %p60 = scmp.eq.s32.totalorder %s17, 1
    %p61 = por %p59, %p60
    %p62 = scmp.ne.s32.totalorder %s51, %s52
    %p63 = scmp.eq.s32.totalorder %s17, 0
    %p64 = por %p62, %p63
    %p65 = scmp.ne.s32.totalorder %s51, %s52
    %p66 = scmp.eq.s32.totalorder %s18, 1
    %p67 = por %p65, %p66
    %p69 = scmp.ne.s32.totalorder %s52, %s68
    %p70 = scmp.eq.s32.totalorder %s18, 0
    %p71 = por %p69, %p70
    %s73 = sadd.s32 %s72, 1
    %p76 = scmp.eq.s32.totalorder %s12, 1
    %p77 = scmp.ne.s32.totalorder %s72, %s74
    %p78 = scmp.eq.s32.totalorder %s12, 0
    %p79 = por %p77, %p78
    %p80 = scmp.ne.s32.totalorder %s72, %s74
    %p81 = scmp.eq.s32.totalorder %s17, 1
    %p82 = por %p80, %p81
    %p83 = scmp.ne.s32.totalorder %s74, %s75
    %p84 = scmp.eq.s32.totalorder %s17, 0
    %p85 = por %p83, %p84
    %p86 = scmp.ne.s32.totalorder %s74, %s75
    %p87 = scmp.eq.s32.totalorder %s18, 1
    %p88 = por %p86, %p87
    %p90 = scmp.ne.s32.totalorder %s75, %s89
    %p91 = scmp.eq.s32.totalorder %s18, 0
    %p92 = por %p90, %p91
    %s94 = sadd.s32 %s93, 1
    %p97 = scmp.eq.s32.totalorder %s12, 1
    %p98 = scmp.ne.s32.totalorder %s93, %s95
    %p99 = scmp.eq.s32.totalorder %s12, 0
    %p100 = por %p98, %p99
    %p101 = scmp.ne.s32.totalorder %s93, %s95
    %p102 = scmp.eq.s32.totalorder %s17, 1
    %p103 = por %p101, %p102
    %p104 = scmp.ne.s32.totalorder %s95, %s96
    %p105 = scmp.eq.s32.totalorder %s17, 0
    %p106 = por %p104, %p105
    %p107 = scmp.ne.s32.totalorder %s95, %s96
    %p108 = scmp.eq.s32.totalorder %s18, 1
    %p109 = por %p107, %p108
    %p111 = scmp.ne.s32.totalorder %s96, %s110
    %p112 = scmp.eq.s32.totalorder %s18, 0
    %p113 = por %p111, %p112
    %s115 = sadd.s32 %s114, 1
    %p118 = scmp.eq.s32.totalorder %s12, 1
    %p119 = scmp.ne.s32.totalorder %s114, %s116
    %p120 = scmp.eq.s32.totalorder %s12, 0
    %p121 = por %p119, %p120
    %p122 = scmp.ne.s32.totalorder %s114, %s116
    %p123 = scmp.eq.s32.totalorder %s17, 1
    %p124 = por %p122, %p123
    %p125 = scmp.ne.s32.totalorder %s116, %s117
    %p126 = scmp.eq.s32.totalorder %s17, 0
    %p127 = por %p125, %p126
    %p128 = scmp.ne.s32.totalorder %s116, %s117
    %p129 = scmp.eq.s32.totalorder %s18, 1
    %p130 = por %p128, %p129
    %p132 = scmp.ne.s32.totalorder %s117, %s131
    %p133 = scmp.eq.s32.totalorder %s18, 0
    %p134 = por %p132, %p133
    %s136 = sadd.s32 %s135, 1
    %p139 = scmp.eq.s32.totalorder %s12, 1
    %p140 = scmp.ne.s32.totalorder %s135, %s137
    %p141 = scmp.eq.s32.totalorder %s12, 0
    %p142 = por %p140, %p141
    %p143 = scmp.ne.s32.totalorder %s135, %s137
    %p144 = scmp.eq.s32.totalorder %s17, 1
    %p145 = por %p143, %p144
    %p146 = scmp.ne.s32.totalorder %s137, %s138
    %p147 = scmp.eq.s32.totalorder %s17, 0
    %p148 = por %p146, %p147
    %p149 = scmp.ne.s32.totalorder %s137, %s138
    %p150 = scmp.eq.s32.totalorder %s18, 1
    %p151 = por %p149, %p150
    %p153 = scmp.ne.s32.totalorder %s138, %s152
    %p154 = scmp.eq.s32.totalorder %s18, 0
    %p155 = por %p153, %p154
    %s156 = ssub.s32 %s12, %s19
    %p157 = scmp.eq.s32.totalorder %s156, 0
    %s159 = sadd.s32 %s158, 1
    %s160 = scalar_select %p157, %s158, %s159
    %p163 = pneg %p157
    %p164 = scmp.eq.s32.totalorder %s12, 1
    %p165 = por %p163, %p164
    %p166 = scmp.ne.s32.totalorder %s158, %s161
    %p167 = scmp.eq.s32.totalorder %s12, 0
    %p168 = por %p166, %p167
    %p169 = scmp.ne.s32.totalorder %s158, %s161
    %p170 = scmp.eq.s32.totalorder %s17, 1
    %p171 = por %p169, %p170
    %p172 = scmp.ne.s32.totalorder %s161, %s162
    %p173 = scmp.eq.s32.totalorder %s17, 0
    %p174 = por %p172, %p173
    %p175 = scmp.ne.s32.totalorder %s161, %s162
    %p176 = scmp.eq.s32.totalorder %s18, 1
    %p177 = por %p175, %p176
    %p179 = scmp.ne.s32.totalorder %s162, %s178
    %p180 = scmp.eq.s32.totalorder %s18, 0
    %p181 = por %p179, %p180
    %p182 = scmp.le.s32.totalorder 1, %s12
    %p183 = scmp.lt.s32.totalorder %s12, 3
    %p184 = pnand %p182, %p183
    %p185 = pneg %p184
    // Predicated region
    $region9: #{decoder_layer.14} parent=5 // pred_check
      _
    $region10: #{decoder_layer.14} parent=5 // pred_check_branch
      %187 = sbr.rel (%p184) target = $region12
    $region11: #{decoder_layer.14} parent=5 // pred_region
      %s188 = ssub.s32 %s12, 1
      // Predicated region
      $region13: #{decoder_layer.14} parent=11 // pred_check
        %p189 = pneg %p85
      $region14: #{decoder_layer.14} parent=11 // pred_check_branch
        %191 = sbr.rel (%p189) target = $region16
      $region15: #{decoder_layer.14} parent=11 // pred_region
        _
      $region16: #{decoder_layer.14} parent=11 // pred_fallthru
        _
      // Predicated region
      $region17: #{decoder_layer.14} parent=11 // pred_check
        %p192 = pneg %p106
      $region18: #{decoder_layer.14} parent=11 // pred_check_branch
        %194 = sbr.rel (%p192) target = $region20
      $region19: #{decoder_layer.14} parent=11 // pred_region
        _
      $region20: #{decoder_layer.14} parent=11 // pred_fallthru
        _
      // Predicated region
      $region21: #{decoder_layer.14} parent=11 // pred_check
        %p195 = pneg %p127
      $region22: #{decoder_layer.14} parent=11 // pred_check_branch
        %197 = sbr.rel (%p195) target = $region24
      $region23: #{decoder_layer.14} parent=11 // pred_region
        _
      $region24: #{decoder_layer.14} parent=11 // pred_fallthru
        _
      // Predicated region
      $region25: #{decoder_layer.14} parent=11 // pred_check
        %p198 = pneg %p148
      $region26: #{decoder_layer.14} parent=11 // pred_check_branch
        %200 = sbr.rel (%p198) target = $region28
      $region27: #{decoder_layer.14} parent=11 // pred_region
        _
      $region28: #{decoder_layer.14} parent=11 // pred_fallthru
        _
    $region12: #{decoder_layer.14} parent=5 // pred_fallthru
      _
    %p201 = scmp.lt.s32.totalorder %s12, 2
    // Predicated region
    $region29: #{decoder_layer.14} parent=5 // pred_check
      %p202 = pneg %p201
    $region30: #{decoder_layer.14} parent=5 // pred_check_branch
      %204 = sbr.rel (%p202) target = $region32
    $region31: #{decoder_layer.14} parent=5 // pred_region
      // Predicated region
      $region33: #{decoder_layer.14} parent=31 // pred_check
        %p205 = pneg %p32
      $region34: #{decoder_layer.14} parent=31 // pred_check_branch
        %207 = sbr.rel (%p205) target = $region36
      $region35: #{decoder_layer.14} parent=31 // pred_region
        %p208 = scmp.lt.s32.totalorder %s12, 1
        %s209 = scalar_select %p208, %s12, 1
        %s210 = smul.addr %s209, 4
        %s211 = scalar_lea.vmem %s0, %s210
      $region36: #{decoder_layer.14} parent=31 // pred_fallthru
        _
      // Predicated region
      $region37: #{decoder_layer.14} parent=31 // pred_check
        %p212 = pneg %p58
      $region38: #{decoder_layer.14} parent=31 // pred_check_branch
        %214 = sbr.rel (%p212) target = $region40
      $region39: #{decoder_layer.14} parent=31 // pred_region
        %p215 = scmp.lt.s32.totalorder %s12, 1
        %s216 = scalar_select %p215, %s12, 1
        %s217 = smul.addr %s216, 8
        %s218 = scalar_lea.vmem %s1, %s217
      $region40: #{decoder_layer.14} parent=31 // pred_fallthru
        _
    $region32: #{decoder_layer.14} parent=5 // pred_fallthru
      _
    %p219 = scmp.le.s32.totalorder 1, %s12
    %p220 = scmp.lt.s32.totalorder %s12, 3
    %p221 = pnand %p219, %p220
    %p222 = pneg %p221
    // Predicated region
    $region41: #{decoder_layer.14} parent=5 // pred_check
      _
    $region42: #{decoder_layer.14} parent=5 // pred_check_branch
      %224 = sbr.rel (%p221) target = $region44
    $region43: #{decoder_layer.14} parent=5 // pred_region
      %s225 = ssub.s32 %s12, 1
      %p226 = scmp.lt.s32.totalorder %s17, 1
      %s227 = scalar_select %p226, %s17, 1
      %s228 = smul.addr %s227, 4
      %s229 = scalar_lea.vmem %s0, %s228
      %p230 = pneg %p38
      %p231 = pneg %p35
      %p232 = scmp.lt.s32.totalorder %s17, 1
      %s233 = scalar_select %p232, %s17, 1
      %s234 = smul.addr %s233, 8
      %s235 = scalar_lea.vmem %s1, %s234
      %p236 = pneg %p64
      %p237 = pneg %p61
      %p238 = pneg %p85
      %p239 = pneg %p82
      %p240 = pneg %p106
      %p241 = pneg %p103
      %p242 = pneg %p127
      %p243 = pneg %p124
      %p244 = pneg %p148
      %p245 = pneg %p145
      %p246 = pneg %p174
      %p247 = pneg %p171
      %p248 = scmp.lt.s32.totalorder %s17, 1
      %s249 = scalar_select %p248, %s17, 1
      %s250 = smul.addr %s249, 8
      %s251 = scalar_lea.vmem %s6, %s250
      %p252 = scmp.lt.s32.totalorder %s17, 1
      %s253 = scalar_select %p252, %s17, 1
      %s254 = smul.addr %s253, 4
      %s255 = scalar_lea.vmem %s0, %s254
      %p256 = scmp.lt.s32.totalorder %s17, 1
      %s257 = scalar_select %p256, %s17, 1
      %s258 = smul.addr %s257, 8
      %s259 = scalar_lea.vmem %s1, %s258
      %p260 = scmp.lt.s32.totalorder %s17, 1
      %s261 = scalar_select %p260, %s17, 1
      %s262 = smul.addr %s261, 8
      %s263 = scalar_lea.vmem %s6, %s262
      %v265 = vld [vmem:[%s255] sm:$0xf]
      %v266 = vld [vmem:[%s2] sm:$0xf]
      %v267 = vld [vmem:[%s2 + $0x4] sm:$0xf]
      %v268 = vld [vmem:[%s2 + $0x8] sm:$0xf]
      %v269 = vld [vmem:[%s2 + $0xc] sm:$0xf]
      %v270 = vld [vmem:[%s3] sm:$0x1]
      %v272 = vlaneseq
      %v273 = vshrl.u32 %v272, 7
      %v274 = vsub.s32 0, %v273
      %v275 = vrot.slane %v270, %v274
      %v281 = vunpack.c.l.b16 %v266
      %v282 = vunpack.c.l.b16 %v267
      %v283 = vunpack.c.l.b16 %v268
      %v284 = vunpack.c.l.b16 %v269
      %v285 = vpack.c.b16 %v282, %v281
      %v286 = vpack.c.b16 %v284, %v283
      %vm287 = vcmask 261120
      %v289 = vsel %vm287, %v265, 0
      %v292 = vsel %vm287, %v285, 0
      %v295 = vsel %vm287, %v286, 0
      %297 = vmatprep.subr.bf16.mxu0 0
      %298 = vmatpush1.bf16.xpose.msra.mxu0 %v292
      %299 = vmatprep.subr.bf16.mxu0 0
      %300 = vmatpush1.bf16.xpose.msra.mxu0 %v295
      %301 = vmatprep.subr.bf16.mxu0 0
      %302 = vmatpush1.bf16.xpose.msra.mxu0 0
      %303 = vmatprep.subr.bf16.mxu0 0
      %304 = vmatpush1.bf16.xpose.msra.mxu0 0
      %305 = vmatprep.subr.bf16.mxu0 0
      %306 = vmatpush1.bf16.xpose.msra.mxu0 0
      %307 = vmatprep.subr.bf16.mxu0 0
      %308 = vmatpush1.bf16.xpose.msra.mxu0 0
      %309 = vmatprep.subr.bf16.mxu0 0
      %310 = vmatpush1.bf16.xpose.msra.mxu0 0
      %311 = vmatprep.subr.bf16.mxu0 0
      %312 = vmatpush1.bf16.xpose.msra.mxu0 0
      %313 = vmatprep.subr.bf16.mxu0 0
      %314 = vmatpush1.bf16.xpose.msra.mxu0 0
      %315 = vmatprep.subr.bf16.mxu0 0
      %316 = vmatpush1.bf16.xpose.msra.mxu0 0
      %317 = vmatprep.subr.bf16.mxu0 0
      %318 = vmatpush1.bf16.xpose.msra.mxu0 0
      %319 = vmatprep.subr.bf16.mxu0 0
      %320 = vmatpush1.bf16.xpose.msra.mxu0 0
      %321 = vmatprep.subr.bf16.mxu0 0
      %322 = vmatpush1.bf16.xpose.msra.mxu0 0
      %323 = vmatprep.subr.bf16.mxu0 0
      %324 = vmatpush1.bf16.xpose.msra.mxu0 0
      %325 = vmatprep.subr.bf16.mxu0 0
      %326 = vmatpush1.bf16.xpose.msra.mxu0 0
      %327 = vmatprep.subr.bf16.mxu0 0
      %328 = vmatpush1.bf16.xpose.msra.mxu0 0
      %329 = vmatprep.mubr.bf16.mxu0 0
      %330 = vmatmul.mubr.bf16.gmra.mrb[0].mxu0 %v289
      %v331 = vpop.f32.mrb[0].mxu0
      %v332 = vadd.f32 %v275, %v331
      %v333 = vpop.f32.mrb[0].mxu0
      %v334 = vpop.f32.mrb[0].mxu0
      %v335 = vpop.f32.mrb[0].mxu0
      %336 = vdwg.mxu0
      %v337 = vld [vmem:[%s259] sm:$0xff]
      %v338 = vadd.f32 %v332, %v337
      %v339 = vsel %vm287, %v338, 0.0
      %340 = vadd.xlane.f32.xlu0 %v339
      %v341 = vpop.xlane.xlu0 %340
      %v342 = vrcp.pop 32.0
      %v343 = vmul.f32 %v341, %v342
      %v344 = vsub.f32 %v338, %v343
      %v345 = vmul.f32 %v344, %v344
      %v346 = vsel %vm287, %v345, 0.0
      %347 = vadd.xlane.f32.xlu0 %v346
      %v348 = vpop.xlane.xlu0 %347
      %v349 = vmul.f32 %v348, %v342
      %v350 = vadd.f32 %v349, 1e-05
      %v351 = vrsqrt.pop %v350
      %v352 = vmul.f32 %v344, %v351
      %v353 = vld [vmem:[%s4] sm:$0x1]
      %v355 = vlaneseq
      %v356 = vshrl.u32 %v355, 7
      %v357 = vsub.s32 0, %v356
      %v358 = vrot.slane %v353, %v357
      %v360 = vmul.f32 %v352, %v358
      %v361 = vld [vmem:[%s5] sm:$0x1]
      %v363 = vlaneseq
      %v364 = vshrl.u32 %v363, 7
      %v365 = vsub.s32 0, %v364
      %v366 = vrot.slane %v361, %v365
      %v368 = vadd.f32 %v360, %v366
      %369 = vst.msk [vmem:[%s263] sm:$0xff] %vm287, %v368
      %p370 = scmp.lt.s32.totalorder %s17, 1
      %s371 = scalar_select %p370, %s17, 1
      %s372 = smul.addr %s371, 8
      %s373 = scalar_lea.vmem %s6, %s372
      // Predicated region
      $region45: #{decoder_layer.14} parent=43 // pred_check
        %p374 = pneg %p171
      $region46: #{decoder_layer.14} parent=43 // pred_check_branch
        %376 = sbr.rel (%p374) target = $region48
      $region47: #{decoder_layer.14} parent=43 // pred_region
        _
      $region48: #{decoder_layer.14} parent=43 // pred_fallthru
        _
    $region44: #{decoder_layer.14} parent=5 // pred_fallthru
      _
    %p377 = scmp.le.s32.totalorder 2, %s12
    // Predicated region
    $region49: #{decoder_layer.14} parent=5 // pred_check
      %p378 = pneg %p377
    $region50: #{decoder_layer.14} parent=5 // pred_check_branch
      %380 = sbr.rel (%p378) target = $region52
    $region51: #{decoder_layer.14} parent=5 // pred_region
      %s381 = ssub.s32 %s12, 2
      // Predicated region
      $region53: #{decoder_layer.14} parent=51 // pred_check
        %p382 = pneg %p177
      $region54: #{decoder_layer.14} parent=51 // pred_check_branch
        %384 = sbr.rel (%p382) target = $region56
      $region55: #{decoder_layer.14} parent=51 // pred_region
        %p385 = scmp.lt.s32.totalorder %s18, 1
        %s386 = scalar_select %p385, %s18, 1
        %s387 = smul.addr %s386, 8
        %s388 = scalar_lea.vmem %s6, %s387
      $region56: #{decoder_layer.14} parent=51 // pred_fallthru
        _
    $region52: #{decoder_layer.14} parent=5 // pred_fallthru
      _
  $region6: #{decoder_layer.14} parent=0 // loop_footer
    %s16 = sadd.s32 1, %s12
  $region7: #{decoder_layer.14} parent=0 // loop_footer_branch
    %11 = sbr.rel target = $region3
  $region8: #{decoder_layer.14} parent=0 // loop_exit
    _

// kernel: decoder_layer.15
$region0: #{decoder_layer.15}
  #allocation0 [shape = 'u32[]', space=smem, size = 0x4, offset = 0x4, fixed_abs, tag = 'smem constant byte address 0x4 - core index']
  #allocation1 [shape = 'u32[144,128]{1,0:T(1,128)}', space=vmem, size = 0x12000, scoped, tag = 'internal scratch']
  #allocation2 [shape = 'f32[8,32]{1,0:T(8,128)}', space=vmem, size = 0x1000, scoped, tag = 'scratch operand']
  %s0 = inlined_call_operand.vmem [shape: f32[16,32], index: 0, kind: input, shape index: {}]
  %s1 = inlined_call_operand.vmem [shape: bf16[64,32], index: 1, kind: input, shape index: {}]
  %s2 = inlined_call_operand.vmem [shape: f32[1,64], index: 2, kind: input, shape index: {}]
  %s3 = inlined_call_operand.vmem [shape: bf16[32,64], index: 3, kind: input, shape index: {}]
  %s4 = inlined_call_operand.vmem [shape: f32[1,32], index: 4, kind: input, shape index: {}]
  %s5 = inlined_call_operand.vmem [shape: f32[1,32], index: 5, kind: input, shape index: {}]
  %s6 = inlined_call_operand.vmem [shape: f32[1,32], index: 6, kind: input, shape index: {}]
  %s7 = inlined_call_operand.vmem [shape: f32[16,32], index: 7, kind: output, shape index: {}]
  %s8 = sld [smem:[#allocation0]]
  $region69: #{decoder_layer.15} parent=0
    _
  %s10 = ssub.s32 1, %s8
  %s11 = scalar_select 0, %s10, %s8
  loop: start=0, step=1, limit=4
  $region2: #{decoder_layer.15} parent=0 // loop_pre_header
    _
  $region3: #{decoder_layer.15} parent=0 // loop_header
    %s13 = sphi 0, %s17
    %p14 = scmp.ge.s32.totalorder %s13, 4
    %s20 = sphi 0, %s32
    %s21 = sphi 0, %s28
    %s22 = sphi 0, %s20
    %s23 = sphi 0, %s21
    %s24 = sphi 0, %s22
    %s25 = sphi 0, %s23
    %s35 = sphi 0, %s37
    %s38 = sphi 0, %s35
    %s39 = sphi 0, %s38
    %s55 = sphi 0, %s39
    %s61 = sphi 0, %s63
    %s64 = sphi 0, %s61
    %s65 = sphi 0, %s64
    %s81 = sphi 0, %s65
    %s87 = sphi 0, %s89
    %s90 = sphi 0, %s87
    %s91 = sphi 0, %s90
    %s107 = sphi 0, %s91
    %s113 = sphi 0, %s115
    %s116 = sphi 0, %s113
    %s117 = sphi 0, %s116
    %s133 = sphi 0, %s117
    %s137 = sphi 0, %s137
    %s139 = sphi 0, %s137
    %s140 = sphi 0, %s139
    %s154 = sphi 0, %s140
    %s158 = sphi 0, %s158
    %s160 = sphi 0, %s158
    %s161 = sphi 0, %s160
    %s175 = sphi 0, %s161
    %s179 = sphi 0, %s179
    %s181 = sphi 0, %s179
    %s182 = sphi 0, %s181
    %s196 = sphi 0, %s182
    %s202 = sphi 0, %s204
    %s205 = sphi 0, %s202
    %s206 = sphi 0, %s205
    %s222 = sphi 0, %s206
  $region4: #{decoder_layer.15} parent=0 // loop_header_branch
    %16 = sbr.rel (%p14) target = $region8
  $region5: #{decoder_layer.15} parent=0 // loop_body
    %s18 = ssub.s32 %s13, 1
    %s19 = ssub.s32 %s13, 2
    %s26 = sadd.s32 1, %s21
    %p27 = scmp.ge.s32.totalorder %s26, 1
    %s28 = scalar_select %p27, 0, %s26
    %s29 = sadd.s32 1, %s20
    %s30 = scalar_select %p27, %s29, %s20
    %p31 = scmp.ge.s32.totalorder %s30, 2
    %s32 = scalar_select %p31, 0, %s30
    %s33 = ssub.s32 %s20, %s32
    %p34 = scmp.eq.s32.totalorder %s33, 0
    %s36 = sadd.s32 %s35, 1
    %s37 = scalar_select %p34, %s35, %s36
    %p40 = pneg %p34
    %p41 = scmp.eq.s32.totalorder %s13, 1
    %p42 = por %p40, %p41
    %p43 = scmp.ne.s32.totalorder %s35, %s38
    %p44 = scmp.eq.s32.totalorder %s13, 0
    %p45 = por %p43, %p44
    %p46 = scmp.ne.s32.totalorder %s35, %s38
    %p47 = scmp.eq.s32.totalorder %s18, 1
    %p48 = por %p46, %p47
    %p49 = scmp.ne.s32.totalorder %s38, %s39
    %p50 = scmp.eq.s32.totalorder %s18, 0
    %p51 = por %p49, %p50
    %p52 = scmp.ne.s32.totalorder %s38, %s39
    %p53 = scmp.eq.s32.totalorder %s19, 1
    %p54 = por %p52, %p53
    %p56 = scmp.ne.s32.totalorder %s39, %s55
    %p57 = scmp.eq.s32.totalorder %s19, 0
    %p58 = por %p56, %p57
    %s59 = ssub.s32 %s21, %s28
    %p60 = scmp.eq.s32.totalorder %s59, 0
    %s62 = sadd.s32 %s61, 1
    %s63 = scalar_select %p60, %s61, %s62
    %p66 = pneg %p60
    %p67 = scmp.eq.s32.totalorder %s13, 1
    %p68 = por %p66, %p67
    %p69 = scmp.ne.s32.totalorder %s61, %s64
    %p70 = scmp.eq.s32.totalorder %s13, 0
    %p71 = por %p69, %p70
    %p72 = scmp.ne.s32.totalorder %s61, %s64
    %p73 = scmp.eq.s32.totalorder %s18, 1
    %p74 = por %p72, %p73
    %p75 = scmp.ne.s32.totalorder %s64, %s65
    %p76 = scmp.eq.s32.totalorder %s18, 0
    %p77 = por %p75, %p76
    %p78 = scmp.ne.s32.totalorder %s64, %s65
    %p79 = scmp.eq.s32.totalorder %s19, 1
    %p80 = por %p78, %p79
    %p82 = scmp.ne.s32.totalorder %s65, %s81
    %p83 = scmp.eq.s32.totalorder %s19, 0
    %p84 = por %p82, %p83
    %s85 = ssub.s32 %s21, %s28
    %p86 = scmp.eq.s32.totalorder %s85, 0
    %s88 = sadd.s32 %s87, 1
    %s89 = scalar_select %p86, %s87, %s88
    %p92 = pneg %p86
    %p93 = scmp.eq.s32.totalorder %s13, 1
    %p94 = por %p92, %p93
    %p95 = scmp.ne.s32.totalorder %s87, %s90
    %p96 = scmp.eq.s32.totalorder %s13, 0
    %p97 = por %p95, %p96
    %p98 = scmp.ne.s32.totalorder %s87, %s90
    %p99 = scmp.eq.s32.totalorder %s18, 1
    %p100 = por %p98, %p99
    %p101 = scmp.ne.s32.totalorder %s90, %s91
    %p102 = scmp.eq.s32.totalorder %s18, 0
    %p103 = por %p101, %p102
    %p104 = scmp.ne.s32.totalorder %s90, %s91
    %p105 = scmp.eq.s32.totalorder %s19, 1
    %p106 = por %p104, %p105
    %p108 = scmp.ne.s32.totalorder %s91, %s107
    %p109 = scmp.eq.s32.totalorder %s19, 0
    %p110 = por %p108, %p109
    %s111 = ssub.s32 %s21, %s28
    %p112 = scmp.eq.s32.totalorder %s111, 0
    %s114 = sadd.s32 %s113, 1
    %s115 = scalar_select %p112, %s113, %s114
    %p118 = pneg %p112
    %p119 = scmp.eq.s32.totalorder %s13, 1
    %p120 = por %p118, %p119
    %p121 = scmp.ne.s32.totalorder %s113, %s116
    %p122 = scmp.eq.s32.totalorder %s13, 0
    %p123 = por %p121, %p122
    %p124 = scmp.ne.s32.totalorder %s113, %s116
    %p125 = scmp.eq.s32.totalorder %s18, 1
    %p126 = por %p124, %p125
    %p127 = scmp.ne.s32.totalorder %s116, %s117
    %p128 = scmp.eq.s32.totalorder %s18, 0
    %p129 = por %p127, %p128
    %p130 = scmp.ne.s32.totalorder %s116, %s117
    %p131 = scmp.eq.s32.totalorder %s19, 1
    %p132 = por %p130, %p131
    %p134 = scmp.ne.s32.totalorder %s117, %s133
    %p135 = scmp.eq.s32.totalorder %s19, 0
    %p136 = por %p134, %p135
    %s138 = sadd.s32 %s137, 1
    %p141 = scmp.eq.s32.totalorder %s13, 1
    %p142 = scmp.ne.s32.totalorder %s137, %s139
    %p143 = scmp.eq.s32.totalorder %s13, 0
    %p144 = por %p142, %p143
    %p145 = scmp.ne.s32.totalorder %s137, %s139
    %p146 = scmp.eq.s32.totalorder %s18, 1
    %p147 = por %p145, %p146
    %p148 = scmp.ne.s32.totalorder %s139, %s140
    %p149 = scmp.eq.s32.totalorder %s18, 0
    %p150 = por %p148, %p149
    %p151 = scmp.ne.s32.totalorder %s139, %s140
    %p152 = scmp.eq.s32.totalorder %s19, 1
    %p153 = por %p151, %p152
    %p155 = scmp.ne.s32.totalorder %s140, %s154
    %p156 = scmp.eq.s32.totalorder %s19, 0
    %p157 = por %p155, %p156
    %s159 = sadd.s32 %s158, 1
    %p162 = scmp.eq.s32.totalorder %s13, 1
    %p163 = scmp.ne.s32.totalorder %s158, %s160
    %p164 = scmp.eq.s32.totalorder %s13, 0
    %p165 = por %p163, %p164
    %p166 = scmp.ne.s32.totalorder %s158, %s160
    %p167 = scmp.eq.s32.totalorder %s18, 1
    %p168 = por %p166, %p167
    %p169 = scmp.ne.s32.totalorder %s160, %s161
    %p170 = scmp.eq.s32.totalorder %s18, 0
    %p171 = por %p169, %p170
    %p172 = scmp.ne.s32.totalorder %s160, %s161
    %p173 = scmp.eq.s32.totalorder %s19, 1
    %p174 = por %p172, %p173
    %p176 = scmp.ne.s32.totalorder %s161, %s175
    %p177 = scmp.eq.s32.totalorder %s19, 0
    %p178 = por %p176, %p177
    %s180 = sadd.s32 %s179, 1
    %p183 = scmp.eq.s32.totalorder %s13, 1
    %p184 = scmp.ne.s32.totalorder %s179, %s181
    %p185 = scmp.eq.s32.totalorder %s13, 0
    %p186 = por %p184, %p185
    %p187 = scmp.ne.s32.totalorder %s179, %s181
    %p188 = scmp.eq.s32.totalorder %s18, 1
    %p189 = por %p187, %p188
    %p190 = scmp.ne.s32.totalorder %s181, %s182
    %p191 = scmp.eq.s32.totalorder %s18, 0
    %p192 = por %p190, %p191
    %p193 = scmp.ne.s32.totalorder %s181, %s182
    %p194 = scmp.eq.s32.totalorder %s19, 1
    %p195 = por %p193, %p194
    %p197 = scmp.ne.s32.totalorder %s182, %s196
    %p198 = scmp.eq.s32.totalorder %s19, 0
    %p199 = por %p197, %p198
    %s200 = ssub.s32 %s20, %s32
    %p201 = scmp.eq.s32.totalorder %s200, 0
    %s203 = sadd.s32 %s202, 1
    %s204 = scalar_select %p201, %s202, %s203
    %p207 = pneg %p201
    %p208 = scmp.eq.s32.totalorder %s13, 1
    %p209 = por %p207, %p208
    %p210 = scmp.ne.s32.totalorder %s202, %s205
    %p211 = scmp.eq.s32.totalorder %s13, 0
    %p212 = por %p210, %p211
    %p213 = scmp.ne.s32.totalorder %s202, %s205
    %p214 = scmp.eq.s32.totalorder %s18, 1
    %p215 = por %p213, %p214
    %p216 = scmp.ne.s32.totalorder %s205, %s206
    %p217 = scmp.eq.s32.totalorder %s18, 0
    %p218 = por %p216, %p217
    %p219 = scmp.ne.s32.totalorder %s205, %s206
    %p220 = scmp.eq.s32.totalorder %s19, 1
    %p221 = por %p219, %p220
    %p223 = scmp.ne.s32.totalorder %s206, %s222
    %p224 = scmp.eq.s32.totalorder %s19, 0
    %p225 = por %p223, %p224
    %p226 = scmp.le.s32.totalorder 1, %s13
    %p227 = scmp.lt.s32.totalorder %s13, 3
    %p228 = pnand %p226, %p227
    %p229 = pneg %p228
    // Predicated region
    $region9: #{decoder_layer.15} parent=5 // pred_check
      _
    $region10: #{decoder_layer.15} parent=5 // pred_check_branch
      %231 = sbr.rel (%p228) target = $region12
    $region11: #{decoder_layer.15} parent=5 // pred_region
      %s232 = ssub.s32 %s13, 1
      // Predicated region
      $region13: #{decoder_layer.15} parent=11 // pred_check
        %p233 = pneg %p77
      $region14: #{decoder_layer.15} parent=11 // pred_check_branch
        %235 = sbr.rel (%p233) target = $region16
      $region15: #{decoder_layer.15} parent=11 // pred_region
        %s236 = smul.u32 8, %s23
        %p237 = scmp.lt.s32.totalorder %s236, 7
        %s238 = scalar_select %p237, %s236, 7
        %s239 = smul.addr %s238, 4
        %s240 = scalar_lea.vmem %s1, %s239
        %s241 = smul.u32 8, %s23
      $region16: #{decoder_layer.15} parent=11 // pred_fallthru
        _
      // Predicated region
      $region17: #{decoder_layer.15} parent=11 // pred_check
        %p242 = pneg %p103
      $region18: #{decoder_layer.15} parent=11 // pred_check_branch
        %244 = sbr.rel (%p242) target = $region20
      $region19: #{decoder_layer.15} parent=11 // pred_region
        %p245 = scmp.lt.s32.totalorder %s23, 0
        %s246 = scalar_select %p245, %s23, 0
        %s247 = scalar_lea.vmem %s2, %s246
      $region20: #{decoder_layer.15} parent=11 // pred_fallthru
        _
      // Predicated region
      $region21: #{decoder_layer.15} parent=11 // pred_check
        %p248 = pneg %p129
      $region22: #{decoder_layer.15} parent=11 // pred_check_branch
        %250 = sbr.rel (%p248) target = $region24
      $region23: #{decoder_layer.15} parent=11 // pred_region
        %p251 = scmp.lt.s32.totalorder %s23, 0
        %s252 = scalar_select %p251, %s23, 0
        %s253 = smul.addr %s252, 4
        %s254 = scalar_lea.vmem %s3, %s253
      $region24: #{decoder_layer.15} parent=11 // pred_fallthru
        _
      // Predicated region
      $region25: #{decoder_layer.15} parent=11 // pred_check
        %p255 = pneg %p150
      $region26: #{decoder_layer.15} parent=11 // pred_check_branch
        %257 = sbr.rel (%p255) target = $region28
      $region27: #{decoder_layer.15} parent=11 // pred_region
        _
      $region28: #{decoder_layer.15} parent=11 // pred_fallthru
        _
      // Predicated region
      $region29: #{decoder_layer.15} parent=11 // pred_check
        %p258 = pneg %p171
      $region30: #{decoder_layer.15} parent=11 // pred_check_branch
        %260 = sbr.rel (%p258) target = $region32
      $region31: #{decoder_layer.15} parent=11 // pred_region
        _
      $region32: #{decoder_layer.15} parent=11 // pred_fallthru
        _
      // Predicated region
      $region33: #{decoder_layer.15} parent=11 // pred_check
        %p261 = pneg %p192
      $region34: #{decoder_layer.15} parent=11 // pred_check_branch
        %263 = sbr.rel (%p261) target = $region36
      $region35: #{decoder_layer.15} parent=11 // pred_region
        _
      $region36: #{decoder_layer.15} parent=11 // pred_fallthru
        _
    $region12: #{decoder_layer.15} parent=5 // pred_fallthru
      _
    %p264 = scmp.lt.s32.totalorder %s13, 2
    // Predicated region
    $region37: #{decoder_layer.15} parent=5 // pred_check
      %p265 = pneg %p264
    $region38: #{decoder_layer.15} parent=5 // pred_check_branch
      %267 = sbr.rel (%p265) target = $region40
    $region39: #{decoder_layer.15} parent=5 // pred_region
      // Predicated region
      $region41: #{decoder_layer.15} parent=39 // pred_check
        %p268 = pneg %p45
      $region42: #{decoder_layer.15} parent=39 // pred_check_branch
        %270 = sbr.rel (%p268) target = $region44
      $region43: #{decoder_layer.15} parent=39 // pred_region
        %p271 = scmp.lt.s32.totalorder %s20, 1
        %s272 = scalar_select %p271, %s20, 1
        %s273 = smul.addr %s272, 8
        %s274 = scalar_lea.vmem %s0, %s273
      $region44: #{decoder_layer.15} parent=39 // pred_fallthru
        _
    $region40: #{decoder_layer.15} parent=5 // pred_fallthru
      _
    %p275 = scmp.le.s32.totalorder 1, %s13
    %p276 = scmp.lt.s32.totalorder %s13, 3
    %p277 = pnand %p275, %p276
    %p278 = pneg %p277
    // Predicated region
    $region45: #{decoder_layer.15} parent=5 // pred_check
      _
    $region46: #{decoder_layer.15} parent=5 // pred_check_branch
      %280 = sbr.rel (%p277) target = $region48
    $region47: #{decoder_layer.15} parent=5 // pred_region
      %s281 = ssub.s32 %s13, 1
      %p282 = scmp.lt.s32.totalorder %s22, 1
      %s283 = scalar_select %p282, %s22, 1
      %s284 = smul.addr %s283, 8
      %s285 = scalar_lea.vmem %s0, %s284
      %p286 = pneg %p51
      %p287 = pneg %p48
      %s288 = smul.u32 8, %s23
      %p289 = scmp.lt.s32.totalorder %s288, 7
      %s290 = scalar_select %p289, %s288, 7
      %s291 = smul.addr %s290, 4
      %s292 = scalar_lea.vmem %s1, %s291
      %p293 = pneg %p77
      %p294 = pneg %p74
      %p295 = scmp.lt.s32.totalorder %s23, 0
      %s296 = scalar_select %p295, %s23, 0
      %s297 = scalar_lea.vmem %s2, %s296
      %p298 = pneg %p103
      %p299 = pneg %p100
      %p300 = scmp.lt.s32.totalorder %s23, 0
      %s301 = scalar_select %p300, %s23, 0
      %s302 = smul.addr %s301, 4
      %s303 = scalar_lea.vmem %s3, %s302
      %p304 = pneg %p129
      %p305 = pneg %p126
      %p306 = pneg %p150
      %p307 = pneg %p147
      %p308 = pneg %p171
      %p309 = pneg %p168
      %p310 = pneg %p192
      %p311 = pneg %p189
      %p312 = pneg %p218
      %p313 = pneg %p215
      %p314 = scmp.lt.s32.totalorder %s22, 1
      %s315 = scalar_select %p314, %s22, 1
      %s316 = smul.addr %s315, 8
      %s317 = scalar_lea.vmem %s7, %s316
      %p318 = scmp.lt.s32.totalorder %s22, 1
      %s319 = scalar_select %p318, %s22, 1
      %s320 = smul.addr %s319, 8
      %s321 = scalar_lea.vmem %s0, %s320
      %s322 = smul.u32 8, %s23
      %p323 = scmp.lt.s32.totalorder %s322, 7
      %s324 = scalar_select %p323, %s322, 7
      %s325 = smul.addr %s324, 4
      %s326 = scalar_lea.vmem %s1, %s325
      %s327 = smul.u32 8, %s23
      %p328 = scmp.lt.s32.totalorder %s23, 0
      %s329 = scalar_select %p328, %s23, 0
      %s330 = scalar_lea.vmem %s2, %s329
      %p331 = scmp.lt.s32.totalorder %s23, 0
      %s332 = scalar_select %p331, %s23, 0
      %s333 = smul.addr %s332, 4
      %s334 = scalar_lea.vmem %s3, %s333
      %p335 = scmp.lt.s32.totalorder %s22, 1
      %s336 = scalar_select %p335, %s22, 1
      %s337 = smul.addr %s336, 8
      %s338 = scalar_lea.vmem %s7, %s337
      %p340 = scmp.eq.s32.totalorder %s23, 0
      // Predicated region
      $region49: #{decoder_layer.15} parent=47 // pred_check
        %p341 = pneg %p340
      $region50: #{decoder_layer.15} parent=47 // pred_check_branch
        %343 = sbr.rel (%p341) target = $region52
      $region51: #{decoder_layer.15} parent=47 // pred_region
        %vm344 = vcmask 261120
        %345 = vst.msk [vmem:[#allocation2] sm:$0xff] %vm344, 0.0
      $region52: #{decoder_layer.15} parent=47 // pred_fallthru
        _
      %v346 = vld [vmem:[%s321] sm:$0xff]
      %v347 = vpack.c.bf16 %v346, %v346
      %v348 = vld [vmem:[%s326] sm:$0xf]
      %v349 = vld [vmem:[%s326 + $0x4] sm:$0xf]
      %v350 = vld [vmem:[%s326 + $0x8] sm:$0xf]
      %v351 = vld [vmem:[%s326 + $0xc] sm:$0xf]
      %v352 = vld [vmem:[%s326 + $0x10] sm:$0xf]
      %v353 = vld [vmem:[%s326 + $0x14] sm:$0xf]
      %v354 = vld [vmem:[%s326 + $0x18] sm:$0xf]
      %v355 = vld [vmem:[%s326 + $0x1c] sm:$0xf]
      %v356 = vld [vmem:[%s330] sm:$0x1]
      %v358 = vlaneseq
      %v359 = vshrl.u32 %v358, 7
      %v360 = vsub.s32 0, %v359
      %v361 = vrot.slane %v356, %v360
      %v371 = vunpack.c.l.b16 %v348
      %v372 = vunpack.c.l.b16 %v349
      %v373 = vunpack.c.l.b16 %v350
      %v374 = vunpack.c.l.b16 %v351
      %v375 = vunpack.c.l.b16 %v352
      %v376 = vunpack.c.l.b16 %v353
      %v377 = vunpack.c.l.b16 %v354
      %v378 = vunpack.c.l.b16 %v355
      %v379 = vpack.c.b16 %v372, %v371
      %v380 = vpack.c.b16 %v374, %v373
      %v381 = vpack.c.b16 %v376, %v375
      %v382 = vpack.c.b16 %v378, %v377
      %vm383 = vcmask 261120
      %v385 = vsel %vm383, %v347, 0
      %v388 = vsel %vm383, %v379, 0
      %v391 = vsel %vm383, %v380, 0
      %v394 = vsel %vm383, %v381, 0
      %v397 = vsel %vm383, %v382, 0
      %399 = vmatprep.subr.bf16.mxu0 0
      %400 = vmatpush1.bf16.xpose.msra.mxu0 %v388
      %401 = vmatprep.subr.bf16.mxu0 0
      %402 = vmatpush1.bf16.xpose.msra.mxu0 %v391
      %403 = vmatprep.subr.bf16.mxu0 0
      %404 = vmatpush1.bf16.xpose.msra.mxu0 %v394
      %405 = vmatprep.subr.bf16.mxu0 0
      %406 = vmatpush1.bf16.xpose.msra.mxu0 %v397
      %407 = vmatprep.subr.bf16.mxu0 0
      %408 = vmatpush1.bf16.xpose.msra.mxu0 0
      %409 = vmatprep.subr.bf16.mxu0 0
      %410 = vmatpush1.bf16.xpose.msra.mxu0 0
      %411 = vmatprep.subr.bf16.mxu0 0
      %412 = vmatpush1.bf16.xpose.msra.mxu0 0
      %413 = vmatprep.subr.bf16.mxu0 0
      %414 = vmatpush1.bf16.xpose.msra.mxu0 0
      %415 = vmatprep.subr.bf16.mxu0 0
      %416 = vmatpush1.bf16.xpose.msra.mxu0 0
      %417 = vmatprep.subr.bf16.mxu0 0
      %418 = vmatpush1.bf16.xpose.msra.mxu0 0
      %419 = vmatprep.subr.bf16.mxu0 0
      %420 = vmatpush1.bf16.xpose.msra.mxu0 0
      %421 = vmatprep.subr.bf16.mxu0 0
      %422 = vmatpush1.bf16.xpose.msra.mxu0 0
      %423 = vmatprep.subr.bf16.mxu0 0
      %424 = vmatpush1.bf16.xpose.msra.mxu0 0
      %425 = vmatprep.subr.bf16.mxu0 0
      %426 = vmatpush1.bf16.xpose.msra.mxu0 0
      %427 = vmatprep.subr.bf16.mxu0 0
      %428 = vmatpush1.bf16.xpose.msra.mxu0 0
      %429 = vmatprep.subr.bf16.mxu0 0
      %430 = vmatpush1.bf16.xpose.msra.mxu0 0
      %431 = vmatprep.mubr.bf16.mxu0 0
      %432 = vmatmul.mubr.bf16.gmra.mrb[0].mxu0 %v385
      %v433 = vpop.f32.mrb[0].mxu0
      %v434 = vadd.f32 %v361, %v433
      %v435 = vpop.f32.mrb[0].mxu0
      %v436 = vpop.f32.mrb[0].mxu0
      %v437 = vpop.f32.mrb[0].mxu0
      %438 = vdwg.mxu0
      %v439 = vmax.f32 %v434, 0.0
      %v440 = vpack.c.bf16 %v439, %v439
      %v441 = vld [vmem:[#allocation2] sm:$0xff]
      %v442 = vld [vmem:[%s334] sm:$0xf]
      %v443 = vld [vmem:[%s334 + $0x4] sm:$0xf]
      %v444 = vld [vmem:[%s334 + $0x8] sm:$0xf]
      %v445 = vld [vmem:[%s334 + $0xc] sm:$0xf]
      %v450 = vunpack.c.l.b16 %v442
      %v451 = vunpack.c.l.b16 %v443
      %v452 = vunpack.c.l.b16 %v444
      %v453 = vunpack.c.l.b16 %v445
      %v454 = vpack.c.b16 %v451, %v450
      %v455 = vpack.c.b16 %v453, %v452
      %vm456 = vcmask 523264
      %v458 = vsel %vm456, %v440, 0
      %v461 = vsel %vm456, %v454, 0
      %v464 = vsel %vm456, %v455, 0
      %466 = vmatprep.subr.bf16.mxu0 0
      %467 = vmatpush1.bf16.xpose.msra.mxu0 %v461
      %468 = vmatprep.subr.bf16.mxu0 0
      %469 = vmatpush1.bf16.xpose.msra.mxu0 %v464
      %470 = vmatprep.subr.bf16.mxu0 0
      %471 = vmatpush1.bf16.xpose.msra.mxu0 0
      %472 = vmatprep.subr.bf16.mxu0 0
      %473 = vmatpush1.bf16.xpose.msra.mxu0 0
      %474 = vmatprep.subr.bf16.mxu0 0
      %475 = vmatpush1.bf16.xpose.msra.mxu0 0
      %476 = vmatprep.subr.bf16.mxu0 0
      %477 = vmatpush1.bf16.xpose.msra.mxu0 0
      %478 = vmatprep.subr.bf16.mxu0 0
      %479 = vmatpush1.bf16.xpose.msra.mxu0 0
      %480 = vmatprep.subr.bf16.mxu0 0
      %481 = vmatpush1.bf16.xpose.msra.mxu0 0
      %482 = vmatprep.subr.bf16.mxu0 0
      %483 = vmatpush1.bf16.xpose.msra.mxu0 0
      %484 = vmatprep.subr.bf16.mxu0 0
      %485 = vmatpush1.bf16.xpose.msra.mxu0 0
      %486 = vmatprep.subr.bf16.mxu0 0
      %487 = vmatpush1.bf16.xpose.msra.mxu0 0
      %488 = vmatprep.subr.bf16.mxu0 0
      %489 = vmatpush1.bf16.xpose.msra.mxu0 0
      %490 = vmatprep.subr.bf16.mxu0 0
      %491 = vmatpush1.bf16.xpose.msra.mxu0 0
      %492 = vmatprep.subr.bf16.mxu0 0
      %493 = vmatpush1.bf16.xpose.msra.mxu0 0
      %494 = vmatprep.subr.bf16.mxu0 0
      %495 = vmatpush1.bf16.xpose.msra.mxu0 0
      %496 = vmatprep.subr.bf16.mxu0 0
      %497 = vmatpush1.bf16.xpose.msra.mxu0 0
      %498 = vmatprep.mubr.bf16.mxu0 0
      %499 = vmatmul.mubr.bf16.gmra.mrb[0].mxu0 %v458
      %v500 = vpop.f32.mrb[0].mxu0
      %v501 = vadd.f32 0.0, %v500
      %v502 = vpop.f32.mrb[0].mxu0
      %v503 = vpop.f32.mrb[0].mxu0
      %v504 = vpop.f32.mrb[0].mxu0
      %505 = vdwg.mxu0
      %v506 = vadd.f32 %v441, %v501
      %507 = vst.msk [vmem:[#allocation2] sm:$0xff] %vm383, %v506
      // Predicated region
      $region53: #{decoder_layer.15} parent=47 // pred_check
        %p508 = pneg %p340
      $region54: #{decoder_layer.15} parent=47 // pred_check_branch
        %510 = sbr.rel (%p508) target = $region56
      $region55: #{decoder_layer.15} parent=47 // pred_region
        %v511 = vld [vmem:[%s321] sm:$0xff]
        %v512 = vld [vmem:[#allocation2] sm:$0xff]
        %v513 = vadd.f32 %v511, %v512
        %v514 = vld [vmem:[%s4] sm:$0x1]
        %v516 = vlaneseq
        %v517 = vshrl.u32 %v516, 7
        %v518 = vsub.s32 0, %v517
        %v519 = vrot.slane %v514, %v518
        %v521 = vadd.f32 %v513, %v519
        %v522 = vsel %vm383, %v521, 0.0
        %523 = vadd.xlane.f32.xlu0 %v522
        %v524 = vpop.xlane.xlu0 %523
        %v525 = vrcp.pop 32.0
        %v526 = vmul.f32 %v524, %v525
        %v527 = vsub.f32 %v521, %v526
        %v528 = vmul.f32 %v527, %v527
        %v529 = vsel %vm383, %v528, 0.0
        %530 = vadd.xlane.f32.xlu0 %v529
        %v531 = vpop.xlane.xlu0 %530
        %v532 = vmul.f32 %v531, %v525
        %v533 = vadd.f32 %v532, 1e-05
        %v534 = vrsqrt.pop %v533
        %v535 = vmul.f32 %v527, %v534
        %v536 = vld [vmem:[%s5] sm:$0x1]
        %v538 = vlaneseq
        %v539 = vshrl.u32 %v538, 7
        %v540 = vsub.s32 0, %v539
        %v541 = vrot.slane %v536, %v540
        %v543 = vmul.f32 %v535, %v541
        %v544 = vld [vmem:[%s6] sm:$0x1]
        %v546 = vlaneseq
        %v547 = vshrl.u32 %v546, 7
        %v548 = vsub.s32 0, %v547
        %v549 = vrot.slane %v544, %v548
        %v551 = vadd.f32 %v543, %v549
        %552 = vst.msk [vmem:[%s338] sm:$0xff] %vm383, %v551
      $region56: #{decoder_layer.15} parent=47 // pred_fallthru
        _
      %p553 = scmp.lt.s32.totalorder %s22, 1
      %s554 = scalar_select %p553, %s22, 1
      %s555 = smul.addr %s554, 8
      %s556 = scalar_lea.vmem %s7, %s555
      // Predicated region
      $region57: #{decoder_layer.15} parent=47 // pred_check
        %p557 = pneg %p215
      $region58: #{decoder_layer.15} parent=47 // pred_check_branch
        %559 = sbr.rel (%p557) target = $region60
      $region59: #{decoder_layer.15} parent=47 // pred_region
        _
      $region60: #{decoder_layer.15} parent=47 // pred_fallthru
        _
    $region48: #{decoder_layer.15} parent=5 // pred_fallthru
      _
    %p560 = scmp.le.s32.totalorder 2, %s13
    // Predicated region
    $region61: #{decoder_layer.15} parent=5 // pred_check
      %p561 = pneg %p560
    $region62: #{decoder_layer.15} parent=5 // pred_check_branch
      %563 = sbr.rel (%p561) target = $region64
    $region63: #{decoder_layer.15} parent=5 // pred_region
      %s564 = ssub.s32 %s13, 2
      // Predicated region
      $region65: #{decoder_layer.15} parent=63 // pred_check
        %p565 = pneg %p221
      $region66: #{decoder_layer.15} parent=63 // pred_check_branch
        %567 = sbr.rel (%p565) target = $region68
      $region67: #{decoder_layer.15} parent=63 // pred_region
        %p568 = scmp.lt.s32.totalorder %s24, 1
        %s569 = scalar_select %p568, %s24, 1
        %s570 = smul.addr %s569, 8
        %s571 = scalar_lea.vmem %s7, %s570
      $region68: #{decoder_layer.15} parent=63 // pred_fallthru
        _
    $region64: #{decoder_layer.15} parent=5 // pred_fallthru
      _
  $region6: #{decoder_layer.15} parent=0 // loop_footer
    %s17 = sadd.s32 1, %s13
  $region7: #{decoder_layer.15} parent=0 // loop_footer_branch
    %12 = sbr.rel target = $region3
  $region8: #{decoder_layer.15} parent=0 // loop_exit
    _

// kernel: decoder_layer.13
$region0: #{decoder_layer.13}
  #allocation0 [shape = 'u32[]', space=smem, size = 0x4, offset = 0x4, fixed_abs, tag = 'smem constant byte address 0x4 - core index']
  #allocation1 [shape = 'u32[144,128]{1,0:T(1,128)}', space=vmem, size = 0x12000, scoped, tag = 'internal scratch']
  %s0 = inlined_call_operand.vmem [shape: bf16[2,4,8,8], index: 0, kind: input, shape index: {}]
  %s1 = inlined_call_operand.vmem [shape: bf16[2,4,10,8], index: 1, kind: input, shape index: {}]
  %s2 = inlined_call_operand.vmem [shape: bf16[2,4,10,8], index: 2, kind: input, shape index: {}]
  %s3 = inlined_call_operand.vmem [shape: bf16[2,4,8,8], index: 3, kind: output, shape index: {0}]
  %s4 = inlined_call_operand.hbm [shape: f32[2,8,10], index: 4, kind: output, shape index: {1}]
  %5 = xla_tuple %s3, %s4
  %s6 = sld [smem:[#allocation0]]
  $region53: #{decoder_layer.13} parent=0
    _
  %s8 = ssub.s32 1, %s6
  %s9 = scalar_select 0, %s8, %s6
  $region1: #{decoder_layer.13} parent=0
    #allocation2 [shape = 'u8[8192]{0}', space=vmem, size = 0x2000, scoped, tag = 'output window, operand 1']
    #allocation3 [shape = 's32[2]{0}', space=sflag, size = 0x8, scoped, tag = 'scoped memory for decoder_layer.13']
    %10 = vsyncpa [#allocation3], 0
    %s11 = scalar_lea.sflag [#allocation3], 1
    %12 = vsyncpa %s11, 0
    loop: start=0, step=1, limit=4
    $region2: #{decoder_layer.13} parent=1 // loop_pre_header
      _
    $region3: #{decoder_layer.13} parent=1 // loop_header
      %s14 = sphi 0, %s18
      %p15 = scmp.ge.s32.totalorder %s14, 4
      %s24 = sphi 0, %s26
      %s27 = sphi 0, %s24
      %s28 = sphi 0, %s27
      %s44 = sphi 0, %s28
      %s50 = sphi 0, %s52
      %s53 = sphi 0, %s50
      %s54 = sphi 0, %s53
      %s70 = sphi 0, %s54
      %s76 = sphi 0, %s78
      %s79 = sphi 0, %s76
      %s80 = sphi 0, %s79
      %s96 = sphi 0, %s80
      %s102 = sphi 0, %s104
      %s105 = sphi 0, %s102
      %s106 = sphi 0, %s105
      %s122 = sphi 0, %s106
      %s128 = sphi 0, %s130
      %s131 = sphi 0, %s128
      %s132 = sphi 0, %s131
      %s148 = sphi 0, %s132
    $region4: #{decoder_layer.13} parent=1 // loop_header_branch
      %17 = sbr.rel (%p15) target = $region8
    $region5: #{decoder_layer.13} parent=1 // loop_body
      %s19 = ssub.s32 %s14, 1
      %s20 = ssub.s32 %s14, 2
      %s21 = sadd.s32 %s14, 1
      %s22 = ssub.s32 %s14, %s21
      %p23 = scmp.eq.s32.totalorder %s22, 0
      %s25 = sadd.s32 %s24, 1
      %s26 = scalar_select %p23, %s24, %s25
      %p29 = pneg %p23
      %p30 = scmp.eq.s32.totalorder %s14, 1
      %p31 = por %p29, %p30
      %p32 = scmp.ne.s32.totalorder %s24, %s27
      %p33 = scmp.eq.s32.totalorder %s14, 0
      %p34 = por %p32, %p33
      %p35 = scmp.ne.s32.totalorder %s24, %s27
      %p36 = scmp.eq.s32.totalorder %s19, 1
      %p37 = por %p35, %p36
      %p38 = scmp.ne.s32.totalorder %s27, %s28
      %p39 = scmp.eq.s32.totalorder %s19, 0
      %p40 = por %p38, %p39
      %p41 = scmp.ne.s32.totalorder %s27, %s28
      %p42 = scmp.eq.s32.totalorder %s20, 1
      %p43 = por %p41, %p42
      %p45 = scmp.ne.s32.totalorder %s28, %s44
      %p46 = scmp.eq.s32.totalorder %s20, 0
      %p47 = por %p45, %p46
      %s48 = ssub.s32 %s14, %s21
      %p49 = scmp.eq.s32.totalorder %s48, 0
      %s51 = sadd.s32 %s50, 1
      %s52 = scalar_select %p49, %s50, %s51
      %p55 = pneg %p49
      %p56 = scmp.eq.s32.totalorder %s14, 1
      %p57 = por %p55, %p56
      %p58 = scmp.ne.s32.totalorder %s50, %s53
      %p59 = scmp.eq.s32.totalorder %s14, 0
      %p60 = por %p58, %p59
      %p61 = scmp.ne.s32.totalorder %s50, %s53
      %p62 = scmp.eq.s32.totalorder %s19, 1
      %p63 = por %p61, %p62
      %p64 = scmp.ne.s32.totalorder %s53, %s54
      %p65 = scmp.eq.s32.totalorder %s19, 0
      %p66 = por %p64, %p65
      %p67 = scmp.ne.s32.totalorder %s53, %s54
      %p68 = scmp.eq.s32.totalorder %s20, 1
      %p69 = por %p67, %p68
      %p71 = scmp.ne.s32.totalorder %s54, %s70
      %p72 = scmp.eq.s32.totalorder %s20, 0
      %p73 = por %p71, %p72
      %s74 = ssub.s32 %s14, %s21
      %p75 = scmp.eq.s32.totalorder %s74, 0
      %s77 = sadd.s32 %s76, 1
      %s78 = scalar_select %p75, %s76, %s77
      %p81 = pneg %p75
      %p82 = scmp.eq.s32.totalorder %s14, 1
      %p83 = por %p81, %p82
      %p84 = scmp.ne.s32.totalorder %s76, %s79
      %p85 = scmp.eq.s32.totalorder %s14, 0
      %p86 = por %p84, %p85
      %p87 = scmp.ne.s32.totalorder %s76, %s79
      %p88 = scmp.eq.s32.totalorder %s19, 1
      %p89 = por %p87, %p88
      %p90 = scmp.ne.s32.totalorder %s79, %s80
      %p91 = scmp.eq.s32.totalorder %s19, 0
      %p92 = por %p90, %p91
      %p93 = scmp.ne.s32.totalorder %s79, %s80
      %p94 = scmp.eq.s32.totalorder %s20, 1
      %p95 = por %p93, %p94
      %p97 = scmp.ne.s32.totalorder %s80, %s96
      %p98 = scmp.eq.s32.totalorder %s20, 0
      %p99 = por %p97, %p98
      %s100 = ssub.s32 %s14, %s21
      %p101 = scmp.eq.s32.totalorder %s100, 0
      %s103 = sadd.s32 %s102, 1
      %s104 = scalar_select %p101, %s102, %s103
      %p107 = pneg %p101
      %p108 = scmp.eq.s32.totalorder %s14, 1
      %p109 = por %p107, %p108
      %p110 = scmp.ne.s32.totalorder %s102, %s105
      %p111 = scmp.eq.s32.totalorder %s14, 0
      %p112 = por %p110, %p111
      %p113 = scmp.ne.s32.totalorder %s102, %s105
      %p114 = scmp.eq.s32.totalorder %s19, 1
      %p115 = por %p113, %p114
      %p116 = scmp.ne.s32.totalorder %s105, %s106
      %p117 = scmp.eq.s32.totalorder %s19, 0
      %p118 = por %p116, %p117
      %p119 = scmp.ne.s32.totalorder %s105, %s106
      %p120 = scmp.eq.s32.totalorder %s20, 1
      %p121 = por %p119, %p120
      %p123 = scmp.ne.s32.totalorder %s106, %s122
      %p124 = scmp.eq.s32.totalorder %s20, 0
      %p125 = por %p123, %p124
      %s126 = ssub.s32 %s14, %s21
      %p127 = scmp.eq.s32.totalorder %s126, 0
      %s129 = sadd.s32 %s128, 1
      %s130 = scalar_select %p127, %s128, %s129
      %p133 = pneg %p127
      %p134 = scmp.eq.s32.totalorder %s14, 1
      %p135 = por %p133, %p134
      %p136 = scmp.ne.s32.totalorder %s128, %s131
      %p137 = scmp.eq.s32.totalorder %s14, 0
      %p138 = por %p136, %p137
      %p139 = scmp.ne.s32.totalorder %s128, %s131
      %p140 = scmp.eq.s32.totalorder %s19, 1
      %p141 = por %p139, %p140
      %p142 = scmp.ne.s32.totalorder %s131, %s132
      %p143 = scmp.eq.s32.totalorder %s19, 0
      %p144 = por %p142, %p143
      %p145 = scmp.ne.s32.totalorder %s131, %s132
      %p146 = scmp.eq.s32.totalorder %s20, 1
      %p147 = por %p145, %p146
      %p149 = scmp.ne.s32.totalorder %s132, %s148
      %p150 = scmp.eq.s32.totalorder %s20, 0
      %p151 = por %p149, %p150
      %p152 = scmp.le.s32.totalorder 1, %s14
      %p153 = scmp.lt.s32.totalorder %s14, 3
      %p154 = pnand %p152, %p153
      %p155 = pneg %p154
      // Predicated region
      $region9: #{decoder_layer.13} parent=5 // pred_check
        _
      $region10: #{decoder_layer.13} parent=5 // pred_check_branch
        %157 = sbr.rel (%p154) target = $region12
      $region11: #{decoder_layer.13} parent=5 // pred_region
        %s158 = ssub.s32 %s14, 1
      $region12: #{decoder_layer.13} parent=5 // pred_fallthru
        _
      %p159 = scmp.lt.s32.totalorder %s14, 2
      // Predicated region
      $region13: #{decoder_layer.13} parent=5 // pred_check
        %p160 = pneg %p159
      $region14: #{decoder_layer.13} parent=5 // pred_check_branch
        %162 = sbr.rel (%p160) target = $region16
      $region15: #{decoder_layer.13} parent=5 // pred_region
        // Predicated region
        $region17: #{decoder_layer.13} parent=15 // pred_check
          %p163 = pneg %p34
        $region18: #{decoder_layer.13} parent=15 // pred_check_branch
          %165 = sbr.rel (%p163) target = $region20
        $region19: #{decoder_layer.13} parent=15 // pred_region
          %p166 = scmp.lt.s32.totalorder %s14, 1
          %s167 = scalar_select %p166, %s14, 1
          %s168 = smul.addr %s167, 4
          %s169 = smul.addr %s168, 4
          %s170 = scalar_lea.vmem %s0, %s169
        $region20: #{decoder_layer.13} parent=15 // pred_fallthru
          _
        // Predicated region
        $region21: #{decoder_layer.13} parent=15 // pred_check
          %p171 = pneg %p60
        $region22: #{decoder_layer.13} parent=15 // pred_check_branch
          %173 = sbr.rel (%p171) target = $region24
        $region23: #{decoder_layer.13} parent=15 // pred_region
          %p174 = scmp.lt.s32.totalorder %s14, 1
          %s175 = scalar_select %p174, %s14, 1
          %s176 = smul.addr %s175, 8
          %s177 = smul.addr %s176, 4
          %s178 = scalar_lea.vmem %s1, %s177
        $region24: #{decoder_layer.13} parent=15 // pred_fallthru
          _
        // Predicated region
        $region25: #{decoder_layer.13} parent=15 // pred_check
          %p179 = pneg %p86
        $region26: #{decoder_layer.13} parent=15 // pred_check_branch
          %181 = sbr.rel (%p179) target = $region28
        $region27: #{decoder_layer.13} parent=15 // pred_region
          %p182 = scmp.lt.s32.totalorder %s14, 1
          %s183 = scalar_select %p182, %s14, 1
          %s184 = smul.addr %s183, 8
          %s185 = smul.addr %s184, 4
          %s186 = scalar_lea.vmem %s2, %s185
        $region28: #{decoder_layer.13} parent=15 // pred_fallthru
          _
      $region16: #{decoder_layer.13} parent=5 // pred_fallthru
        _
      %p187 = scmp.le.s32.totalorder 1, %s14
      %p188 = scmp.lt.s32.totalorder %s14, 3
      %p189 = pnand %p187, %p188
      %p190 = pneg %p189
      // Predicated region
      $region29: #{decoder_layer.13} parent=5 // pred_check
        _
      $region30: #{decoder_layer.13} parent=5 // pred_check_branch
        %192 = sbr.rel (%p189) target = $region32
      $region31: #{decoder_layer.13} parent=5 // pred_region
        %s193 = ssub.s32 %s14, 1
        %p194 = scmp.lt.s32.totalorder %s19, 1
        %s195 = scalar_select %p194, %s19, 1
        %s196 = smul.addr %s195, 4
        %s197 = smul.addr %s196, 4
        %s198 = scalar_lea.vmem %s0, %s197
        %p199 = pneg %p40
        %p200 = pneg %p37
        %p201 = scmp.lt.s32.totalorder %s19, 1
        %s202 = scalar_select %p201, %s19, 1
        %s203 = smul.addr %s202, 8
        %s204 = smul.addr %s203, 4
        %s205 = scalar_lea.vmem %s1, %s204
        %p206 = pneg %p66
        %p207 = pneg %p63
        %p208 = scmp.lt.s32.totalorder %s19, 1
        %s209 = scalar_select %p208, %s19, 1
        %s210 = smul.addr %s209, 8
        %s211 = smul.addr %s210, 4
        %s212 = scalar_lea.vmem %s2, %s211
        %p213 = pneg %p92
        %p214 = pneg %p89
        %p215 = pneg %p118
        %p216 = pneg %p115
        %p217 = scmp.lt.s32.totalorder %s19, 1
        %s218 = scalar_select %p217, %s19, 1
        %s219 = smul.addr %s218, 4
        %s220 = smul.addr %s219, 4
        %s221 = scalar_lea.vmem %s3, %s220
        %p222 = pneg %p144
        %p223 = pneg %p141
        %s224 = sand.u32 %s131, 1
        %s225 = scalar_lea.sflag [#allocation3], %s224
        %s226 = sand.u32 %s131, 1
        %s227 = smul.addr %s226, 8
        %s228 = scalar_lea.vmem [#allocation2], %s227
        %p229 = scmp.lt.s32.totalorder %s19, 1
        %s230 = scalar_select %p229, %s19, 1
        %s231 = smul.addr %s230, 4
        %s232 = smul.addr %s231, 4
        %s233 = scalar_lea.vmem %s0, %s232
        %p234 = scmp.lt.s32.totalorder %s19, 1
        %s235 = scalar_select %p234, %s19, 1
        %s236 = smul.addr %s235, 8
        %s237 = smul.addr %s236, 4
        %s238 = scalar_lea.vmem %s1, %s237
        %p239 = scmp.lt.s32.totalorder %s19, 1
        %s240 = scalar_select %p239, %s19, 1
        %s241 = smul.addr %s240, 8
        %s242 = smul.addr %s241, 4
        %s243 = scalar_lea.vmem %s2, %s242
        %p244 = scmp.lt.s32.totalorder %s19, 1
        %s245 = scalar_select %p244, %s19, 1
        %s246 = smul.addr %s245, 4
        %s247 = smul.addr %s246, 4
        %s248 = scalar_lea.vmem %s3, %s247
        %v250 = vld [vmem:[%s233] sm:$0xf]
        %v251 = vld [vmem:[%s233 + $0x4] sm:$0xf]
        %v252 = vld [vmem:[%s233 + $0x8] sm:$0xf]
        %v253 = vld [vmem:[%s233 + $0xc] sm:$0xf]
        %v254 = vld [vmem:[%s238] sm:$0xf]
        %v255 = vld [vmem:[%s238 + $0x4] sm:$0x1]
        %v256 = vld [vmem:[%s238 + $0x8] sm:$0xf]
        %v257 = vld [vmem:[%s238 + $0xc] sm:$0x1]
        %v258 = vld [vmem:[%s238 + $0x10] sm:$0xf]
        %v259 = vld [vmem:[%s238 + $0x14] sm:$0x1]
        %v260 = vld [vmem:[%s238 + $0x18] sm:$0xf]
        %v261 = vld [vmem:[%s238 + $0x1c] sm:$0x1]
        %v262 = vld [vmem:[%s243] sm:$0xf]
        %v263 = vld [vmem:[%s243 + $0x4] sm:$0x1]
        %v264 = vld [vmem:[%s243 + $0x8] sm:$0xf]
        %v265 = vld [vmem:[%s243 + $0xc] sm:$0x1]
        %v266 = vld [vmem:[%s243 + $0x10] sm:$0xf]
        %v267 = vld [vmem:[%s243 + $0x14] sm:$0x1]
        %v268 = vld [vmem:[%s243 + $0x18] sm:$0xf]
        %v269 = vld [vmem:[%s243 + $0x1c] sm:$0x1]
        %v272 = vunpack.c.l.b16 %v254
        %v273 = vunpack.c.l.b16 %v255
        %v274 = vpack.c.b16 %v273, %v272
        %vm275 = vcmask 64512
        %v277 = vsel %vm275, %v250, 0
        %v280 = vsel %vm275, %v274, 0
        %282 = vmatprep.subr.bf16.mxu0 0
        %283 = vmatpush1.bf16.xpose.msra.mxu0 %v280
        %284 = vmatprep.subr.bf16.mxu0 0
        %285 = vmatpush1.bf16.xpose.msra.mxu0 0
        %286 = vmatprep.subr.bf16.mxu0 0
        %287 = vmatpush1.bf16.xpose.msra.mxu0 0
        %288 = vmatprep.subr.bf16.mxu0 0
        %289 = vmatpush1.bf16.xpose.msra.mxu0 0
        %290 = vmatprep.subr.bf16.mxu0 0
        %291 = vmatpush1.bf16.xpose.msra.mxu0 0
        %292 = vmatprep.subr.bf16.mxu0 0
        %293 = vmatpush1.bf16.xpose.msra.mxu0 0
        %294 = vmatprep.subr.bf16.mxu0 0
        %295 = vmatpush1.bf16.xpose.msra.mxu0 0
        %296 = vmatprep.subr.bf16.mxu0 0
        %297 = vmatpush1.bf16.xpose.msra.mxu0 0
        %298 = vmatprep.subr.bf16.mxu0 0
        %299 = vmatpush1.bf16.xpose.msra.mxu0 0
        %300 = vmatprep.subr.bf16.mxu0 0
        %301 = vmatpush1.bf16.xpose.msra.mxu0 0
        %302 = vmatprep.subr.bf16.mxu0 0
        %303 = vmatpush1.bf16.xpose.msra.mxu0 0
        %304 = vmatprep.subr.bf16.mxu0 0
        %305 = vmatpush1.bf16.xpose.msra.mxu0 0
        %306 = vmatprep.subr.bf16.mxu0 0
        %307 = vmatpush1.bf16.xpose.msra.mxu0 0
        %308 = vmatprep.subr.bf16.mxu0 0
        %309 = vmatpush1.bf16.xpose.msra.mxu0 0
        %310 = vmatprep.subr.bf16.mxu0 0
        %311 = vmatpush1.bf16.xpose.msra.mxu0 0
        %312 = vmatprep.subr.bf16.mxu0 0
        %313 = vmatpush1.bf16.xpose.msra.mxu0 0
        %314 = vmatprep.mubr.bf16.mxu0 0
        %315 = vmatmul.mubr.bf16.gmra.mrb[0].mxu0 %v277
        %v316 = vpop.f32.mrb[0].mxu0
        %v317 = vadd.f32 0.0, %v316
        %v318 = vpop.f32.mrb[0].mxu0
        %v319 = vpop.f32.mrb[0].mxu0
        %v320 = vpop.f32.mrb[0].mxu0
        %321 = vdwg.mxu0
        %v324 = vunpack.c.l.b16 %v256
        %v325 = vunpack.c.l.b16 %v257
        %v326 = vpack.c.b16 %v325, %v324
        %v328 = vsel %vm275, %v251, 0
        %v331 = vsel %vm275, %v326, 0
        %333 = vmatprep.subr.bf16.mxu0 0
        %334 = vmatpush1.bf16.xpose.msra.mxu0 %v331
        %335 = vmatprep.subr.bf16.mxu0 0
        %336 = vmatpush1.bf16.xpose.msra.mxu0 0
        %337 = vmatprep.subr.bf16.mxu0 0
        %338 = vmatpush1.bf16.xpose.msra.mxu0 0
        %339 = vmatprep.subr.bf16.mxu0 0
        %340 = vmatpush1.bf16.xpose.msra.mxu0 0
        %341 = vmatprep.subr.bf16.mxu0 0
        %342 = vmatpush1.bf16.xpose.msra.mxu0 0
        %343 = vmatprep.subr.bf16.mxu0 0
        %344 = vmatpush1.bf16.xpose.msra.mxu0 0
        %345 = vmatprep.subr.bf16.mxu0 0
        %346 = vmatpush1.bf16.xpose.msra.mxu0 0
        %347 = vmatprep.subr.bf16.mxu0 0
        %348 = vmatpush1.bf16.xpose.msra.mxu0 0
        %349 = vmatprep.subr.bf16.mxu0 0
        %350 = vmatpush1.bf16.xpose.msra.mxu0 0
        %351 = vmatprep.subr.bf16.mxu0 0
        %352 = vmatpush1.bf16.xpose.msra.mxu0 0
        %353 = vmatprep.subr.bf16.mxu0 0
        %354 = vmatpush1.bf16.xpose.msra.mxu0 0
        %355 = vmatprep.subr.bf16.mxu0 0
        %356 = vmatpush1.bf16.xpose.msra.mxu0 0
        %357 = vmatprep.subr.bf16.mxu0 0
        %358 = vmatpush1.bf16.xpose.msra.mxu0 0
        %359 = vmatprep.subr.bf16.mxu0 0
        %360 = vmatpush1.bf16.xpose.msra.mxu0 0
        %361 = vmatprep.subr.bf16.mxu0 0
        %362 = vmatpush1.bf16.xpose.msra.mxu0 0
        %363 = vmatprep.subr.bf16.mxu0 0
        %364 = vmatpush1.bf16.xpose.msra.mxu0 0
        %365 = vmatprep.mubr.bf16.mxu0 0
        %366 = vmatmul.mubr.bf16.gmra.mrb[0].mxu0 %v328
        %v367 = vpop.f32.mrb[0].mxu0
        %v368 = vadd.f32 0.0, %v367
        %v369 = vpop.f32.mrb[0].mxu0
        %v370 = vpop.f32.mrb[0].mxu0
        %v371 = vpop.f32.mrb[0].mxu0
        %372 = vdwg.mxu0
        %v375 = vunpack.c.l.b16 %v258
        %v376 = vunpack.c.l.b16 %v259
        %v377 = vpack.c.b16 %v376, %v375
        %v379 = vsel %vm275, %v252, 0
        %v382 = vsel %vm275, %v377, 0
        %384 = vmatprep.subr.bf16.mxu0 0
        %385 = vmatpush1.bf16.xpose.msra.mxu0 %v382
        %386 = vmatprep.subr.bf16.mxu0 0
        %387 = vmatpush1.bf16.xpose.msra.mxu0 0
        %388 = vmatprep.subr.bf16.mxu0 0
        %389 = vmatpush1.bf16.xpose.msra.mxu0 0
        %390 = vmatprep.subr.bf16.mxu0 0
        %391 = vmatpush1.bf16.xpose.msra.mxu0 0
        %392 = vmatprep.subr.bf16.mxu0 0
        %393 = vmatpush1.bf16.xpose.msra.mxu0 0
        %394 = vmatprep.subr.bf16.mxu0 0
        %395 = vmatpush1.bf16.xpose.msra.mxu0 0
        %396 = vmatprep.subr.bf16.mxu0 0
        %397 = vmatpush1.bf16.xpose.msra.mxu0 0
        %398 = vmatprep.subr.bf16.mxu0 0
        %399 = vmatpush1.bf16.xpose.msra.mxu0 0
        %400 = vmatprep.subr.bf16.mxu0 0
        %401 = vmatpush1.bf16.xpose.msra.mxu0 0
        %402 = vmatprep.subr.bf16.mxu0 0
        %403 = vmatpush1.bf16.xpose.msra.mxu0 0
        %404 = vmatprep.subr.bf16.mxu0 0
        %405 = vmatpush1.bf16.xpose.msra.mxu0 0
        %406 = vmatprep.subr.bf16.mxu0 0
        %407 = vmatpush1.bf16.xpose.msra.mxu0 0
        %408 = vmatprep.subr.bf16.mxu0 0
        %409 = vmatpush1.bf16.xpose.msra.mxu0 0
        %410 = vmatprep.subr.bf16.mxu0 0
        %411 = vmatpush1.bf16.xpose.msra.mxu0 0
        %412 = vmatprep.subr.bf16.mxu0 0
        %413 = vmatpush1.bf16.xpose.msra.mxu0 0
        %414 = vmatprep.subr.bf16.mxu0 0
        %415 = vmatpush1.bf16.xpose.msra.mxu0 0
        %416 = vmatprep.mubr.bf16.mxu0 0
        %417 = vmatmul.mubr.bf16.gmra.mrb[0].mxu0 %v379
        %v418 = vpop.f32.mrb[0].mxu0
        %v419 = vadd.f32 0.0, %v418
        %v420 = vpop.f32.mrb[0].mxu0
        %v421 = vpop.f32.mrb[0].mxu0
        %v422 = vpop.f32.mrb[0].mxu0
        %423 = vdwg.mxu0
        %v426 = vunpack.c.l.b16 %v260
        %v427 = vunpack.c.l.b16 %v261
        %v428 = vpack.c.b16 %v427, %v426
        %v430 = vsel %vm275, %v253, 0
        %v433 = vsel %vm275, %v428, 0
        %435 = vmatprep.subr.bf16.mxu0 0
        %436 = vmatpush1.bf16.xpose.msra.mxu0 %v433
        %437 = vmatprep.subr.bf16.mxu0 0
        %438 = vmatpush1.bf16.xpose.msra.mxu0 0
        %439 = vmatprep.subr.bf16.mxu0 0
        %440 = vmatpush1.bf16.xpose.msra.mxu0 0
        %441 = vmatprep.subr.bf16.mxu0 0
        %442 = vmatpush1.bf16.xpose.msra.mxu0 0
        %443 = vmatprep.subr.bf16.mxu0 0
        %444 = vmatpush1.bf16.xpose.msra.mxu0 0
        %445 = vmatprep.subr.bf16.mxu0 0
        %446 = vmatpush1.bf16.xpose.msra.mxu0 0
        %447 = vmatprep.subr.bf16.mxu0 0
        %448 = vmatpush1.bf16.xpose.msra.mxu0 0
        %449 = vmatprep.subr.bf16.mxu0 0
        %450 = vmatpush1.bf16.xpose.msra.mxu0 0
        %451 = vmatprep.subr.bf16.mxu0 0
        %452 = vmatpush1.bf16.xpose.msra.mxu0 0
        %453 = vmatprep.subr.bf16.mxu0 0
        %454 = vmatpush1.bf16.xpose.msra.mxu0 0
        %455 = vmatprep.subr.bf16.mxu0 0
        %456 = vmatpush1.bf16.xpose.msra.mxu0 0
        %457 = vmatprep.subr.bf16.mxu0 0
        %458 = vmatpush1.bf16.xpose.msra.mxu0 0
        %459 = vmatprep.subr.bf16.mxu0 0
        %460 = vmatpush1.bf16.xpose.msra.mxu0 0
        %461 = vmatprep.subr.bf16.mxu0 0
        %462 = vmatpush1.bf16.xpose.msra.mxu0 0
        %463 = vmatprep.subr.bf16.mxu0 0
        %464 = vmatpush1.bf16.xpose.msra.mxu0 0
        %465 = vmatprep.subr.bf16.mxu0 0
        %466 = vmatpush1.bf16.xpose.msra.mxu0 0
        %467 = vmatprep.mubr.bf16.mxu0 0
        %468 = vmatmul.mubr.bf16.gmra.mrb[0].mxu0 %v430
        %v469 = vpop.f32.mrb[0].mxu0
        %v470 = vadd.f32 0.0, %v469
        %v471 = vpop.f32.mrb[0].mxu0
        %v472 = vpop.f32.mrb[0].mxu0
        %v473 = vpop.f32.mrb[0].mxu0
        %474 = vdwg.mxu0
        %vm475 = vcmask 80896
        %v476 = vsel %vm475, %v317, -inf
        %477 = vmax.xlane.f32.xlu0 %v476
        %v478 = vpop.xlane.xlu0 %477
        %v479 = vsel %vm475, %v368, -inf
        %480 = vmax.xlane.f32.xlu0 %v479
        %v481 = vpop.xlane.xlu0 %480
        %v482 = vsel %vm475, %v419, -inf
        %483 = vmax.xlane.f32.xlu0 %v482
        %v484 = vpop.xlane.xlu0 %483
        %v485 = vsel %vm475, %v470, -inf
        %486 = vmax.xlane.f32.xlu0 %v485
        %v487 = vpop.xlane.xlu0 %486
        %v488 = vsub.f32 %v317, %v478
        %v489 = vsub.f32 %v368, %v481
        %v490 = vsub.f32 %v419, %v484
        %v491 = vsub.f32 %v470, %v487
        %v492 = vmul.f32 %v488, 1.442695
        %v493 = vpow.pop %v492
        %v494 = vmul.f32 %v489, 1.442695
        %v495 = vpow.pop %v494
        %v496 = vmul.f32 %v490, 1.442695
        %v497 = vpow.pop %v496
        %v498 = vmul.f32 %v491, 1.442695
        %v499 = vpow.pop %v498
        %v500 = vsel %vm475, %v493, 0.0
        %501 = vadd.xlane.f32.xlu0 %v500
        %v502 = vpop.xlane.xlu0 %501
        %v503 = vsel %vm475, %v495, 0.0
        %504 = vadd.xlane.f32.xlu0 %v503
        %v505 = vpop.xlane.xlu0 %504
        %v506 = vsel %vm475, %v497, 0.0
        %507 = vadd.xlane.f32.xlu0 %v506
        %v508 = vpop.xlane.xlu0 %507
        %v509 = vsel %vm475, %v499, 0.0
        %510 = vadd.xlane.f32.xlu0 %v509
        %v511 = vpop.xlane.xlu0 %510
        %v512 = vrcp.pop %v502
        %v513 = vmul.f32 1.0, %v512
        %v514 = vrcp.pop %v505
        %v515 = vmul.f32 1.0, %v514
        %v516 = vrcp.pop %v508
        %v517 = vmul.f32 1.0, %v516
        %v518 = vrcp.pop %v511
        %v519 = vmul.f32 1.0, %v518
        %v520 = vmul.f32 %v493, %v513
        %v521 = vmul.f32 %v495, %v515
        %v522 = vmul.f32 %v497, %v517
        %v523 = vmul.f32 %v499, %v519
        %v524 = vpack.c.bf16 %v520, %v520
        %v525 = vpack.c.bf16 %v521, %v521
        %v526 = vpack.c.bf16 %v522, %v522
        %v527 = vpack.c.bf16 %v523, %v523
        %v530 = vunpack.c.l.b16 %v262
        %v531 = vunpack.c.l.b16 %v263
        %v532 = vpack.c.b16 %v531, %v530
        %v534 = vsel %vm475, %v524, 0
        %vm536 = vcmask 1044480
        %v538 = vsel %vm536, %v532, 0
        %540 = vmatprep.subr.bf16.mxu0 0
        %541 = vmatpush1.bf16.msra.mxu0 %v538
        %542 = vmatprep.subr.bf16.mxu0 0
        %543 = vmatpush1.bf16.msra.mxu0 0
        %544 = vmatprep.subr.bf16.mxu0 0
        %545 = vmatpush1.bf16.msra.mxu0 0
        %546 = vmatprep.subr.bf16.mxu0 0
        %547 = vmatpush1.bf16.msra.mxu0 0
        %548 = vmatprep.subr.bf16.mxu0 0
        %549 = vmatpush1.bf16.msra.mxu0 0
        %550 = vmatprep.subr.bf16.mxu0 0
        %551 = vmatpush1.bf16.msra.mxu0 0
        %552 = vmatprep.subr.bf16.mxu0 0
        %553 = vmatpush1.bf16.msra.mxu0 0
        %554 = vmatprep.subr.bf16.mxu0 0
        %555 = vmatpush1.bf16.msra.mxu0 0
        %556 = vmatprep.subr.bf16.mxu0 0
        %557 = vmatpush1.bf16.msra.mxu0 0
        %558 = vmatprep.subr.bf16.mxu0 0
        %559 = vmatpush1.bf16.msra.mxu0 0
        %560 = vmatprep.subr.bf16.mxu0 0
        %561 = vmatpush1.bf16.msra.mxu0 0
        %562 = vmatprep.subr.bf16.mxu0 0
        %563 = vmatpush1.bf16.msra.mxu0 0
        %564 = vmatprep.subr.bf16.mxu0 0
        %565 = vmatpush1.bf16.msra.mxu0 0
        %566 = vmatprep.subr.bf16.mxu0 0
        %567 = vmatpush1.bf16.msra.mxu0 0
        %568 = vmatprep.subr.bf16.mxu0 0
        %569 = vmatpush1.bf16.msra.mxu0 0
        %570 = vmatprep.subr.bf16.mxu0 0
        %571 = vmatpush1.bf16.msra.mxu0 0
        %572 = vmatprep.mubr.bf16.mxu0 0
        %573 = vmatmul.mubr.bf16.gmra.mrb[0].mxu0 %v534
        %v574 = vpop.f32.mrb[0].mxu0
        %v575 = vadd.f32 0.0, %v574
        %v576 = vpop.f32.mrb[0].mxu0
        %v577 = vpop.f32.mrb[0].mxu0
        %v578 = vpop.f32.mrb[0].mxu0
        %579 = vdwg.mxu0
        %v582 = vunpack.c.l.b16 %v264
        %v583 = vunpack.c.l.b16 %v265
        %v584 = vpack.c.b16 %v583, %v582
        %v586 = vsel %vm475, %v525, 0
        %v589 = vsel %vm536, %v584, 0
        %591 = vmatprep.subr.bf16.mxu0 0
        %592 = vmatpush1.bf16.msra.mxu0 %v589
        %593 = vmatprep.subr.bf16.mxu0 0
        %594 = vmatpush1.bf16.msra.mxu0 0
        %595 = vmatprep.subr.bf16.mxu0 0
        %596 = vmatpush1.bf16.msra.mxu0 0
        %597 = vmatprep.subr.bf16.mxu0 0
        %598 = vmatpush1.bf16.msra.mxu0 0
        %599 = vmatprep.subr.bf16.mxu0 0
        %600 = vmatpush1.bf16.msra.mxu0 0
        %601 = vmatprep.subr.bf16.mxu0 0
        %602 = vmatpush1.bf16.msra.mxu0 0
        %603 = vmatprep.subr.bf16.mxu0 0
        %604 = vmatpush1.bf16.msra.mxu0 0
        %605 = vmatprep.subr.bf16.mxu0 0
        %606 = vmatpush1.bf16.msra.mxu0 0
        %607 = vmatprep.subr.bf16.mxu0 0
        %608 = vmatpush1.bf16.msra.mxu0 0
        %609 = vmatprep.subr.bf16.mxu0 0
        %610 = vmatpush1.bf16.msra.mxu0 0
        %611 = vmatprep.subr.bf16.mxu0 0
        %612 = vmatpush1.bf16.msra.mxu0 0
        %613 = vmatprep.subr.bf16.mxu0 0
        %614 = vmatpush1.bf16.msra.mxu0 0
        %615 = vmatprep.subr.bf16.mxu0 0
        %616 = vmatpush1.bf16.msra.mxu0 0
        %617 = vmatprep.subr.bf16.mxu0 0
        %618 = vmatpush1.bf16.msra.mxu0 0
        %619 = vmatprep.subr.bf16.mxu0 0
        %620 = vmatpush1.bf16.msra.mxu0 0
        %621 = vmatprep.subr.bf16.mxu0 0
        %622 = vmatpush1.bf16.msra.mxu0 0
        %623 = vmatprep.mubr.bf16.mxu0 0
        %624 = vmatmul.mubr.bf16.gmra.mrb[0].mxu0 %v586
        %v625 = vpop.f32.mrb[0].mxu0
        %v626 = vadd.f32 0.0, %v625
        %v627 = vpop.f32.mrb[0].mxu0
        %v628 = vpop.f32.mrb[0].mxu0
        %v629 = vpop.f32.mrb[0].mxu0
        %630 = vdwg.mxu0
        %v633 = vunpack.c.l.b16 %v266
        %v634 = vunpack.c.l.b16 %v267
        %v635 = vpack.c.b16 %v634, %v633
        %v637 = vsel %vm475, %v526, 0
        %v640 = vsel %vm536, %v635, 0
        %642 = vmatprep.subr.bf16.mxu0 0
        %643 = vmatpush1.bf16.msra.mxu0 %v640
        %644 = vmatprep.subr.bf16.mxu0 0
        %645 = vmatpush1.bf16.msra.mxu0 0
        %646 = vmatprep.subr.bf16.mxu0 0
        %647 = vmatpush1.bf16.msra.mxu0 0
        %648 = vmatprep.subr.bf16.mxu0 0
        %649 = vmatpush1.bf16.msra.mxu0 0
        %650 = vmatprep.subr.bf16.mxu0 0
        %651 = vmatpush1.bf16.msra.mxu0 0
        %652 = vmatprep.subr.bf16.mxu0 0
        %653 = vmatpush1.bf16.msra.mxu0 0
        %654 = vmatprep.subr.bf16.mxu0 0
        %655 = vmatpush1.bf16.msra.mxu0 0
        %656 = vmatprep.subr.bf16.mxu0 0
        %657 = vmatpush1.bf16.msra.mxu0 0
        %658 = vmatprep.subr.bf16.mxu0 0
        %659 = vmatpush1.bf16.msra.mxu0 0
        %660 = vmatprep.subr.bf16.mxu0 0
        %661 = vmatpush1.bf16.msra.mxu0 0
        %662 = vmatprep.subr.bf16.mxu0 0
        %663 = vmatpush1.bf16.msra.mxu0 0
        %664 = vmatprep.subr.bf16.mxu0 0
        %665 = vmatpush1.bf16.msra.mxu0 0
        %666 = vmatprep.subr.bf16.mxu0 0
        %667 = vmatpush1.bf16.msra.mxu0 0
        %668 = vmatprep.subr.bf16.mxu0 0
        %669 = vmatpush1.bf16.msra.mxu0 0
        %670 = vmatprep.subr.bf16.mxu0 0
        %671 = vmatpush1.bf16.msra.mxu0 0
        %672 = vmatprep.subr.bf16.mxu0 0
        %673 = vmatpush1.bf16.msra.mxu0 0
        %674 = vmatprep.mubr.bf16.mxu0 0
        %675 = vmatmul.mubr.bf16.gmra.mrb[0].mxu0 %v637
        %v676 = vpop.f32.mrb[0].mxu0
        %v677 = vadd.f32 0.0, %v676
        %v678 = vpop.f32.mrb[0].mxu0
        %v679 = vpop.f32.mrb[0].mxu0
        %v680 = vpop.f32.mrb[0].mxu0
        %681 = vdwg.mxu0
        %v684 = vunpack.c.l.b16 %v268
        %v685 = vunpack.c.l.b16 %v269
        %v686 = vpack.c.b16 %v685, %v684
        %v688 = vsel %vm475, %v527, 0
        %v691 = vsel %vm536, %v686, 0
        %693 = vmatprep.subr.bf16.mxu0 0
        %694 = vmatpush1.bf16.msra.mxu0 %v691
        %695 = vmatprep.subr.bf16.mxu0 0
        %696 = vmatpush1.bf16.msra.mxu0 0
        %697 = vmatprep.subr.bf16.mxu0 0
        %698 = vmatpush1.bf16.msra.mxu0 0
        %699 = vmatprep.subr.bf16.mxu0 0
        %700 = vmatpush1.bf16.msra.mxu0 0
        %701 = vmatprep.subr.bf16.mxu0 0
        %702 = vmatpush1.bf16.msra.mxu0 0
        %703 = vmatprep.subr.bf16.mxu0 0
        %704 = vmatpush1.bf16.msra.mxu0 0
        %705 = vmatprep.subr.bf16.mxu0 0
        %706 = vmatpush1.bf16.msra.mxu0 0
        %707 = vmatprep.subr.bf16.mxu0 0
        %708 = vmatpush1.bf16.msra.mxu0 0
        %709 = vmatprep.subr.bf16.mxu0 0
        %710 = vmatpush1.bf16.msra.mxu0 0
        %711 = vmatprep.subr.bf16.mxu0 0
        %712 = vmatpush1.bf16.msra.mxu0 0
        %713 = vmatprep.subr.bf16.mxu0 0
        %714 = vmatpush1.bf16.msra.mxu0 0
        %715 = vmatprep.subr.bf16.mxu0 0
        %716 = vmatpush1.bf16.msra.mxu0 0
        %717 = vmatprep.subr.bf16.mxu0 0
        %718 = vmatpush1.bf16.msra.mxu0 0
        %719 = vmatprep.subr.bf16.mxu0 0
        %720 = vmatpush1.bf16.msra.mxu0 0
        %721 = vmatprep.subr.bf16.mxu0 0
        %722 = vmatpush1.bf16.msra.mxu0 0
        %723 = vmatprep.subr.bf16.mxu0 0
        %724 = vmatpush1.bf16.msra.mxu0 0
        %725 = vmatprep.mubr.bf16.mxu0 0
        %726 = vmatmul.mubr.bf16.gmra.mrb[0].mxu0 %v688
        %v727 = vpop.f32.mrb[0].mxu0
        %v728 = vadd.f32 0.0, %v727
        %v729 = vpop.f32.mrb[0].mxu0
        %v730 = vpop.f32.mrb[0].mxu0
        %v731 = vpop.f32.mrb[0].mxu0
        %732 = vdwg.mxu0
        %v733 = vpack.c.bf16 %v575, %v575
        %v734 = vpack.c.bf16 %v626, %v626
        %v735 = vpack.c.bf16 %v677, %v677
        %v736 = vpack.c.bf16 %v728, %v728
        %vm737 = vcmask 60416
        %738 = vst.msk [vmem:[%s248] sm:$0xf] %vm737, %v733
        %739 = vst.msk [vmem:[%s248 + $0x4] sm:$0xf] %vm737, %v734
        %740 = vst.msk [vmem:[%s248 + $0x8] sm:$0xf] %vm737, %v735
        %741 = vst.msk [vmem:[%s248 + $0xc] sm:$0xf] %vm737, %v736
        %v742 = vsel %vm475, %v520, 0.0
        %v743 = vsel %vm475, %v521, 0.0
        %v744 = vadd.f32 %v742, %v743
        %v745 = vsel %vm475, %v522, 0.0
        %v746 = vadd.f32 %v744, %v745
        %v747 = vsel %vm475, %v523, 0.0
        %v748 = vadd.f32 %v746, %v747
        %v749 = vrcp.pop 4.0
        %v750 = vmul.f32 %v748, %v749
        %751 = vst.msk [vmem:[%s228] sm:$0xff] %vm475, %v750
        %p752 = scmp.lt.s32.totalorder %s19, 1
        %s753 = scalar_select %p752, %s19, 1
        %s754 = smul.addr %s753, 4
        %s755 = smul.addr %s754, 4
        %s756 = scalar_lea.vmem %s3, %s755
        %s757 = sand.u32 %s131, 1
        %s758 = scalar_lea.sflag [#allocation3], %s757
        %s759 = sand.u32 %s131, 1
        %s760 = smul.addr %s759, 8
        %s761 = scalar_lea.vmem [#allocation2], %s760
        // Predicated region
        $region33: #{decoder_layer.13} parent=31 // pred_check
          %p762 = pneg %p115
        $region34: #{decoder_layer.13} parent=31 // pred_check_branch
          %764 = sbr.rel (%p762) target = $region36
        $region35: #{decoder_layer.13} parent=31 // pred_region
          _
        $region36: #{decoder_layer.13} parent=31 // pred_fallthru
          _
        // Predicated region
        $region37: #{decoder_layer.13} parent=31 // pred_check
          %p765 = pneg %p141
        $region38: #{decoder_layer.13} parent=31 // pred_check_branch
          %767 = sbr.rel (%p765) target = $region40
        $region39: #{decoder_layer.13} parent=31 // pred_region
          %s769 = ssub.s32 128, 128
          %770 = vsyncadd %s758, %s769
          %s771 = smul.addr %s19, 128
          %s772 = scalar_lea.hbm %s4, %s771
          %s774 = sshll.u32 %s761, 4
          %s775 = int_to_ptr.vmem [resolvable:$true] %s774
          %777 = dma.vmem_to_hbm [thread:$0]  %s775, 128, %s772, %s758
        $region40: #{decoder_layer.13} parent=31 // pred_fallthru
          _
      $region32: #{decoder_layer.13} parent=5 // pred_fallthru
        _
      %p778 = scmp.le.s32.totalorder 2, %s14
      // Predicated region
      $region41: #{decoder_layer.13} parent=5 // pred_check
        %p779 = pneg %p778
      $region42: #{decoder_layer.13} parent=5 // pred_check_branch
        %781 = sbr.rel (%p779) target = $region44
      $region43: #{decoder_layer.13} parent=5 // pred_region
        %s782 = ssub.s32 %s14, 2
        // Predicated region
        $region45: #{decoder_layer.13} parent=43 // pred_check
          %p783 = pneg %p121
        $region46: #{decoder_layer.13} parent=43 // pred_check_branch
          %785 = sbr.rel (%p783) target = $region48
        $region47: #{decoder_layer.13} parent=43 // pred_region
          %p786 = scmp.lt.s32.totalorder %s20, 1
          %s787 = scalar_select %p786, %s20, 1
          %s788 = smul.addr %s787, 4
          %s789 = smul.addr %s788, 4
          %s790 = scalar_lea.vmem %s3, %s789
        $region48: #{decoder_layer.13} parent=43 // pred_fallthru
          _
        // Predicated region
        $region49: #{decoder_layer.13} parent=43 // pred_check
          %p791 = pneg %p147
        $region50: #{decoder_layer.13} parent=43 // pred_check_branch
          %793 = sbr.rel (%p791) target = $region52
        $region51: #{decoder_layer.13} parent=43 // pred_region
          %s794 = sand.u32 %s132, 1
          %s795 = scalar_lea.sflag [#allocation3], %s794
          %s796 = sand.u32 %s132, 1
          %s797 = smul.addr %s796, 8
          %s798 = scalar_lea.vmem [#allocation2], %s797
          %799 = dma.done %s795, 128
        $region52: #{decoder_layer.13} parent=43 // pred_fallthru
          _
      $region44: #{decoder_layer.13} parent=5 // pred_fallthru
        _
    $region6: #{decoder_layer.13} parent=1 // loop_footer
      %s18 = sadd.s32 1, %s14
    $region7: #{decoder_layer.13} parent=1 // loop_footer_branch
      %13 = sbr.rel target = $region3
    $region8: #{decoder_layer.13} parent=1 // loop_exit
      _
    %800 = vsyncpa [#allocation3], 1
    %s801 = scalar_lea.sflag [#allocation3], 1
    %802 = vsyncpa %s801, 1

</llo_original>
